<compile_context>
chip_gen: v5e
topology: v5e:2x2
jax: 0.10.0
libtpu: 0.0.40
codegen_flags: <defaults>
</compile_context>

<pallas_src>
import functools

import numpy as np
import jax
import jax.numpy as jnp
from jax import lax
from jax.experimental import pallas as pl
from jax.experimental.pallas import tpu as pltpu


def _round_up(x, m):
    return ((x + m - 1) // m) * m


def _pick_tile(n, pref, step):
    """Largest multiple of `step` that divides n and is <= pref (n is always a
    multiple of `step` at the call sites, so at worst this returns `step`)."""
    t = min(pref, n)
    t -= t % step
    while t >= step:
        if n % t == 0:
            return t
        t -= step
    return n


@functools.lru_cache(maxsize=1)
def _vmem_limit_bytes():
    """Per-generation VMEM budget: ~3/4 of physical VMEM (96 MiB on the
    128 MiB v5e/v6e, 48 MiB on the 64 MiB v7x), clamped to a safe range."""
    cap = 64 * 1024 * 1024
    try:
        info = pltpu.get_tpu_info()
        cap = int(getattr(info, "vmem_capacity_bytes", cap) or cap)
    except Exception:
        pass
    return max(32 * 1024 * 1024, min(cap * 3 // 4, 100 * 1024 * 1024))


# ----------------------------------------------------------------------------
# Kernel 1: time-chunked LSTM layer with the input projection fused in.
# Grid = (batch_split, time_chunks).  Per grid step:
#   gx = x_chunk @ W_ih_t + b           (one big MXU matmul, VMEM scratch)
#   for tt in range(Tc):  serial h @ W_hh_t recurrence + gate nonlinearities
# ----------------------------------------------------------------------------
def _lstm_chunk_kernel(x_ref, wih_ref, whh_ref, b_ref,
                       out_ref, h_out_ref, c_out_ref,
                       h_scr, c_scr, gx_scr, *, seq_len, chunk, ragged):
    t_chunk = pl.program_id(1)
    n_chunks = pl.num_programs(1)

    @pl.when(t_chunk == 0)
    def _():
        # nn.LSTM with zero initial (h0, c0), as produced by init_hidden().
        h_scr[...] = jnp.zeros_like(h_scr)
        c_scr[...] = jnp.zeros_like(c_scr)

    Tc, Bs, Ep = x_ref.shape

    # Hoisted input projection for the whole time chunk, fused into the
    # recurrence kernel (M = Tc*Bs rows on the MXU, no gx HBM round trip).
    x_chunk = x_ref[...].reshape(Tc * Bs, Ep)
    gx_scr[...] = (jnp.dot(x_chunk, wih_ref[...],
                           preferred_element_type=jnp.float32) + b_ref[...])

    h = h_scr[...]
    c = c_scr[...]
    # Serial recurrence: only h @ W_hh remains per step.  Fully unrolled at
    # trace time (static Tc <= 16), so every slice / store index is static.
    for tt in range(Tc):
        gates = gx_scr[pl.ds(tt * Bs, Bs), :] + jnp.dot(
            h, whh_ref[...], preferred_element_type=jnp.float32)
        # PyTorch gate order i, f, g, o; Ep is a multiple of 128 so every gate
        # slice is lane-aligned (no masked selects on the critical path).
        i_g = jax.nn.sigmoid(gates[:, 0 * Ep:1 * Ep])
        f_g = jax.nn.sigmoid(gates[:, 1 * Ep:2 * Ep])
        g_g = jnp.tanh(gates[:, 2 * Ep:3 * Ep])
        o_g = jax.nn.sigmoid(gates[:, 3 * Ep:4 * Ep])
        c_new = f_g * c + i_g * g_g
        h_new = o_g * jnp.tanh(c_new)
        if ragged:  # freeze the state update on time-padding steps
            valid = (t_chunk * chunk + tt) < seq_len
            h_new = jnp.where(valid, h_new, h)
            c_new = jnp.where(valid, c_new, c)
        out_ref[tt] = h_new
        h, c = h_new, c_new

    h_scr[...] = h
    c_scr[...] = c

    @pl.when(t_chunk == n_chunks - 1)
    def _():
        h_out_ref[...] = h
        c_out_ref[...] = c


def lstm_layer(x, w_ih_t, w_hh_t, b, *, seq_len, chunk, n_bsplit):
    """x: (Tp, Bp, Ep) f32; w_ih_t/w_hh_t: (Ep, 4Ep) f32; b: (1, 4Ep) f32."""
    Tp, Bp, Ep = x.shape
    F = 4 * Ep
    Bs = Bp // n_bsplit
    n_chunks = Tp // chunk
    kernel = functools.partial(_lstm_chunk_kernel, seq_len=seq_len,
                               chunk=chunk, ragged=(Tp != seq_len))
    return pl.pallas_call(
        kernel,
        out_shape=(jax.ShapeDtypeStruct((Tp, Bp, Ep), jnp.float32),
                   jax.ShapeDtypeStruct((Bp, Ep), jnp.float32),
                   jax.ShapeDtypeStruct((Bp, Ep), jnp.float32)),
        grid_spec=pltpu.PrefetchScalarGridSpec(
            num_scalar_prefetch=0,
            grid=(n_bsplit, n_chunks),
            in_specs=[pl.BlockSpec((chunk, Bs, Ep), lambda sb, t: (t, sb, 0)),
                      pl.BlockSpec((Ep, F), lambda sb, t: (0, 0)),
                      pl.BlockSpec((Ep, F), lambda sb, t: (0, 0)),
                      pl.BlockSpec((1, F), lambda sb, t: (0, 0))],
            out_specs=(pl.BlockSpec((chunk, Bs, Ep), lambda sb, t: (t, sb, 0)),
                       pl.BlockSpec((Bs, Ep), lambda sb, t: (sb, 0)),
                       pl.BlockSpec((Bs, Ep), lambda sb, t: (sb, 0))),
            scratch_shapes=[pltpu.VMEM((Bs, Ep), jnp.float32),
                            pltpu.VMEM((Bs, Ep), jnp.float32),
                            pltpu.VMEM((chunk * Bs, F), jnp.float32)]),
        compiler_params=pltpu.CompilerParams(
            # Batch-split axis is shardable across TensorCores (v7x megacore);
            # the time axis is a true recurrence.
            dimension_semantics=("parallel", "arbitrary"),
            vmem_limit_bytes=_vmem_limit_bytes()),
        # TODO(synk): for very large E the resident f32 (Ep,4Ep) W_ih/W_hh pair
        # should be F-tiled or stored bf16 to fit v7x's 64 MiB VMEM.
    )(x, w_ih_t, w_hh_t, b)


# ----------------------------------------------------------------------------
# Kernel 2: MLP-head hidden layer  hid = tanh(x @ W_h^T + b_h)  (bf16 MXU).
# ----------------------------------------------------------------------------
def _hidden_kernel(x_ref, wh_ref, bh_ref, o_ref):
    pre = jnp.dot(x_ref[...].astype(jnp.bfloat16), wh_ref[...],
                  preferred_element_type=jnp.float32) + bh_ref[...]
    o_ref[...] = jnp.tanh(pre).astype(jnp.bfloat16)


def _hidden_layer(x, wh_t, bh, *, tm):
    Mp, Ep = x.shape
    return pl.pallas_call(
        _hidden_kernel,
        out_shape=jax.ShapeDtypeStruct((Mp, Ep), jnp.bfloat16),
        grid_spec=pltpu.PrefetchScalarGridSpec(
            num_scalar_prefetch=0,
            grid=(Mp // tm,),
            in_specs=[pl.BlockSpec((tm, Ep), lambda i: (i, 0)),
                      pl.BlockSpec((Ep, Ep), lambda i: (0, 0)),
                      pl.BlockSpec((1, Ep), lambda i: (0, 0))],
            out_specs=pl.BlockSpec((tm, Ep), lambda i: (i, 0))),
        compiler_params=pltpu.CompilerParams(
            dimension_semantics=("parallel",),
            vmem_limit_bytes=_vmem_limit_bytes()),
    )(x, wh_t, bh)


# ----------------------------------------------------------------------------
# Kernel 3: tied output projection  logits = hid @ W_out + b_out.
# Vocab tiles OUTER / row tiles INNER so each (Ep, tv) slice of the tied
# embedding is DMA'd from HBM exactly once while bf16 hid row tiles stream.
# ----------------------------------------------------------------------------
def _out_proj_kernel(h_ref, wo_ref, bo_ref, o_ref):
    o_ref[...] = jnp.dot(h_ref[...], wo_ref[...],
                         preferred_element_type=jnp.float32) + bo_ref[...]


def _output_projection(hid, wo_t, bo, *, tm, tv):
    Mp, Ep = hid.shape
    Vp = wo_t.shape[1]
    return pl.pallas_call(
        _out_proj_kernel,
        out_shape=jax.ShapeDtypeStruct((Mp, Vp), jnp.float32),
        grid_spec=pltpu.PrefetchScalarGridSpec(
            num_scalar_prefetch=0,
            grid=(Vp // tv, Mp // tm),
            in_specs=[pl.BlockSpec((tm, Ep), lambda j, i: (i, 0)),
                      pl.BlockSpec((Ep, tv), lambda j, i: (0, j)),
                      pl.BlockSpec((1, tv), lambda j, i: (0, j))],
            out_specs=pl.BlockSpec((tm, tv), lambda j, i: (i, j))),
        compiler_params=pltpu.CompilerParams(
            dimension_semantics=("parallel", "parallel"),
            vmem_limit_bytes=_vmem_limit_bytes()),
    )(hid, wo_t, bo)


def mlp_head(x, wh_t, bh, wo_t, bo, *, tile_m=512, tile_v=1024):
    """x: (M, Ep) f32; wh_t: (Ep, Ep) bf16; wo_t: (Ep, Vp) bf16 -> (M, Vp)."""
    M, _ = x.shape
    Vp = wo_t.shape[1]
    # Row tiling: multiple of 16 (bf16 sublane packing) and of 128 for large M
    # (full MXU rows on v5e); pad M up to a tile multiple instead of falling
    # back to a whole-matrix tile.
    M16 = _round_up(M, 16)
    tm = min(tile_m, M16)
    Mp = _round_up(M, tm)
    tv = _pick_tile(Vp, tile_v, 128)
    if Mp != M:
        x = jnp.pad(x, ((0, Mp - M), (0, 0)))
    hid = _hidden_layer(x, wh_t, bh, tm=tm)                    # (Mp, Ep) bf16
    logits = _output_projection(hid, wo_t, bo, tm=tm, tv=tv)   # (Mp, Vp) f32
    return logits[:M] if Mp != M else logits


# ----------------------------------------------------------------------------
# Parameters: PyTorch layout (init_params) and one-time kernel prep.
# ----------------------------------------------------------------------------
def init_params(key, n_V, emb_size, depth):
    """Parameters in the PyTorch layout, matching Model.init_weights()."""
    r = (3.0 / emb_size) ** 0.5
    ks = jax.random.split(key, 2 + 2 * depth)
    params = {}
    # Embedding weight (also the tied output_layer weight): (n_V, E)
    params["embedding"] = jax.random.uniform(
        ks[0], (n_V, emb_size), jnp.float32, minval=-r, maxval=r)
    # MLP hidden layer: Linear(E -> E), bias zero
    params["w_hidden"] = jax.random.uniform(
        ks[1], (emb_size, emb_size), jnp.float32, minval=-r, maxval=r)
    params["b_hidden"] = jnp.zeros((1, emb_size), jnp.float32)
    # Output layer bias (weight is tied to the embedding)
    params["b_out"] = jnp.zeros((1, n_V), jnp.float32)
    # LSTM layers: W_ih, W_hh (4E, E); combined bias b_ih+b_hh (zero per init)
    for l in range(depth):
        params[f"w_ih_{l}"] = jax.random.uniform(
            ks[2 + 2 * l], (4 * emb_size, emb_size), jnp.float32,
            minval=-r, maxval=r)
        params[f"w_hh_{l}"] = jax.random.uniform(
            ks[3 + 2 * l], (4 * emb_size, emb_size), jnp.float32,
            minval=-r, maxval=r)
        params[f"b_{l}"] = jnp.zeros((1, 4 * emb_size), jnp.float32)
    return params


def _pad_gate_weight(w, E, Ep):
    """(4E, E) PyTorch gate-stacked [i;f;g;o] -> transposed, per-gate lane-
    padded (Ep, 4*Ep) so every gate slice is 128-lane aligned in the kernel."""
    w4 = w.reshape(4, E, E)                                 # (gate, out, in)
    w4 = jnp.pad(w4, ((0, 0), (0, Ep - E), (0, Ep - E)))
    return jnp.transpose(w4, (2, 0, 1)).reshape(Ep, 4 * Ep)


def _pad_gate_bias(b, E, Ep):
    b4 = jnp.pad(b.reshape(4, E), ((0, 0), (0, Ep - E)))
    return b4.reshape(1, 4 * Ep)


def prepare_params(params, depth):
    """One-time weight prep (outside the per-call forward): transpose, pad
    E->Ep (lane multiple) and V->Vp, and cast the big head matrices to bf16."""
    emb = params["embedding"]                               # (V, E) f32
    V, E = emb.shape
    Ep = _round_up(E, 128)
    Vp = _round_up(V, 128)
    pe = Ep - E
    prepped = {
        "emb_pad": jnp.pad(emb, ((0, 0), (0, pe))),                   # (V, Ep)
        "w_h_t": jnp.pad(params["w_hidden"].T,
                         ((0, pe), (0, pe))).astype(jnp.bfloat16),    # (Ep,Ep)
        "b_h": jnp.pad(params["b_hidden"], ((0, 0), (0, pe))),        # (1, Ep)
        # Tied output projection = embedding^T, vocab-padded, bf16.
        "w_out_t": jnp.pad(emb.T,
                           ((0, pe), (0, Vp - V))).astype(jnp.bfloat16),
        "b_out": jnp.pad(params["b_out"], ((0, 0), (0, Vp - V))),     # (1, Vp)
    }
    for l in range(depth):
        prepped[f"w_ih_t_{l}"] = _pad_gate_weight(params[f"w_ih_{l}"], E, Ep)
        prepped[f"w_hh_t_{l}"] = _pad_gate_weight(params[f"w_hh_{l}"], E, Ep)
        prepped[f"b_{l}"] = _pad_gate_bias(params[f"b_{l}"], E, Ep)
    return prepped


# ----------------------------------------------------------------------------
# Model forward (embedding gather, padding, layer stack, head)
# ----------------------------------------------------------------------------
@functools.partial(jax.jit, static_argnames=("depth", "emb_size", "n_vocab"))
def model_forward(prepped, x_ids, *, depth, emb_size, n_vocab):
    emb_pad = prepped["emb_pad"]                       # (V, Ep) f32
    Ep = emb_pad.shape[1]
    T, B = x_ids.shape
    Bp = _round_up(B, 8)                               # sublane padding
    Tc = T if T <= 16 else 16                          # time-chunk size
    Tp = _round_up(T, Tc)
    n_bsplit = 2 if Bp % 16 == 0 else 1                # v7x megacore split

    # emb = input_drop(emb_layer(x)) -- dropout identity at inference.
    x = jnp.take(emb_pad, x_ids, axis=0)                      # (T, B, Ep)
    x = jnp.pad(x, ((0, Tp - T), (0, Bp - B), (0, 0)))        # (Tp, Bp, Ep)

    hs, cs = [], []
    out = x
    for l in range(depth):
        out, h, c = lstm_layer(
            out, prepped[f"w_ih_t_{l}"], prepped[f"w_hh_t_{l}"],
            prepped[f"b_{l}"], seq_len=T, chunk=Tc, n_bsplit=n_bsplit)
        hs.append(h[:B, :emb_size])
        cs.append(c[:B, :emb_size])
        # TODO(synk): fuse the depth loop (consume layer l's chunk while still
        # in VMEM) to also remove the inter-layer (Tp,Bp,Ep) HBM round trip.

    # output = output_layer(tanh(hidden(drop(output))))  (dropouts = identity)
    flat = out[:T].reshape(T * Bp, Ep)
    logits_p = mlp_head(flat, prepped["w_h_t"], prepped["b_h"],
                        prepped["w_out_t"], prepped["b_out"])   # (T*Bp, Vp)
    logits = (logits_p.reshape(T, Bp, -1)[:, :B, :n_vocab]
              .reshape(T * B, n_vocab))

    hidden = (jnp.stack(hs, axis=0), jnp.stack(cs, axis=0))   # (depth,B,E) x2
    return logits, hidden


# ----------------------------------------------------------------------------
# Pure-JAX reference (for a correctness assertion)
# ----------------------------------------------------------------------------
def reference_forward(params, x_ids, depth):
    E = params["embedding"].shape[1]
    emb = jnp.take(params["embedding"], x_ids, axis=0)        # (T, B, E)
    out = emb
    hs, cs = [], []
    for l in range(depth):
        w_ih = params[f"w_ih_{l}"]
        w_hh = params[f"w_hh_{l}"]
        b = params[f"b_{l}"][0]

        def step(carry, x_t, w_ih=w_ih, w_hh=w_hh, b=b):
            h, c = carry
            gates = x_t @ w_ih.T + h @ w_hh.T + b
            i_g = jax.nn.sigmoid(gates[:, :E])
            f_g = jax.nn.sigmoid(gates[:, E:2 * E])
            g_g = jnp.tanh(gates[:, 2 * E:3 * E])
            o_g = jax.nn.sigmoid(gates[:, 3 * E:])
            c2 = f_g * c + i_g * g_g
            h2 = o_g * jnp.tanh(c2)
            return (h2, c2), h2

        B = out.shape[1]
        h0 = jnp.zeros((B, E), jnp.float32)
        c0 = jnp.zeros((B, E), jnp.float32)
        (hT, cT), outs = lax.scan(step, (h0, c0), out)
        out = outs
        hs.append(hT)
        cs.append(cT)
    flat = out.reshape(-1, E)
    hid = jnp.tanh(flat @ params["w_hidden"].T + params["b_hidden"][0])
    logits = hid @ params["embedding"].T + params["b_out"][0]
    return logits, (jnp.stack(hs, axis=0), jnp.stack(cs, axis=0))


if __name__ == "__main__":
    # Small deterministic setup consistent with the module's forward().
    T, B, E, DEPTH = 8, 2, 32, 2
    N_V = 50  # SOS + 49 vocabulary words

    key = jax.random.PRNGKey(0)
    k_param, k_data = jax.random.split(key)
    params = init_params(k_param, N_V, E, DEPTH)
    x_ids = jax.random.randint(k_data, (T, B), 0, N_V, dtype=jnp.int32)

    prepped = prepare_params(params, DEPTH)
    logits, (h_n, c_n) = model_forward(prepped, x_ids, depth=DEPTH,
                                       emb_size=E, n_vocab=N_V)
    jax.block_until_ready((logits, h_n, c_n))

    assert logits.shape == (T * B, N_V)
    assert h_n.shape == (DEPTH, B, E) and c_n.shape == (DEPTH, B, E)

    # Numerical check against a pure-JAX reference.  The recurrence runs in
    # f32 (tight tolerance); the head uses bf16 MXU inputs (looser tolerance).
    with jax.default_matmul_precision("highest"):
        ref_logits, (ref_h, ref_c) = reference_forward(params, x_ids, DEPTH)
    np.testing.assert_allclose(np.asarray(h_n), np.asarray(ref_h),
                               rtol=2e-3, atol=2e-3)
    np.testing.assert_allclose(np.asarray(c_n), np.asarray(ref_c),
                               rtol=2e-3, atol=2e-3)
    np.testing.assert_allclose(np.asarray(logits), np.asarray(ref_logits),
                               rtol=2e-2, atol=2e-2)

    print("KERNEL_OK")
</pallas_src>

<mosaic_0001>
module attributes {stable_mosaic.version = 11 : i64} {
  func.func @_hidden_kernel(%arg0: i32, %arg1: memref<64x128xf32, #tpu.memory_space<vmem>>, %arg2: memref<128x128xbf16, #tpu.memory_space<vmem>>, %arg3: memref<1x128xf32, #tpu.memory_space<vmem>>, %arg4: memref<64x128xbf16, #tpu.memory_space<vmem>>) attributes {dimension_semantics = [#tpu.dimension_semantics<parallel>], iteration_bounds = array<i64: 1>, scalar_prefetch = 0 : i64, scratch_operands = 0 : i64, tpu.core_type = #tpu.core_type<tc>, window_params = [{transform_indices = @transform_0, window_bounds = array<i64: 64, 128>}, {pipeline_mode = #tpu.pipeline_mode<synchronous>, transform_indices = @transform_1, window_bounds = array<i64: 128, 128>}, {pipeline_mode = #tpu.pipeline_mode<synchronous>, transform_indices = @transform_2, window_bounds = array<i64: 1, 128>}, {transform_indices = @transform_3, window_bounds = array<i64: 64, 128>}]} {
    %c0 = arith.constant 0 : index
    %c0_0 = arith.constant 0 : index
    %0 = vector.load %arg1[%c0, %c0_0] : memref<64x128xf32, #tpu.memory_space<vmem>>, vector<64x128xf32>
    %1 = arith.truncf %0 : vector<64x128xf32> to vector<64x128xbf16>
    %c0_1 = arith.constant 0 : index
    %c0_2 = arith.constant 0 : index
    %2 = vector.load %arg2[%c0_1, %c0_2] : memref<128x128xbf16, #tpu.memory_space<vmem>>, vector<128x128xbf16>
    %cst = arith.constant dense<0.000000e+00> : vector<64x128xf32>
    %3 = tpu.matmul %1, %2, %cst {dimension_numbers = #tpu.dot_dimension_numbers<[1], [0], [0], [1], [0, 0, 1, 1], [], []>} : vector<64x128xbf16>, vector<128x128xbf16>, vector<64x128xf32> -> vector<64x128xf32>
    %c0_3 = arith.constant 0 : index
    %c0_4 = arith.constant 0 : index
    %4 = vector.load %arg3[%c0_3, %c0_4] : memref<1x128xf32, #tpu.memory_space<vmem>>, vector<1x128xf32>
    %5 = vector.broadcast %4 : vector<1x128xf32> to vector<64x128xf32>
    %6 = arith.addf %3, %5 : vector<64x128xf32>
    %7 = math.tanh %6 : vector<64x128xf32>
    %8 = arith.truncf %7 : vector<64x128xf32> to vector<64x128xbf16>
    %c0_5 = arith.constant 0 : index
    %c0_6 = arith.constant 0 : index
    %9 = vector.load %arg4[%c0_5, %c0_6] : memref<64x128xbf16, #tpu.memory_space<vmem>>, vector<64x128xbf16>
    tpu.vector_store %arg4[%c0_5, %c0_6], %8 {strides = array<i32>} : memref<64x128xbf16, #tpu.memory_space<vmem>>, vector<64x128xbf16>,
    return
  }
  func.func @transform_0(%arg0: i32) -> (i32, i32) {
    %c0_i32 = arith.constant 0 : i32
    %c0_i32_0 = arith.constant 0 : i32
    return %arg0, %c0_i32 : i32, i32
  }
  func.func @transform_1(%arg0: i32) -> (i32, i32) {
    %c0_i32 = arith.constant 0 : i32
    %c0_i32_0 = arith.constant 0 : i32
    %c0_i32_1 = arith.constant 0 : i32
    return %c0_i32, %c0_i32_0 : i32, i32
  }
  func.func @transform_2(%arg0: i32) -> (i32, i32) {
    %c0_i32 = arith.constant 0 : i32
    %c0_i32_0 = arith.constant 0 : i32
    %c0_i32_1 = arith.constant 0 : i32
    return %c0_i32, %c0_i32_0 : i32, i32
  }
  func.func @transform_3(%arg0: i32) -> (i32, i32) {
    %c0_i32 = arith.constant 0 : i32
    %c0_i32_0 = arith.constant 0 : i32
    return %arg0, %c0_i32 : i32, i32
  }
}

module attributes {stable_mosaic.version = 11 : i64} {
  func.func @_out_proj_kernel(%arg0: i32, %arg1: i32, %arg2: memref<64x128xbf16, #tpu.memory_space<vmem>>, %arg3: memref<128x128xbf16, #tpu.memory_space<vmem>>, %arg4: memref<1x128xf32, #tpu.memory_space<vmem>>, %arg5: memref<64x128xf32, #tpu.memory_space<vmem>>) attributes {dimension_semantics = [#tpu.dimension_semantics<parallel>, #tpu.dimension_semantics<parallel>], iteration_bounds = array<i64: 1, 1>, scalar_prefetch = 0 : i64, scratch_operands = 0 : i64, tpu.core_type = #tpu.core_type<tc>, window_params = [{transform_indices = @transform_0, window_bounds = array<i64: 64, 128>}, {transform_indices = @transform_1, window_bounds = array<i64: 128, 128>}, {transform_indices = @transform_2, window_bounds = array<i64: 1, 128>}, {transform_indices = @transform_3, window_bounds = array<i64: 64, 128>}]} {
    %c0 = arith.constant 0 : index
    %c0_0 = arith.constant 0 : index
    %0 = vector.load %arg2[%c0, %c0_0] : memref<64x128xbf16, #tpu.memory_space<vmem>>, vector<64x128xbf16>
    %c0_1 = arith.constant 0 : index
    %c0_2 = arith.constant 0 : index
    %1 = vector.load %arg3[%c0_1, %c0_2] : memref<128x128xbf16, #tpu.memory_space<vmem>>, vector<128x128xbf16>
    %cst = arith.constant dense<0.000000e+00> : vector<64x128xf32>
    %2 = tpu.matmul %0, %1, %cst {dimension_numbers = #tpu.dot_dimension_numbers<[1], [0], [0], [1], [0, 0, 1, 1], [], []>} : vector<64x128xbf16>, vector<128x128xbf16>, vector<64x128xf32> -> vector<64x128xf32>
    %c0_3 = arith.constant 0 : index
    %c0_4 = arith.constant 0 : index
    %3 = vector.load %arg4[%c0_3, %c0_4] : memref<1x128xf32, #tpu.memory_space<vmem>>, vector<1x128xf32>
    %4 = vector.broadcast %3 : vector<1x128xf32> to vector<64x128xf32>
    %5 = arith.addf %2, %4 : vector<64x128xf32>
    %c0_5 = arith.constant 0 : index
    %c0_6 = arith.constant 0 : index
    %6 = vector.load %arg5[%c0_5, %c0_6] : memref<64x128xf32, #tpu.memory_space<vmem>>, vector<64x128xf32>
    tpu.vector_store %arg5[%c0_5, %c0_6], %5 {strides = array<i32>} : memref<64x128xf32, #tpu.memory_space<vmem>>, vector<64x128xf32>,
    return
  }
  func.func @transform_0(%arg0: i32, %arg1: i32) -> (i32, i32) {
    %c0_i32 = arith.constant 0 : i32
    %c0_i32_0 = arith.constant 0 : i32
    return %arg1, %c0_i32 : i32, i32
  }
  func.func @transform_1(%arg0: i32, %arg1: i32) -> (i32, i32) {
    %c0_i32 = arith.constant 0 : i32
    %c0_i32_0 = arith.constant 0 : i32
    return %c0_i32, %arg0 : i32, i32
  }
  func.func @transform_2(%arg0: i32, %arg1: i32) -> (i32, i32) {
    %c0_i32 = arith.constant 0 : i32
    %c0_i32_0 = arith.constant 0 : i32
    return %c0_i32, %arg0 : i32, i32
  }
  func.func @transform_3(%arg0: i32, %arg1: i32) -> (i32, i32) {
    %c0_i32 = arith.constant 0 : i32
    return %arg1, %arg0 : i32, i32
  }
}

module attributes {stable_mosaic.version = 11 : i64} {
  func.func @_lstm_chunk_kernel(%arg0: i32, %arg1: i32, %arg2: memref<8x8x128xf32, #tpu.memory_space<vmem>>, %arg3: memref<128x512xf32, #tpu.memory_space<vmem>>, %arg4: memref<128x512xf32, #tpu.memory_space<vmem>>, %arg5: memref<1x512xf32, #tpu.memory_space<vmem>>, %arg6: memref<8x8x128xf32, #tpu.memory_space<vmem>>, %arg7: memref<8x128xf32, #tpu.memory_space<vmem>>, %arg8: memref<8x128xf32, #tpu.memory_space<vmem>>, %arg9: memref<8x128xf32, #tpu.memory_space<vmem>>, %arg10: memref<8x128xf32, #tpu.memory_space<vmem>>, %arg11: memref<64x512xf32, #tpu.memory_space<vmem>>) attributes {dimension_semantics = [#tpu.dimension_semantics<parallel>, #tpu.dimension_semantics<arbitrary>], iteration_bounds = array<i64: 1, 1>, scalar_prefetch = 0 : i64, scratch_operands = 3 : i64, tpu.core_type = #tpu.core_type<tc>, window_params = [{transform_indices = @transform_0, window_bounds = array<i64: 8, 8, 128>}, {pipeline_mode = #tpu.pipeline_mode<synchronous>, transform_indices = @transform_1, window_bounds = array<i64: 128, 512>}, {pipeline_mode = #tpu.pipeline_mode<synchronous>, transform_indices = @transform_2, window_bounds = array<i64: 128, 512>}, {pipeline_mode = #tpu.pipeline_mode<synchronous>, transform_indices = @transform_3, window_bounds = array<i64: 1, 512>}, {transform_indices = @transform_4, window_bounds = array<i64: 8, 8, 128>}, {transform_indices = @transform_5, window_bounds = array<i64: 8, 128>}, {transform_indices = @transform_6, window_bounds = array<i64: 8, 128>}]} {
    %c0_i32 = arith.constant 0 : i32
    %0 = arith.cmpi eq, %arg1, %c0_i32 : i32
    %1 = arith.extui %0 : i1 to i32
    %c0_i32_0 = arith.constant 0 : i32
    %2 = arith.cmpi ne, %1, %c0_i32_0 : i32
    scf.if %2 {
      %cst_93 = arith.constant 0.000000e+00 : f32
      %274 = vector.broadcast %cst_93 : f32 to vector<8x128xf32>
      %c0_94 = arith.constant 0 : index
      %c0_95 = arith.constant 0 : index
      %275 = vector.load %arg9[%c0_94, %c0_95] : memref<8x128xf32, #tpu.memory_space<vmem>>, vector<8x128xf32>
      tpu.vector_store %arg9[%c0_94, %c0_95], %274 {strides = array<i32>} : memref<8x128xf32, #tpu.memory_space<vmem>>, vector<8x128xf32>,
      %cst_96 = arith.constant 0.000000e+00 : f32
      %276 = vector.broadcast %cst_96 : f32 to vector<8x128xf32>
      %c0_97 = arith.constant 0 : index
      %c0_98 = arith.constant 0 : index
      %277 = vector.load %arg10[%c0_97, %c0_98] : memref<8x128xf32, #tpu.memory_space<vmem>>, vector<8x128xf32>
      tpu.vector_store %arg10[%c0_97, %c0_98], %276 {strides = array<i32>} : memref<8x128xf32, #tpu.memory_space<vmem>>, vector<8x128xf32>,
    } else {
    }
    %c0 = arith.constant 0 : index
    %c0_1 = arith.constant 0 : index
    %c0_2 = arith.constant 0 : index
    %3 = vector.load %arg2[%c0, %c0_1, %c0_2] : memref<8x8x128xf32, #tpu.memory_space<vmem>>, vector<8x8x128xf32>
    %4 = vector.shape_cast %3 : vector<8x8x128xf32> to vector<64x128xf32>
    %c0_3 = arith.constant 0 : index
    %c0_4 = arith.constant 0 : index
    %5 = vector.load %arg3[%c0_3, %c0_4] : memref<128x512xf32, #tpu.memory_space<vmem>>, vector<128x512xf32>
    %cst = arith.constant dense<0.000000e+00> : vector<64x512xf32>
    %6 = tpu.matmul %4, %5, %cst {dimension_numbers = #tpu.dot_dimension_numbers<[1], [0], [0], [1], [0, 0, 1, 1], [], []>} : vector<64x128xf32>, vector<128x512xf32>, vector<64x512xf32> -> vector<64x512xf32>
    %c0_5 = arith.constant 0 : index
    %c0_6 = arith.constant 0 : index
    %7 = vector.load %arg5[%c0_5, %c0_6] : memref<1x512xf32, #tpu.memory_space<vmem>>, vector<1x512xf32>
    %8 = vector.broadcast %7 : vector<1x512xf32> to vector<64x512xf32>
    %9 = arith.addf %6, %8 : vector<64x512xf32>
    %c0_7 = arith.constant 0 : index
    %c0_8 = arith.constant 0 : index
    %10 = vector.load %arg11[%c0_7, %c0_8] : memref<64x512xf32, #tpu.memory_space<vmem>>, vector<64x512xf32>
    tpu.vector_store %arg11[%c0_7, %c0_8], %9 {strides = array<i32>} : memref<64x512xf32, #tpu.memory_space<vmem>>, vector<64x512xf32>,
    %c0_9 = arith.constant 0 : index
    %c0_10 = arith.constant 0 : index
    %11 = vector.load %arg9[%c0_9, %c0_10] : memref<8x128xf32, #tpu.memory_space<vmem>>, vector<8x128xf32>
    %c0_11 = arith.constant 0 : index
    %c0_12 = arith.constant 0 : index
    %12 = vector.load %arg10[%c0_11, %c0_12] : memref<8x128xf32, #tpu.memory_space<vmem>>, vector<8x128xf32>
    %c0_13 = arith.constant 0 : index
    %c0_14 = arith.constant 0 : index
    %13 = vector.load %arg11[%c0_13, %c0_14] : memref<64x512xf32, #tpu.memory_space<vmem>>, vector<8x512xf32>
    %c0_15 = arith.constant 0 : index
    %c0_16 = arith.constant 0 : index
    %14 = vector.load %arg4[%c0_15, %c0_16] : memref<128x512xf32, #tpu.memory_space<vmem>>, vector<128x512xf32>
    %cst_17 = arith.constant dense<0.000000e+00> : vector<8x512xf32>
    %15 = tpu.matmul %11, %14, %cst_17 {dimension_numbers = #tpu.dot_dimension_numbers<[1], [0], [0], [1], [0, 0, 1, 1], [], []>} : vector<8x128xf32>, vector<128x512xf32>, vector<8x512xf32> -> vector<8x512xf32>
    %16 = arith.addf %13, %15 : vector<8x512xf32>
    %17 = vector.extract_strided_slice %16 {offsets = [0, 0], sizes = [8, 128], strides = [1, 1]} : vector<8x512xf32> to vector<8x128xf32>
    %18 = arith.negf %17 : vector<8x128xf32>
    %19 = math.exp %18 : vector<8x128xf32>
    %cst_18 = arith.constant 1.000000e+00 : f32
    %20 = vector.broadcast %cst_18 : f32 to vector<8x128xf32>
    %21 = arith.addf %20, %19 : vector<8x128xf32>
    %22 = arith.divf %20, %21 : vector<8x128xf32>
    %23 = vector.extract_strided_slice %16 {offsets = [0, 128], sizes = [8, 128], strides = [1, 1]} : vector<8x512xf32> to vector<8x128xf32>
    %24 = arith.negf %23 : vector<8x128xf32>
    %25 = math.exp %24 : vector<8x128xf32>
    %cst_19 = arith.constant 1.000000e+00 : f32
    %26 = vector.broadcast %cst_19 : f32 to vector<8x128xf32>
    %27 = arith.addf %26, %25 : vector<8x128xf32>
    %28 = arith.divf %26, %27 : vector<8x128xf32>
    %29 = vector.extract_strided_slice %16 {offsets = [0, 256], sizes = [8, 128], strides = [1, 1]} : vector<8x512xf32> to vector<8x128xf32>
    %30 = math.tanh %29 : vector<8x128xf32>
    %31 = vector.extract_strided_slice %16 {offsets = [0, 384], sizes = [8, 128], strides = [1, 1]} : vector<8x512xf32> to vector<8x128xf32>
    %32 = arith.negf %31 : vector<8x128xf32>
    %33 = math.exp %32 : vector<8x128xf32>
    %cst_20 = arith.constant 1.000000e+00 : f32
    %34 = vector.broadcast %cst_20 : f32 to vector<8x128xf32>
    %35 = arith.addf %34, %33 : vector<8x128xf32>
    %36 = arith.divf %34, %35 : vector<8x128xf32>
    %37 = arith.mulf %28, %12 : vector<8x128xf32>
    %38 = arith.mulf %22, %30 : vector<8x128xf32>
    %39 = arith.addf %37, %38 : vector<8x128xf32>
    %40 = math.tanh %39 : vector<8x128xf32>
    %41 = arith.mulf %36, %40 : vector<8x128xf32>
    %c0_21 = arith.constant 0 : index
    %c0_22 = arith.constant 0 : index
    %c0_23 = arith.constant 0 : index
    %42 = vector.load %arg6[%c0_21, %c0_22, %c0_23] : memref<8x8x128xf32, #tpu.memory_space<vmem>>, vector<1x8x128xf32>
    %43 = vector.shape_cast %42 : vector<1x8x128xf32> to vector<8x128xf32>
    %44 = vector.shape_cast %41 : vector<8x128xf32> to vector<1x8x128xf32>
    tpu.vector_store %arg6[%c0_21, %c0_22, %c0_23], %44 {strides = array<i32>} : memref<8x8x128xf32, #tpu.memory_space<vmem>>, vector<1x8x128xf32>,
    %c8 = arith.constant 8 : index
    %c0_24 = arith.constant 0 : index
    %45 = vector.load %arg11[%c8, %c0_24] : memref<64x512xf32, #tpu.memory_space<vmem>>, vector<8x512xf32>
    %c0_25 = arith.constant 0 : index
    %c0_26 = arith.constant 0 : index
    %46 = vector.load %arg4[%c0_25, %c0_26] : memref<128x512xf32, #tpu.memory_space<vmem>>, vector<128x512xf32>
    %cst_27 = arith.constant dense<0.000000e+00> : vector<8x512xf32>
    %47 = tpu.matmul %41, %46, %cst_27 {dimension_numbers = #tpu.dot_dimension_numbers<[1], [0], [0], [1], [0, 0, 1, 1], [], []>} : vector<8x128xf32>, vector<128x512xf32>, vector<8x512xf32> -> vector<8x512xf32>
    %48 = arith.addf %45, %47 : vector<8x512xf32>
    %49 = vector.extract_strided_slice %48 {offsets = [0, 0], sizes = [8, 128], strides = [1, 1]} : vector<8x512xf32> to vector<8x128xf32>
    %50 = arith.negf %49 : vector<8x128xf32>
    %51 = math.exp %50 : vector<8x128xf32>
    %cst_28 = arith.constant 1.000000e+00 : f32
    %52 = vector.broadcast %cst_28 : f32 to vector<8x128xf32>
    %53 = arith.addf %52, %51 : vector<8x128xf32>
    %54 = arith.divf %52, %53 : vector<8x128xf32>
    %55 = vector.extract_strided_slice %48 {offsets = [0, 128], sizes = [8, 128], strides = [1, 1]} : vector<8x512xf32> to vector<8x128xf32>
    %56 = arith.negf %55 : vector<8x128xf32>
    %57 = math.exp %56 : vector<8x128xf32>
    %cst_29 = arith.constant 1.000000e+00 : f32
    %58 = vector.broadcast %cst_29 : f32 to vector<8x128xf32>
    %59 = arith.addf %58, %57 : vector<8x128xf32>
    %60 = arith.divf %58, %59 : vector<8x128xf32>
    %61 = vector.extract_strided_slice %48 {offsets = [0, 256], sizes = [8, 128], strides = [1, 1]} : vector<8x512xf32> to vector<8x128xf32>
    %62 = math.tanh %61 : vector<8x128xf32>
    %63 = vector.extract_strided_slice %48 {offsets = [0, 384], sizes = [8, 128], strides = [1, 1]} : vector<8x512xf32> to vector<8x128xf32>
    %64 = arith.negf %63 : vector<8x128xf32>
    %65 = math.exp %64 : vector<8x128xf32>
    %cst_30 = arith.constant 1.000000e+00 : f32
    %66 = vector.broadcast %cst_30 : f32 to vector<8x128xf32>
    %67 = arith.addf %66, %65 : vector<8x128xf32>
    %68 = arith.divf %66, %67 : vector<8x128xf32>
    %69 = arith.mulf %60, %39 : vector<8x128xf32>
    %70 = arith.mulf %54, %62 : vector<8x128xf32>
    %71 = arith.addf %69, %70 : vector<8x128xf32>
    %72 = math.tanh %71 : vector<8x128xf32>
    %73 = arith.mulf %68, %72 : vector<8x128xf32>
    %c1 = arith.constant 1 : index
    %c0_31 = arith.constant 0 : index
    %c0_32 = arith.constant 0 : index
    %74 = vector.load %arg6[%c1, %c0_31, %c0_32] : memref<8x8x128xf32, #tpu.memory_space<vmem>>, vector<1x8x128xf32>
    %75 = vector.shape_cast %74 : vector<1x8x128xf32> to vector<8x128xf32>
    %76 = vector.shape_cast %73 : vector<8x128xf32> to vector<1x8x128xf32>
    tpu.vector_store %arg6[%c1, %c0_31, %c0_32], %76 {strides = array<i32>} : memref<8x8x128xf32, #tpu.memory_space<vmem>>, vector<1x8x128xf32>,
    %c16 = arith.constant 16 : index
    %c0_33 = arith.constant 0 : index
    %77 = vector.load %arg11[%c16, %c0_33] : memref<64x512xf32, #tpu.memory_space<vmem>>, vector<8x512xf32>
    %c0_34 = arith.constant 0 : index
    %c0_35 = arith.constant 0 : index
    %78 = vector.load %arg4[%c0_34, %c0_35] : memref<128x512xf32, #tpu.memory_space<vmem>>, vector<128x512xf32>
    %cst_36 = arith.constant dense<0.000000e+00> : vector<8x512xf32>
    %79 = tpu.matmul %73, %78, %cst_36 {dimension_numbers = #tpu.dot_dimension_numbers<[1], [0], [0], [1], [0, 0, 1, 1], [], []>} : vector<8x128xf32>, vector<128x512xf32>, vector<8x512xf32> -> vector<8x512xf32>
    %80 = arith.addf %77, %79 : vector<8x512xf32>
    %81 = vector.extract_strided_slice %80 {offsets = [0, 0], sizes = [8, 128], strides = [1, 1]} : vector<8x512xf32> to vector<8x128xf32>
    %82 = arith.negf %81 : vector<8x128xf32>
    %83 = math.exp %82 : vector<8x128xf32>
    %cst_37 = arith.constant 1.000000e+00 : f32
    %84 = vector.broadcast %cst_37 : f32 to vector<8x128xf32>
    %85 = arith.addf %84, %83 : vector<8x128xf32>
    %86 = arith.divf %84, %85 : vector<8x128xf32>
    %87 = vector.extract_strided_slice %80 {offsets = [0, 128], sizes = [8, 128], strides = [1, 1]} : vector<8x512xf32> to vector<8x128xf32>
    %88 = arith.negf %87 : vector<8x128xf32>
    %89 = math.exp %88 : vector<8x128xf32>
    %cst_38 = arith.constant 1.000000e+00 : f32
    %90 = vector.broadcast %cst_38 : f32 to vector<8x128xf32>
    %91 = arith.addf %90, %89 : vector<8x128xf32>
    %92 = arith.divf %90, %91 : vector<8x128xf32>
    %93 = vector.extract_strided_slice %80 {offsets = [0, 256], sizes = [8, 128], strides = [1, 1]} : vector<8x512xf32> to vector<8x128xf32>
    %94 = math.tanh %93 : vector<8x128xf32>
    %95 = vector.extract_strided_slice %80 {offsets = [0, 384], sizes = [8, 128], strides = [1, 1]} : vector<8x512xf32> to vector<8x128xf32>
    %96 = arith.negf %95 : vector<8x128xf32>
    %97 = math.exp %96 : vector<8x128xf32>
    %cst_39 = arith.constant 1.000000e+00 : f32
    %98 = vector.broadcast %cst_39 : f32 to vector<8x128xf32>
    %99 = arith.addf %98, %97 : vector<8x128xf32>
    %100 = arith.divf %98, %99 : vector<8x128xf32>
    %101 = arith.mulf %92, %71 : vector<8x128xf32>
    %102 = arith.mulf %86, %94 : vector<8x128xf32>
    %103 = arith.addf %101, %102 : vector<8x128xf32>
    %104 = math.tanh %103 : vector<8x128xf32>
    %105 = arith.mulf %100, %104 : vector<8x128xf32>
    %c2 = arith.constant 2 : index
    %c0_40 = arith.constant 0 : index
    %c0_41 = arith.constant 0 : index
    %106 = vector.load %arg6[%c2, %c0_40, %c0_41] : memref<8x8x128xf32, #tpu.memory_space<vmem>>, vector<1x8x128xf32>
    %107 = vector.shape_cast %106 : vector<1x8x128xf32> to vector<8x128xf32>
    %108 = vector.shape_cast %105 : vector<8x128xf32> to vector<1x8x128xf32>
    tpu.vector_store %arg6[%c2, %c0_40, %c0_41], %108 {strides = array<i32>} : memref<8x8x128xf32, #tpu.memory_space<vmem>>, vector<1x8x128xf32>,
    %c24 = arith.constant 24 : index
    %c0_42 = arith.constant 0 : index
    %109 = vector.load %arg11[%c24, %c0_42] : memref<64x512xf32, #tpu.memory_space<vmem>>, vector<8x512xf32>
    %c0_43 = arith.constant 0 : index
    %c0_44 = arith.constant 0 : index
    %110 = vector.load %arg4[%c0_43, %c0_44] : memref<128x512xf32, #tpu.memory_space<vmem>>, vector<128x512xf32>
    %cst_45 = arith.constant dense<0.000000e+00> : vector<8x512xf32>
    %111 = tpu.matmul %105, %110, %cst_45 {dimension_numbers = #tpu.dot_dimension_numbers<[1], [0], [0], [1], [0, 0, 1, 1], [], []>} : vector<8x128xf32>, vector<128x512xf32>, vector<8x512xf32> -> vector<8x512xf32>
    %112 = arith.addf %109, %111 : vector<8x512xf32>
    %113 = vector.extract_strided_slice %112 {offsets = [0, 0], sizes = [8, 128], strides = [1, 1]} : vector<8x512xf32> to vector<8x128xf32>
    %114 = arith.negf %113 : vector<8x128xf32>
    %115 = math.exp %114 : vector<8x128xf32>
    %cst_46 = arith.constant 1.000000e+00 : f32
    %116 = vector.broadcast %cst_46 : f32 to vector<8x128xf32>
    %117 = arith.addf %116, %115 : vector<8x128xf32>
    %118 = arith.divf %116, %117 : vector<8x128xf32>
    %119 = vector.extract_strided_slice %112 {offsets = [0, 128], sizes = [8, 128], strides = [1, 1]} : vector<8x512xf32> to vector<8x128xf32>
    %120 = arith.negf %119 : vector<8x128xf32>
    %121 = math.exp %120 : vector<8x128xf32>
    %cst_47 = arith.constant 1.000000e+00 : f32
    %122 = vector.broadcast %cst_47 : f32 to vector<8x128xf32>
    %123 = arith.addf %122, %121 : vector<8x128xf32>
    %124 = arith.divf %122, %123 : vector<8x128xf32>
    %125 = vector.extract_strided_slice %112 {offsets = [0, 256], sizes = [8, 128], strides = [1, 1]} : vector<8x512xf32> to vector<8x128xf32>
    %126 = math.tanh %125 : vector<8x128xf32>
    %127 = vector.extract_strided_slice %112 {offsets = [0, 384], sizes = [8, 128], strides = [1, 1]} : vector<8x512xf32> to vector<8x128xf32>
    %128 = arith.negf %127 : vector<8x128xf32>
    %129 = math.exp %128 : vector<8x128xf32>
    %cst_48 = arith.constant 1.000000e+00 : f32
    %130 = vector.broadcast %cst_48 : f32 to vector<8x128xf32>
    %131 = arith.addf %130, %129 : vector<8x128xf32>
    %132 = arith.divf %130, %131 : vector<8x128xf32>
    %133 = arith.mulf %124, %103 : vector<8x128xf32>
    %134 = arith.mulf %118, %126 : vector<8x128xf32>
    %135 = arith.addf %133, %134 : vector<8x128xf32>
    %136 = math.tanh %135 : vector<8x128xf32>
    %137 = arith.mulf %132, %136 : vector<8x128xf32>
    %c3 = arith.constant 3 : index
    %c0_49 = arith.constant 0 : index
    %c0_50 = arith.constant 0 : index
    %138 = vector.load %arg6[%c3, %c0_49, %c0_50] : memref<8x8x128xf32, #tpu.memory_space<vmem>>, vector<1x8x128xf32>
    %139 = vector.shape_cast %138 : vector<1x8x128xf32> to vector<8x128xf32>
    %140 = vector.shape_cast %137 : vector<8x128xf32> to vector<1x8x128xf32>
    tpu.vector_store %arg6[%c3, %c0_49, %c0_50], %140 {strides = array<i32>} : memref<8x8x128xf32, #tpu.memory_space<vmem>>, vector<1x8x128xf32>,
    %c32 = arith.constant 32 : index
    %c0_51 = arith.constant 0 : index
    %141 = vector.load %arg11[%c32, %c0_51] : memref<64x512xf32, #tpu.memory_space<vmem>>, vector<8x512xf32>
    %c0_52 = arith.constant 0 : index
    %c0_53 = arith.constant 0 : index
    %142 = vector.load %arg4[%c0_52, %c0_53] : memref<128x512xf32, #tpu.memory_space<vmem>>, vector<128x512xf32>
    %cst_54 = arith.constant dense<0.000000e+00> : vector<8x512xf32>
    %143 = tpu.matmul %137, %142, %cst_54 {dimension_numbers = #tpu.dot_dimension_numbers<[1], [0], [0], [1], [0, 0, 1, 1], [], []>} : vector<8x128xf32>, vector<128x512xf32>, vector<8x512xf32> -> vector<8x512xf32>
    %144 = arith.addf %141, %143 : vector<8x512xf32>
    %145 = vector.extract_strided_slice %144 {offsets = [0, 0], sizes = [8, 128], strides = [1, 1]} : vector<8x512xf32> to vector<8x128xf32>
    %146 = arith.negf %145 : vector<8x128xf32>
    %147 = math.exp %146 : vector<8x128xf32>
    %cst_55 = arith.constant 1.000000e+00 : f32
    %148 = vector.broadcast %cst_55 : f32 to vector<8x128xf32>
    %149 = arith.addf %148, %147 : vector<8x128xf32>
    %150 = arith.divf %148, %149 : vector<8x128xf32>
    %151 = vector.extract_strided_slice %144 {offsets = [0, 128], sizes = [8, 128], strides = [1, 1]} : vector<8x512xf32> to vector<8x128xf32>
    %152 = arith.negf %151 : vector<8x128xf32>
    %153 = math.exp %152 : vector<8x128xf32>
    %cst_56 = arith.constant 1.000000e+00 : f32
    %154 = vector.broadcast %cst_56 : f32 to vector<8x128xf32>
    %155 = arith.addf %154, %153 : vector<8x128xf32>
    %156 = arith.divf %154, %155 : vector<8x128xf32>
    %157 = vector.extract_strided_slice %144 {offsets = [0, 256], sizes = [8, 128], strides = [1, 1]} : vector<8x512xf32> to vector<8x128xf32>
    %158 = math.tanh %157 : vector<8x128xf32>
    %159 = vector.extract_strided_slice %144 {offsets = [0, 384], sizes = [8, 128], strides = [1, 1]} : vector<8x512xf32> to vector<8x128xf32>
    %160 = arith.negf %159 : vector<8x128xf32>
    %161 = math.exp %160 : vector<8x128xf32>
    %cst_57 = arith.constant 1.000000e+00 : f32
    %162 = vector.broadcast %cst_57 : f32 to vector<8x128xf32>
    %163 = arith.addf %162, %161 : vector<8x128xf32>
    %164 = arith.divf %162, %163 : vector<8x128xf32>
    %165 = arith.mulf %156, %135 : vector<8x128xf32>
    %166 = arith.mulf %150, %158 : vector<8x128xf32>
    %167 = arith.addf %165, %166 : vector<8x128xf32>
    %168 = math.tanh %167 : vector<8x128xf32>
    %169 = arith.mulf %164, %168 : vector<8x128xf32>
    %c4 = arith.constant 4 : index
    %c0_58 = arith.constant 0 : index
    %c0_59 = arith.constant 0 : index
    %170 = vector.load %arg6[%c4, %c0_58, %c0_59] : memref<8x8x128xf32, #tpu.memory_space<vmem>>, vector<1x8x128xf32>
    %171 = vector.shape_cast %170 : vector<1x8x128xf32> to vector<8x128xf32>
    %172 = vector.shape_cast %169 : vector<8x128xf32> to vector<1x8x128xf32>
    tpu.vector_store %arg6[%c4, %c0_58, %c0_59], %172 {strides = array<i32>} : memref<8x8x128xf32, #tpu.memory_space<vmem>>, vector<1x8x128xf32>,
    %c40 = arith.constant 40 : index
    %c0_60 = arith.constant 0 : index
    %173 = vector.load %arg11[%c40, %c0_60] : memref<64x512xf32, #tpu.memory_space<vmem>>, vector<8x512xf32>
    %c0_61 = arith.constant 0 : index
    %c0_62 = arith.constant 0 : index
    %174 = vector.load %arg4[%c0_61, %c0_62] : memref<128x512xf32, #tpu.memory_space<vmem>>, vector<128x512xf32>
    %cst_63 = arith.constant dense<0.000000e+00> : vector<8x512xf32>
    %175 = tpu.matmul %169, %174, %cst_63 {dimension_numbers = #tpu.dot_dimension_numbers<[1], [0], [0], [1], [0, 0, 1, 1], [], []>} : vector<8x128xf32>, vector<128x512xf32>, vector<8x512xf32> -> vector<8x512xf32>
    %176 = arith.addf %173, %175 : vector<8x512xf32>
    %177 = vector.extract_strided_slice %176 {offsets = [0, 0], sizes = [8, 128], strides = [1, 1]} : vector<8x512xf32> to vector<8x128xf32>
    %178 = arith.negf %177 : vector<8x128xf32>
    %179 = math.exp %178 : vector<8x128xf32>
    %cst_64 = arith.constant 1.000000e+00 : f32
    %180 = vector.broadcast %cst_64 : f32 to vector<8x128xf32>
    %181 = arith.addf %180, %179 : vector<8x128xf32>
    %182 = arith.divf %180, %181 : vector<8x128xf32>
    %183 = vector.extract_strided_slice %176 {offsets = [0, 128], sizes = [8, 128], strides = [1, 1]} : vector<8x512xf32> to vector<8x128xf32>
    %184 = arith.negf %183 : vector<8x128xf32>
    %185 = math.exp %184 : vector<8x128xf32>
    %cst_65 = arith.constant 1.000000e+00 : f32
    %186 = vector.broadcast %cst_65 : f32 to vector<8x128xf32>
    %187 = arith.addf %186, %185 : vector<8x128xf32>
    %188 = arith.divf %186, %187 : vector<8x128xf32>
    %189 = vector.extract_strided_slice %176 {offsets = [0, 256], sizes = [8, 128], strides = [1, 1]} : vector<8x512xf32> to vector<8x128xf32>
    %190 = math.tanh %189 : vector<8x128xf32>
    %191 = vector.extract_strided_slice %176 {offsets = [0, 384], sizes = [8, 128], strides = [1, 1]} : vector<8x512xf32> to vector<8x128xf32>
    %192 = arith.negf %191 : vector<8x128xf32>
    %193 = math.exp %192 : vector<8x128xf32>
    %cst_66 = arith.constant 1.000000e+00 : f32
    %194 = vector.broadcast %cst_66 : f32 to vector<8x128xf32>
    %195 = arith.addf %194, %193 : vector<8x128xf32>
    %196 = arith.divf %194, %195 : vector<8x128xf32>
    %197 = arith.mulf %188, %167 : vector<8x128xf32>
    %198 = arith.mulf %182, %190 : vector<8x128xf32>
    %199 = arith.addf %197, %198 : vector<8x128xf32>
    %200 = math.tanh %199 : vector<8x128xf32>
    %201 = arith.mulf %196, %200 : vector<8x128xf32>
    %c5 = arith.constant 5 : index
    %c0_67 = arith.constant 0 : index
    %c0_68 = arith.constant 0 : index
    %202 = vector.load %arg6[%c5, %c0_67, %c0_68] : memref<8x8x128xf32, #tpu.memory_space<vmem>>, vector<1x8x128xf32>
    %203 = vector.shape_cast %202 : vector<1x8x128xf32> to vector<8x128xf32>
    %204 = vector.shape_cast %201 : vector<8x128xf32> to vector<1x8x128xf32>
    tpu.vector_store %arg6[%c5, %c0_67, %c0_68], %204 {strides = array<i32>} : memref<8x8x128xf32, #tpu.memory_space<vmem>>, vector<1x8x128xf32>,
    %c48 = arith.constant 48 : index
    %c0_69 = arith.constant 0 : index
    %205 = vector.load %arg11[%c48, %c0_69] : memref<64x512xf32, #tpu.memory_space<vmem>>, vector<8x512xf32>
    %c0_70 = arith.constant 0 : index
    %c0_71 = arith.constant 0 : index
    %206 = vector.load %arg4[%c0_70, %c0_71] : memref<128x512xf32, #tpu.memory_space<vmem>>, vector<128x512xf32>
    %cst_72 = arith.constant dense<0.000000e+00> : vector<8x512xf32>
    %207 = tpu.matmul %201, %206, %cst_72 {dimension_numbers = #tpu.dot_dimension_numbers<[1], [0], [0], [1], [0, 0, 1, 1], [], []>} : vector<8x128xf32>, vector<128x512xf32>, vector<8x512xf32> -> vector<8x512xf32>
    %208 = arith.addf %205, %207 : vector<8x512xf32>
    %209 = vector.extract_strided_slice %208 {offsets = [0, 0], sizes = [8, 128], strides = [1, 1]} : vector<8x512xf32> to vector<8x128xf32>
    %210 = arith.negf %209 : vector<8x128xf32>
    %211 = math.exp %210 : vector<8x128xf32>
    %cst_73 = arith.constant 1.000000e+00 : f32
    %212 = vector.broadcast %cst_73 : f32 to vector<8x128xf32>
    %213 = arith.addf %212, %211 : vector<8x128xf32>
    %214 = arith.divf %212, %213 : vector<8x128xf32>
    %215 = vector.extract_strided_slice %208 {offsets = [0, 128], sizes = [8, 128], strides = [1, 1]} : vector<8x512xf32> to vector<8x128xf32>
    %216 = arith.negf %215 : vector<8x128xf32>
    %217 = math.exp %216 : vector<8x128xf32>
    %cst_74 = arith.constant 1.000000e+00 : f32
    %218 = vector.broadcast %cst_74 : f32 to vector<8x128xf32>
    %219 = arith.addf %218, %217 : vector<8x128xf32>
    %220 = arith.divf %218, %219 : vector<8x128xf32>
    %221 = vector.extract_strided_slice %208 {offsets = [0, 256], sizes = [8, 128], strides = [1, 1]} : vector<8x512xf32> to vector<8x128xf32>
    %222 = math.tanh %221 : vector<8x128xf32>
    %223 = vector.extract_strided_slice %208 {offsets = [0, 384], sizes = [8, 128], strides = [1, 1]} : vector<8x512xf32> to vector<8x128xf32>
    %224 = arith.negf %223 : vector<8x128xf32>
    %225 = math.exp %224 : vector<8x128xf32>
    %cst_75 = arith.constant 1.000000e+00 : f32
    %226 = vector.broadcast %cst_75 : f32 to vector<8x128xf32>
    %227 = arith.addf %226, %225 : vector<8x128xf32>
    %228 = arith.divf %226, %227 : vector<8x128xf32>
    %229 = arith.mulf %220, %199 : vector<8x128xf32>
    %230 = arith.mulf %214, %222 : vector<8x128xf32>
    %231 = arith.addf %229, %230 : vector<8x128xf32>
    %232 = math.tanh %231 : vector<8x128xf32>
    %233 = arith.mulf %228, %232 : vector<8x128xf32>
    %c6 = arith.constant 6 : index
    %c0_76 = arith.constant 0 : index
    %c0_77 = arith.constant 0 : index
    %234 = vector.load %arg6[%c6, %c0_76, %c0_77] : memref<8x8x128xf32, #tpu.memory_space<vmem>>, vector<1x8x128xf32>
    %235 = vector.shape_cast %234 : vector<1x8x128xf32> to vector<8x128xf32>
    %236 = vector.shape_cast %233 : vector<8x128xf32> to vector<1x8x128xf32>
    tpu.vector_store %arg6[%c6, %c0_76, %c0_77], %236 {strides = array<i32>} : memref<8x8x128xf32, #tpu.memory_space<vmem>>, vector<1x8x128xf32>,
    %c56 = arith.constant 56 : index
    %c0_78 = arith.constant 0 : index
    %237 = vector.load %arg11[%c56, %c0_78] : memref<64x512xf32, #tpu.memory_space<vmem>>, vector<8x512xf32>
    %c0_79 = arith.constant 0 : index
    %c0_80 = arith.constant 0 : index
    %238 = vector.load %arg4[%c0_79, %c0_80] : memref<128x512xf32, #tpu.memory_space<vmem>>, vector<128x512xf32>
    %cst_81 = arith.constant dense<0.000000e+00> : vector<8x512xf32>
    %239 = tpu.matmul %233, %238, %cst_81 {dimension_numbers = #tpu.dot_dimension_numbers<[1], [0], [0], [1], [0, 0, 1, 1], [], []>} : vector<8x128xf32>, vector<128x512xf32>, vector<8x512xf32> -> vector<8x512xf32>
    %240 = arith.addf %237, %239 : vector<8x512xf32>
    %241 = vector.extract_strided_slice %240 {offsets = [0, 0], sizes = [8, 128], strides = [1, 1]} : vector<8x512xf32> to vector<8x128xf32>
    %242 = arith.negf %241 : vector<8x128xf32>
    %243 = math.exp %242 : vector<8x128xf32>
    %cst_82 = arith.constant 1.000000e+00 : f32
    %244 = vector.broadcast %cst_82 : f32 to vector<8x128xf32>
    %245 = arith.addf %244, %243 : vector<8x128xf32>
    %246 = arith.divf %244, %245 : vector<8x128xf32>
    %247 = vector.extract_strided_slice %240 {offsets = [0, 128], sizes = [8, 128], strides = [1, 1]} : vector<8x512xf32> to vector<8x128xf32>
    %248 = arith.negf %247 : vector<8x128xf32>
    %249 = math.exp %248 : vector<8x128xf32>
    %cst_83 = arith.constant 1.000000e+00 : f32
    %250 = vector.broadcast %cst_83 : f32 to vector<8x128xf32>
    %251 = arith.addf %250, %249 : vector<8x128xf32>
    %252 = arith.divf %250, %251 : vector<8x128xf32>
    %253 = vector.extract_strided_slice %240 {offsets = [0, 256], sizes = [8, 128], strides = [1, 1]} : vector<8x512xf32> to vector<8x128xf32>
    %254 = math.tanh %253 : vector<8x128xf32>
    %255 = vector.extract_strided_slice %240 {offsets = [0, 384], sizes = [8, 128], strides = [1, 1]} : vector<8x512xf32> to vector<8x128xf32>
    %256 = arith.negf %255 : vector<8x128xf32>
    %257 = math.exp %256 : vector<8x128xf32>
    %cst_84 = arith.constant 1.000000e+00 : f32
    %258 = vector.broadcast %cst_84 : f32 to vector<8x128xf32>
    %259 = arith.addf %258, %257 : vector<8x128xf32>
    %260 = arith.divf %258, %259 : vector<8x128xf32>
    %261 = arith.mulf %252, %231 : vector<8x128xf32>
    %262 = arith.mulf %246, %254 : vector<8x128xf32>
    %263 = arith.addf %261, %262 : vector<8x128xf32>
    %264 = math.tanh %263 : vector<8x128xf32>
    %265 = arith.mulf %260, %264 : vector<8x128xf32>
    %c7 = arith.constant 7 : index
    %c0_85 = arith.constant 0 : index
    %c0_86 = arith.constant 0 : index
    %266 = vector.load %arg6[%c7, %c0_85, %c0_86] : memref<8x8x128xf32, #tpu.memory_space<vmem>>, vector<1x8x128xf32>
    %267 = vector.shape_cast %266 : vector<1x8x128xf32> to vector<8x128xf32>
    %268 = vector.shape_cast %265 : vector<8x128xf32> to vector<1x8x128xf32>
    tpu.vector_store %arg6[%c7, %c0_85, %c0_86], %268 {strides = array<i32>} : memref<8x8x128xf32, #tpu.memory_space<vmem>>, vector<1x8x128xf32>,
    %c0_87 = arith.constant 0 : index
    %c0_88 = arith.constant 0 : index
    %269 = vector.load %arg9[%c0_87, %c0_88] : memref<8x128xf32, #tpu.memory_space<vmem>>, vector<8x128xf32>
    tpu.vector_store %arg9[%c0_87, %c0_88], %265 {strides = array<i32>} : memref<8x128xf32, #tpu.memory_space<vmem>>, vector<8x128xf32>,
    %c0_89 = arith.constant 0 : index
    %c0_90 = arith.constant 0 : index
    %270 = vector.load %arg10[%c0_89, %c0_90] : memref<8x128xf32, #tpu.memory_space<vmem>>, vector<8x128xf32>
    tpu.vector_store %arg10[%c0_89, %c0_90], %263 {strides = array<i32>} : memref<8x128xf32, #tpu.memory_space<vmem>>, vector<8x128xf32>,
    %c0_i32_91 = arith.constant 0 : i32
    %271 = arith.cmpi eq, %arg1, %c0_i32_91 : i32
    %272 = arith.extui %271 : i1 to i32
    %c0_i32_92 = arith.constant 0 : i32
    %273 = arith.cmpi ne, %272, %c0_i32_92 : i32
    scf.if %273 {
      %c0_93 = arith.constant 0 : index
      %c0_94 = arith.constant 0 : index
      %274 = vector.load %arg7[%c0_93, %c0_94] : memref<8x128xf32, #tpu.memory_space<vmem>>, vector<8x128xf32>
      tpu.vector_store %arg7[%c0_93, %c0_94], %265 {strides = array<i32>} : memref<8x128xf32, #tpu.memory_space<vmem>>, vector<8x128xf32>,
      %c0_95 = arith.constant 0 : index
      %c0_96 = arith.constant 0 : index
      %275 = vector.load %arg8[%c0_95, %c0_96] : memref<8x128xf32, #tpu.memory_space<vmem>>, vector<8x128xf32>
      tpu.vector_store %arg8[%c0_95, %c0_96], %263 {strides = array<i32>} : memref<8x128xf32, #tpu.memory_space<vmem>>, vector<8x128xf32>,
    } else {
    }
    return
  }
  func.func @transform_0(%arg0: i32, %arg1: i32) -> (i32, i32, i32) {
    %c0_i32 = arith.constant 0 : i32
    %c0_i32_0 = arith.constant 0 : i32
    return %arg1, %arg0, %c0_i32 : i32, i32, i32
  }
  func.func @transform_1(%arg0: i32, %arg1: i32) -> (i32, i32) {
    %c0_i32 = arith.constant 0 : i32
    %c0_i32_0 = arith.constant 0 : i32
    %c0_i32_1 = arith.constant 0 : i32
    return %c0_i32, %c0_i32_0 : i32, i32
  }
  func.func @transform_2(%arg0: i32, %arg1: i32) -> (i32, i32) {
    %c0_i32 = arith.constant 0 : i32
    %c0_i32_0 = arith.constant 0 : i32
    %c0_i32_1 = arith.constant 0 : i32
    return %c0_i32, %c0_i32_0 : i32, i32
  }
  func.func @transform_3(%arg0: i32, %arg1: i32) -> (i32, i32) {
    %c0_i32 = arith.constant 0 : i32
    %c0_i32_0 = arith.constant 0 : i32
    %c0_i32_1 = arith.constant 0 : i32
    return %c0_i32, %c0_i32_0 : i32, i32
  }
  func.func @transform_4(%arg0: i32, %arg1: i32) -> (i32, i32, i32) {
    %c0_i32 = arith.constant 0 : i32
    %c0_i32_0 = arith.constant 0 : i32
    return %arg1, %arg0, %c0_i32 : i32, i32, i32
  }
  func.func @transform_5(%arg0: i32, %arg1: i32) -> (i32, i32) {
    %c0_i32 = arith.constant 0 : i32
    %c0_i32_0 = arith.constant 0 : i32
    return %arg0, %c0_i32 : i32, i32
  }
  func.func @transform_6(%arg0: i32, %arg1: i32) -> (i32, i32) {
    %c0_i32 = arith.constant 0 : i32
    %c0_i32_0 = arith.constant 0 : i32
    return %arg0, %c0_i32 : i32, i32
  }
}

</mosaic_0001>

<llo_original>
// kernel: model_forward.7
$region0: #{model_forward.7}
  #allocation0 [shape = 'u32[]', space=smem, size = 0x4, offset = 0x4, fixed_abs, tag = 'smem constant byte address 0x4 - core index']
  #allocation1 [shape = 'u32[72,128]{1,0:T(1,128)}', space=vmem, size = 0x9000, scoped, tag = 'internal scratch']
  %s0 = inlined_call_operand.vmem [shape: bf16[64,128], index: 0, kind: input, shape index: {}]
  %s1 = inlined_call_operand.vmem [shape: bf16[128,128], index: 1, kind: input, shape index: {}]
  %s2 = inlined_call_operand.vmem [shape: f32[1,128], index: 2, kind: input, shape index: {}]
  %s3 = inlined_call_operand.vmem [shape: f32[64,128], index: 3, kind: output, shape index: {}]
  %s4 = sld [smem:[#allocation0]]
  $region22: #{model_forward.7} parent=0
    _
  %s6 = ssub.s32 1, %s4
  %s7 = scalar_select 0, %s6, %s4
  // Predicated region
  $region2: #{model_forward.7} parent=0 // pred_check
    _
  $region3: #{model_forward.7} parent=0 // pred_check_branch
    %9 = sbr.rel (0) target = $region5
  $region4: #{model_forward.7} parent=0 // pred_region
    _
  $region5: #{model_forward.7} parent=0 // pred_fallthru
    _
  // Predicated region
  $region6: #{model_forward.7} parent=0 // pred_check
    _
  $region7: #{model_forward.7} parent=0 // pred_check_branch
    %11 = sbr.rel (0) target = $region9
  $region8: #{model_forward.7} parent=0 // pred_region
    _
  $region9: #{model_forward.7} parent=0 // pred_fallthru
    _
  // Predicated region
  $region10: #{model_forward.7} parent=0 // pred_check
    _
  $region11: #{model_forward.7} parent=0 // pred_check_branch
    %13 = sbr.rel (0) target = $region13
  $region12: #{model_forward.7} parent=0 // pred_region
    _
  $region13: #{model_forward.7} parent=0 // pred_fallthru
    _
  %v14 = vld [vmem:[%s0] sm:$0xf]
  %v15 = vld [vmem:[%s0 + $0x4] sm:$0xf]
  %v16 = vld [vmem:[%s0 + $0x8] sm:$0xf]
  %v17 = vld [vmem:[%s0 + $0xc] sm:$0xf]
  %v18 = vld [vmem:[%s0 + $0x10] sm:$0xf]
  %v19 = vld [vmem:[%s0 + $0x14] sm:$0xf]
  %v20 = vld [vmem:[%s0 + $0x18] sm:$0xf]
  %v21 = vld [vmem:[%s0 + $0x1c] sm:$0xf]
  %v22 = vld [vmem:[%s1] sm:$0xf]
  %v23 = vld [vmem:[%s1 + $0x4] sm:$0xf]
  %v24 = vld [vmem:[%s1 + $0x8] sm:$0xf]
  %v25 = vld [vmem:[%s1 + $0xc] sm:$0xf]
  %v26 = vld [vmem:[%s1 + $0x10] sm:$0xf]
  %v27 = vld [vmem:[%s1 + $0x14] sm:$0xf]
  %v28 = vld [vmem:[%s1 + $0x18] sm:$0xf]
  %v29 = vld [vmem:[%s1 + $0x1c] sm:$0xf]
  %v30 = vld [vmem:[%s1 + $0x20] sm:$0xf]
  %v31 = vld [vmem:[%s1 + $0x24] sm:$0xf]
  %v32 = vld [vmem:[%s1 + $0x28] sm:$0xf]
  %v33 = vld [vmem:[%s1 + $0x2c] sm:$0xf]
  %v34 = vld [vmem:[%s1 + $0x30] sm:$0xf]
  %v35 = vld [vmem:[%s1 + $0x34] sm:$0xf]
  %v36 = vld [vmem:[%s1 + $0x38] sm:$0xf]
  %v37 = vld [vmem:[%s1 + $0x3c] sm:$0xf]
  %v38 = vld [vmem:[%s2] sm:$0x1]
  %v40 = vperm.slane %v38, 0
  %v50 = vunpack.c.l.b16 %v14
  %v51 = vunpack.c.l.b16 %v15
  %v52 = vunpack.c.l.b16 %v16
  %v53 = vunpack.c.l.b16 %v17
  %v54 = vunpack.c.l.b16 %v18
  %v55 = vunpack.c.l.b16 %v19
  %v56 = vunpack.c.l.b16 %v20
  %v57 = vunpack.c.l.b16 %v21
  %v58 = vpack.c.b16 %v51, %v50
  %v59 = vpack.c.b16 %v53, %v52
  %v60 = vpack.c.b16 %v55, %v54
  %v61 = vpack.c.b16 %v57, %v56
  %v82 = vunpack.c.l.b16 %v22
  %v83 = vunpack.c.l.b16 %v23
  %v84 = vunpack.c.l.b16 %v24
  %v85 = vunpack.c.l.b16 %v25
  %v86 = vunpack.c.l.b16 %v26
  %v87 = vunpack.c.l.b16 %v27
  %v88 = vunpack.c.l.b16 %v28
  %v89 = vunpack.c.l.b16 %v29
  %v90 = vunpack.c.l.b16 %v30
  %v91 = vunpack.c.l.b16 %v31
  %v92 = vunpack.c.l.b16 %v32
  %v93 = vunpack.c.l.b16 %v33
  %v94 = vunpack.c.l.b16 %v34
  %v95 = vunpack.c.l.b16 %v35
  %v96 = vunpack.c.l.b16 %v36
  %v97 = vunpack.c.l.b16 %v37
  %v98 = vpack.c.b16 %v83, %v82
  %v99 = vpack.c.b16 %v85, %v84
  %v100 = vpack.c.b16 %v87, %v86
  %v101 = vpack.c.b16 %v89, %v88
  %v102 = vpack.c.b16 %v91, %v90
  %v103 = vpack.c.b16 %v93, %v92
  %v104 = vpack.c.b16 %v95, %v94
  %v105 = vpack.c.b16 %v97, %v96
  %114 = vmatpush.bf16.msra.mxu0 %v105
  %115 = vmatpush.bf16.msra.mxu0 %v104
  %116 = vmatpush.bf16.msra.mxu0 %v103
  %117 = vmatpush.bf16.msra.mxu0 %v102
  %118 = vmatpush.bf16.msra.mxu0 %v101
  %119 = vmatpush.bf16.msra.mxu0 %v100
  %120 = vmatpush.bf16.msra.mxu0 %v99
  %121 = vmatpush.bf16.msra.mxu0 %v98
  %122 = vmatmul.bf16.gmra.mxu0 %v58
  %v123 = vpop.f32.mrf.mxu0
  %v124 = vadd.f32 %v40, %v123
  %v125 = vpop.f32.mrf.mxu0
  %v126 = vadd.f32 %v40, %v125
  %127 = vmatmul.bf16.gmra.mxu0 %v59
  %v128 = vpop.f32.mrf.mxu0
  %v129 = vadd.f32 %v40, %v128
  %v130 = vpop.f32.mrf.mxu0
  %v131 = vadd.f32 %v40, %v130
  %132 = vmatmul.bf16.gmra.mxu0 %v60
  %v133 = vpop.f32.mrf.mxu0
  %v134 = vadd.f32 %v40, %v133
  %v135 = vpop.f32.mrf.mxu0
  %v136 = vadd.f32 %v40, %v135
  %137 = vmatmul.bf16.gmra.mxu0 %v61
  %v138 = vpop.f32.mrf.mxu0
  %v139 = vadd.f32 %v40, %v138
  %v140 = vpop.f32.mrf.mxu0
  %v141 = vadd.f32 %v40, %v140
  %142 = vdwg.mxu0
  %143 = vst [vmem:[%s3] sm:$0xff] %v124
  %144 = vst [vmem:[%s3 + $0x8] sm:$0xff] %v126
  %145 = vst [vmem:[%s3 + $0x10] sm:$0xff] %v129
  %146 = vst [vmem:[%s3 + $0x18] sm:$0xff] %v131
  %147 = vst [vmem:[%s3 + $0x20] sm:$0xff] %v134
  %148 = vst [vmem:[%s3 + $0x28] sm:$0xff] %v136
  %149 = vst [vmem:[%s3 + $0x30] sm:$0xff] %v139
  %150 = vst [vmem:[%s3 + $0x38] sm:$0xff] %v141
  // Predicated region
  $region14: #{model_forward.7} parent=0 // pred_check
    _
  $region15: #{model_forward.7} parent=0 // pred_check_branch
    %152 = sbr.rel (0) target = $region17
  $region16: #{model_forward.7} parent=0 // pred_region
    _
  $region17: #{model_forward.7} parent=0 // pred_fallthru
    _
  // Predicated region
  $region18: #{model_forward.7} parent=0 // pred_check
    _
  $region19: #{model_forward.7} parent=0 // pred_check_branch
    %154 = sbr.rel (0) target = $region21
  $region20: #{model_forward.7} parent=0 // pred_region
    _
  $region21: #{model_forward.7} parent=0 // pred_fallthru
    _

// kernel: model_forward.6
$region0: #{model_forward.6}
  #allocation0 [shape = 'u32[]', space=smem, size = 0x4, offset = 0x4, fixed_abs, tag = 'smem constant byte address 0x4 - core index']
  #allocation1 [shape = 'u32[72,128]{1,0:T(1,128)}', space=vmem, size = 0x9000, scoped, tag = 'internal scratch']
  %s0 = inlined_call_operand.vmem [shape: f32[64,128], index: 0, kind: input, shape index: {}]
  %s1 = inlined_call_operand.vmem [shape: bf16[128,128], index: 1, kind: input, shape index: {}]
  %s2 = inlined_call_operand.vmem [shape: f32[1,128], index: 2, kind: input, shape index: {}]
  %s3 = inlined_call_operand.vmem [shape: bf16[64,128], index: 3, kind: output, shape index: {}]
  %s4 = sld [smem:[#allocation0]]
  $region22: #{model_forward.6} parent=0
    _
  %s6 = ssub.s32 1, %s4
  %s7 = scalar_select 0, %s6, %s4
  // Predicated region
  $region2: #{model_forward.6} parent=0 // pred_check
    _
  $region3: #{model_forward.6} parent=0 // pred_check_branch
    %9 = sbr.rel (0) target = $region5
  $region4: #{model_forward.6} parent=0 // pred_region
    _
  $region5: #{model_forward.6} parent=0 // pred_fallthru
    _
  // Predicated region
  $region6: #{model_forward.6} parent=0 // pred_check
    _
  $region7: #{model_forward.6} parent=0 // pred_check_branch
    %11 = sbr.rel (0) target = $region9
  $region8: #{model_forward.6} parent=0 // pred_region
    _
  $region9: #{model_forward.6} parent=0 // pred_fallthru
    _
  // Predicated region
  $region10: #{model_forward.6} parent=0 // pred_check
    _
  $region11: #{model_forward.6} parent=0 // pred_check_branch
    %13 = sbr.rel (0) target = $region13
  $region12: #{model_forward.6} parent=0 // pred_region
    _
  $region13: #{model_forward.6} parent=0 // pred_fallthru
    _
  %v14 = vld [vmem:[%s0] sm:$0xff]
  %v15 = vld [vmem:[%s0 + $0x8] sm:$0xff]
  %v16 = vld [vmem:[%s0 + $0x10] sm:$0xff]
  %v17 = vld [vmem:[%s0 + $0x18] sm:$0xff]
  %v18 = vld [vmem:[%s0 + $0x20] sm:$0xff]
  %v19 = vld [vmem:[%s0 + $0x28] sm:$0xff]
  %v20 = vld [vmem:[%s0 + $0x30] sm:$0xff]
  %v21 = vld [vmem:[%s0 + $0x38] sm:$0xff]
  %v22 = vpack.c.bf16 %v15, %v14
  %v23 = vpack.c.bf16 %v17, %v16
  %v24 = vpack.c.bf16 %v19, %v18
  %v25 = vpack.c.bf16 %v21, %v20
  %v26 = vld [vmem:[%s1] sm:$0xf]
  %v27 = vld [vmem:[%s1 + $0x4] sm:$0xf]
  %v28 = vld [vmem:[%s1 + $0x8] sm:$0xf]
  %v29 = vld [vmem:[%s1 + $0xc] sm:$0xf]
  %v30 = vld [vmem:[%s1 + $0x10] sm:$0xf]
  %v31 = vld [vmem:[%s1 + $0x14] sm:$0xf]
  %v32 = vld [vmem:[%s1 + $0x18] sm:$0xf]
  %v33 = vld [vmem:[%s1 + $0x1c] sm:$0xf]
  %v34 = vld [vmem:[%s1 + $0x20] sm:$0xf]
  %v35 = vld [vmem:[%s1 + $0x24] sm:$0xf]
  %v36 = vld [vmem:[%s1 + $0x28] sm:$0xf]
  %v37 = vld [vmem:[%s1 + $0x2c] sm:$0xf]
  %v38 = vld [vmem:[%s1 + $0x30] sm:$0xf]
  %v39 = vld [vmem:[%s1 + $0x34] sm:$0xf]
  %v40 = vld [vmem:[%s1 + $0x38] sm:$0xf]
  %v41 = vld [vmem:[%s1 + $0x3c] sm:$0xf]
  %v42 = vld [vmem:[%s2] sm:$0x1]
  %v44 = vperm.slane %v42, 0
  %v62 = vunpack.c.l.b16 %v26
  %v63 = vunpack.c.l.b16 %v27
  %v64 = vunpack.c.l.b16 %v28
  %v65 = vunpack.c.l.b16 %v29
  %v66 = vunpack.c.l.b16 %v30
  %v67 = vunpack.c.l.b16 %v31
  %v68 = vunpack.c.l.b16 %v32
  %v69 = vunpack.c.l.b16 %v33
  %v70 = vunpack.c.l.b16 %v34
  %v71 = vunpack.c.l.b16 %v35
  %v72 = vunpack.c.l.b16 %v36
  %v73 = vunpack.c.l.b16 %v37
  %v74 = vunpack.c.l.b16 %v38
  %v75 = vunpack.c.l.b16 %v39
  %v76 = vunpack.c.l.b16 %v40
  %v77 = vunpack.c.l.b16 %v41
  %v78 = vpack.c.b16 %v63, %v62
  %v79 = vpack.c.b16 %v65, %v64
  %v80 = vpack.c.b16 %v67, %v66
  %v81 = vpack.c.b16 %v69, %v68
  %v82 = vpack.c.b16 %v71, %v70
  %v83 = vpack.c.b16 %v73, %v72
  %v84 = vpack.c.b16 %v75, %v74
  %v85 = vpack.c.b16 %v77, %v76
  %94 = vmatpush.bf16.msra.mxu0 %v85
  %95 = vmatpush.bf16.msra.mxu0 %v84
  %96 = vmatpush.bf16.msra.mxu0 %v83
  %97 = vmatpush.bf16.msra.mxu0 %v82
  %98 = vmatpush.bf16.msra.mxu0 %v81
  %99 = vmatpush.bf16.msra.mxu0 %v80
  %100 = vmatpush.bf16.msra.mxu0 %v79
  %101 = vmatpush.bf16.msra.mxu0 %v78
  %102 = vmatmul.bf16.gmra.mxu0 %v22
  %v103 = vpop.f32.mrf.mxu0
  %v104 = vadd.f32 %v44, %v103
  %v105 = vpop.f32.mrf.mxu0
  %v106 = vadd.f32 %v44, %v105
  %107 = vmatmul.bf16.gmra.mxu0 %v23
  %v108 = vpop.f32.mrf.mxu0
  %v109 = vadd.f32 %v44, %v108
  %v110 = vpop.f32.mrf.mxu0
  %v111 = vadd.f32 %v44, %v110
  %112 = vmatmul.bf16.gmra.mxu0 %v24
  %v113 = vpop.f32.mrf.mxu0
  %v114 = vadd.f32 %v44, %v113
  %v115 = vpop.f32.mrf.mxu0
  %v116 = vadd.f32 %v44, %v115
  %117 = vmatmul.bf16.gmra.mxu0 %v25
  %v118 = vpop.f32.mrf.mxu0
  %v119 = vadd.f32 %v44, %v118
  %v120 = vpop.f32.mrf.mxu0
  %v121 = vadd.f32 %v44, %v120
  %122 = vdwg.mxu0
  %v123 = vtanh.pop %v104
  %v124 = vtanh.pop %v106
  %v125 = vtanh.pop %v109
  %v126 = vtanh.pop %v111
  %v127 = vtanh.pop %v114
  %v128 = vtanh.pop %v116
  %v129 = vtanh.pop %v119
  %v130 = vtanh.pop %v121
  %v131 = vpack.c.bf16 %v123, %v123
  %v132 = vpack.c.bf16 %v124, %v124
  %v133 = vpack.c.bf16 %v125, %v125
  %v134 = vpack.c.bf16 %v126, %v126
  %v135 = vpack.c.bf16 %v127, %v127
  %v136 = vpack.c.bf16 %v128, %v128
  %v137 = vpack.c.bf16 %v129, %v129
  %v138 = vpack.c.bf16 %v130, %v130
  %139 = vst [vmem:[%s3] sm:$0xf] %v131
  %140 = vst [vmem:[%s3 + $0x4] sm:$0xf] %v132
  %141 = vst [vmem:[%s3 + $0x8] sm:$0xf] %v133
  %142 = vst [vmem:[%s3 + $0xc] sm:$0xf] %v134
  %143 = vst [vmem:[%s3 + $0x10] sm:$0xf] %v135
  %144 = vst [vmem:[%s3 + $0x14] sm:$0xf] %v136
  %145 = vst [vmem:[%s3 + $0x18] sm:$0xf] %v137
  %146 = vst [vmem:[%s3 + $0x1c] sm:$0xf] %v138
  // Predicated region
  $region14: #{model_forward.6} parent=0 // pred_check
    _
  $region15: #{model_forward.6} parent=0 // pred_check_branch
    %148 = sbr.rel (0) target = $region17
  $region16: #{model_forward.6} parent=0 // pred_region
    _
  $region17: #{model_forward.6} parent=0 // pred_fallthru
    _
  // Predicated region
  $region18: #{model_forward.6} parent=0 // pred_check
    _
  $region19: #{model_forward.6} parent=0 // pred_check_branch
    %150 = sbr.rel (0) target = $region21
  $region20: #{model_forward.6} parent=0 // pred_region
    _
  $region21: #{model_forward.6} parent=0 // pred_fallthru
    _

// kernel: model_forward.4
$region0: #{model_forward.4}
  #allocation0 [shape = 'u32[]', space=smem, size = 0x4, offset = 0x4, fixed_abs, tag = 'smem constant byte address 0x4 - core index']
  #allocation1 [shape = 'u32[72,128]{1,0:T(1,128)}', space=vmem, size = 0x9000, scoped, tag = 'internal scratch']
  #allocation2 [shape = 'f32[8,128]{1,0:T(8,128)}', space=vmem, size = 0x1000, scoped, tag = 'scratch operand']
  #allocation3 [shape = 'f32[8,128]{1,0:T(8,128)}', space=vmem, size = 0x1000, scoped, tag = 'scratch operand']
  #allocation4 [shape = 'f32[64,512]{1,0:T(8,128)}', space=vmem, size = 0x20000, scoped, tag = 'scratch operand']
  %s0 = inlined_call_operand.vmem [shape: f32[8,8,128], index: 0, kind: input, shape index: {}]
  %s1 = inlined_call_operand.hbm [shape: f32[128,512], index: 1, kind: input, shape index: {}]
  %s2 = inlined_call_operand.hbm [shape: f32[128,512], index: 2, kind: input, shape index: {}]
  %s3 = inlined_call_operand.vmem [shape: f32[1,512], index: 3, kind: input, shape index: {}]
  %s4 = inlined_call_operand.vmem [shape: f32[8,8,128], index: 4, kind: output, shape index: {0}]
  %s5 = inlined_call_operand.vmem [shape: f32[8,128], index: 5, kind: output, shape index: {1}]
  %s6 = inlined_call_operand.vmem [shape: f32[8,128], index: 6, kind: output, shape index: {2}]
  %7 = xla_tuple %s4, %s5, %s6
  %s8 = sld [smem:[#allocation0]]
  $region58: #{model_forward.4} parent=0
    _
  %s10 = ssub.s32 1, %s8
  %s11 = scalar_select 0, %s10, %s8
  $region1: #{model_forward.4} parent=0
    #allocation5 [shape = 'u8[262144]{0}', space=vmem, size = 0x40000, scoped, tag = 'input window, operand 1, single buffered']
    #allocation6 [shape = 's32[1]{0}', space=sflag, size = 0x4, scoped, tag = 'scoped memory for model_forward.4']
    #allocation7 [shape = 'u8[262144]{0}', space=vmem, size = 0x40000, scoped, tag = 'input window, operand 2, single buffered']
    #allocation8 [shape = 's32[1]{0}', space=sflag, size = 0x4, scoped, tag = 'scoped memory for model_forward.4']
    %12 = vsyncpa [#allocation6], 0
    %13 = vsyncpa [#allocation8], 0
    // Predicated region
    $region2: #{model_forward.4} parent=1 // pred_check
      _
    $region3: #{model_forward.4} parent=1 // pred_check_branch
      %15 = sbr.rel (0) target = $region5
    $region4: #{model_forward.4} parent=1 // pred_region
      _
    $region5: #{model_forward.4} parent=1 // pred_fallthru
      _
    // Predicated region
    $region6: #{model_forward.4} parent=1 // pred_check
      _
    $region7: #{model_forward.4} parent=1 // pred_check_branch
      %17 = sbr.rel (0) target = $region9
    $region8: #{model_forward.4} parent=1 // pred_region
      %19 = vsyncadd [#allocation6], 0
      %s20 = sshll.u32 %s1, 4
      %s21 = int_to_ptr.hbm [resolvable:$true] %s20
      %s22 = sshll.u32 [#allocation5], 4
      %s23 = int_to_ptr.vmem [resolvable:$true] %s22
      %28 = dma.hbm_to_vmem [thread:$0]  %s21, 8192, %s23, [#allocation6], 512, 512, 32
    $region9: #{model_forward.4} parent=1 // pred_fallthru
      _
    // Predicated region
    $region10: #{model_forward.4} parent=1 // pred_check
      _
    $region11: #{model_forward.4} parent=1 // pred_check_branch
      %30 = sbr.rel (0) target = $region13
    $region12: #{model_forward.4} parent=1 // pred_region
      %32 = vsyncadd [#allocation8], 0
      %s33 = sshll.u32 %s2, 4
      %s34 = int_to_ptr.hbm [resolvable:$true] %s33
      %s35 = sshll.u32 [#allocation7], 4
      %s36 = int_to_ptr.vmem [resolvable:$true] %s35
      %41 = dma.hbm_to_vmem [thread:$0]  %s34, 8192, %s36, [#allocation8], 512, 512, 32
    $region13: #{model_forward.4} parent=1 // pred_fallthru
      _
    // Predicated region
    $region14: #{model_forward.4} parent=1 // pred_check
      _
    $region15: #{model_forward.4} parent=1 // pred_check_branch
      %43 = sbr.rel (0) target = $region17
    $region16: #{model_forward.4} parent=1 // pred_region
      _
    $region17: #{model_forward.4} parent=1 // pred_fallthru
      _
    // Predicated region
    $region18: #{model_forward.4} parent=1 // pred_check
      _
    $region19: #{model_forward.4} parent=1 // pred_check_branch
      %45 = sbr.rel (0) target = $region21
    $region20: #{model_forward.4} parent=1 // pred_region
      %47 = dma.done [#allocation6], 8192
    $region21: #{model_forward.4} parent=1 // pred_fallthru
      _
    // Predicated region
    $region22: #{model_forward.4} parent=1 // pred_check
      _
    $region23: #{model_forward.4} parent=1 // pred_check_branch
      %49 = sbr.rel (0) target = $region25
    $region24: #{model_forward.4} parent=1 // pred_region
      %51 = dma.done [#allocation8], 8192
    $region25: #{model_forward.4} parent=1 // pred_fallthru
      _
    %p52 = scmp.eq.s32.totalorder 0, 0
    // Predicated region
    $region26: #{model_forward.4} parent=1 // pred_check
      %p53 = pneg %p52
    $region27: #{model_forward.4} parent=1 // pred_check_branch
      %55 = sbr.rel (%p53) target = $region29
    $region28: #{model_forward.4} parent=1 // pred_region
      %56 = vst [vmem:[#allocation2] sm:$0xff] 0.0
      %57 = vst [vmem:[#allocation3] sm:$0xff] 0.0
    $region29: #{model_forward.4} parent=1 // pred_fallthru
      _
    %v58 = vld [vmem:[%s0] sm:$0xff]
    %v59 = vld [vmem:[%s0 + $0x8] sm:$0xff]
    %v60 = vld [vmem:[%s0 + $0x10] sm:$0xff]
    %v61 = vld [vmem:[%s0 + $0x18] sm:$0xff]
    %v62 = vld [vmem:[%s0 + $0x20] sm:$0xff]
    %v63 = vld [vmem:[%s0 + $0x28] sm:$0xff]
    %v64 = vld [vmem:[%s0 + $0x30] sm:$0xff]
    %v65 = vld [vmem:[%s0 + $0x38] sm:$0xff]
    %v66 = vld [vmem:[#allocation5] sm:$0xff]
    %v67 = vld [vmem:[#allocation5 + $0x8] sm:$0xff]
    %v68 = vld [vmem:[#allocation5 + $0x10] sm:$0xff]
    %v69 = vld [vmem:[#allocation5 + $0x18] sm:$0xff]
    %v70 = vld [vmem:[#allocation5 + $0x20] sm:$0xff]
    %v71 = vld [vmem:[#allocation5 + $0x28] sm:$0xff]
    %v72 = vld [vmem:[#allocation5 + $0x30] sm:$0xff]
    %v73 = vld [vmem:[#allocation5 + $0x38] sm:$0xff]
    %v74 = vld [vmem:[#allocation5 + $0x40] sm:$0xff]
    %v75 = vld [vmem:[#allocation5 + $0x48] sm:$0xff]
    %v76 = vld [vmem:[#allocation5 + $0x50] sm:$0xff]
    %v77 = vld [vmem:[#allocation5 + $0x58] sm:$0xff]
    %v78 = vld [vmem:[#allocation5 + $0x60] sm:$0xff]
    %v79 = vld [vmem:[#allocation5 + $0x68] sm:$0xff]
    %v80 = vld [vmem:[#allocation5 + $0x70] sm:$0xff]
    %v81 = vld [vmem:[#allocation5 + $0x78] sm:$0xff]
    %v82 = vld [vmem:[#allocation5 + $0x80] sm:$0xff]
    %v83 = vld [vmem:[#allocation5 + $0x88] sm:$0xff]
    %v84 = vld [vmem:[#allocation5 + $0x90] sm:$0xff]
    %v85 = vld [vmem:[#allocation5 + $0x98] sm:$0xff]
    %v86 = vld [vmem:[#allocation5 + $0xa0] sm:$0xff]
    %v87 = vld [vmem:[#allocation5 + $0xa8] sm:$0xff]
    %v88 = vld [vmem:[#allocation5 + $0xb0] sm:$0xff]
    %v89 = vld [vmem:[#allocation5 + $0xb8] sm:$0xff]
    %v90 = vld [vmem:[#allocation5 + $0xc0] sm:$0xff]
    %v91 = vld [vmem:[#allocation5 + $0xc8] sm:$0xff]
    %v92 = vld [vmem:[#allocation5 + $0xd0] sm:$0xff]
    %v93 = vld [vmem:[#allocation5 + $0xd8] sm:$0xff]
    %v94 = vld [vmem:[#allocation5 + $0xe0] sm:$0xff]
    %v95 = vld [vmem:[#allocation5 + $0xe8] sm:$0xff]
    %v96 = vld [vmem:[#allocation5 + $0xf0] sm:$0xff]
    %v97 = vld [vmem:[#allocation5 + $0xf8] sm:$0xff]
    %v98 = vld [vmem:[#allocation5 + $0x100] sm:$0xff]
    %v99 = vld [vmem:[#allocation5 + $0x108] sm:$0xff]
    %v100 = vld [vmem:[#allocation5 + $0x110] sm:$0xff]
    %v101 = vld [vmem:[#allocation5 + $0x118] sm:$0xff]
    %v102 = vld [vmem:[#allocation5 + $0x120] sm:$0xff]
    %v103 = vld [vmem:[#allocation5 + $0x128] sm:$0xff]
    %v104 = vld [vmem:[#allocation5 + $0x130] sm:$0xff]
    %v105 = vld [vmem:[#allocation5 + $0x138] sm:$0xff]
    %v106 = vld [vmem:[#allocation5 + $0x140] sm:$0xff]
    %v107 = vld [vmem:[#allocation5 + $0x148] sm:$0xff]
    %v108 = vld [vmem:[#allocation5 + $0x150] sm:$0xff]
    %v109 = vld [vmem:[#allocation5 + $0x158] sm:$0xff]
    %v110 = vld [vmem:[#allocation5 + $0x160] sm:$0xff]
    %v111 = vld [vmem:[#allocation5 + $0x168] sm:$0xff]
    %v112 = vld [vmem:[#allocation5 + $0x170] sm:$0xff]
    %v113 = vld [vmem:[#allocation5 + $0x178] sm:$0xff]
    %v114 = vld [vmem:[#allocation5 + $0x180] sm:$0xff]
    %v115 = vld [vmem:[#allocation5 + $0x188] sm:$0xff]
    %v116 = vld [vmem:[#allocation5 + $0x190] sm:$0xff]
    %v117 = vld [vmem:[#allocation5 + $0x198] sm:$0xff]
    %v118 = vld [vmem:[#allocation5 + $0x1a0] sm:$0xff]
    %v119 = vld [vmem:[#allocation5 + $0x1a8] sm:$0xff]
    %v120 = vld [vmem:[#allocation5 + $0x1b0] sm:$0xff]
    %v121 = vld [vmem:[#allocation5 + $0x1b8] sm:$0xff]
    %v122 = vld [vmem:[#allocation5 + $0x1c0] sm:$0xff]
    %v123 = vld [vmem:[#allocation5 + $0x1c8] sm:$0xff]
    %v124 = vld [vmem:[#allocation5 + $0x1d0] sm:$0xff]
    %v125 = vld [vmem:[#allocation5 + $0x1d8] sm:$0xff]
    %v126 = vld [vmem:[#allocation5 + $0x1e0] sm:$0xff]
    %v127 = vld [vmem:[#allocation5 + $0x1e8] sm:$0xff]
    %v128 = vld [vmem:[#allocation5 + $0x1f0] sm:$0xff]
    %v129 = vld [vmem:[#allocation5 + $0x1f8] sm:$0xff]
    %v130 = vld [vmem:[%s3] sm:$0xf]
    %v132 = vperm.slane %v130, 0
    %v133 = vperm.slane %v130, 1
    %v134 = vperm.slane %v130, 2
    %v135 = vperm.slane %v130, 3
    %140 = vmatpush.msra.mxu0 %v126
    %141 = vmatpush.msra.mxu0 %v122
    %142 = vmatpush.msra.mxu0 %v118
    %143 = vmatpush.msra.mxu0 %v114
    %144 = vmatpush.msra.mxu0 %v110
    %145 = vmatpush.msra.mxu0 %v106
    %146 = vmatpush.msra.mxu0 %v102
    %147 = vmatpush.msra.mxu0 %v98
    %148 = vmatpush.msra.mxu0 %v94
    %149 = vmatpush.msra.mxu0 %v90
    %150 = vmatpush.msra.mxu0 %v86
    %151 = vmatpush.msra.mxu0 %v82
    %152 = vmatpush.msra.mxu0 %v78
    %153 = vmatpush.msra.mxu0 %v74
    %154 = vmatpush.msra.mxu0 %v70
    %155 = vmatpush.msra.mxu0 %v66
    %156 = vmatmul.f32.gmra.mxu0 %v58
    %v157 = vpop.f32.mrf.mxu0
    %v158 = vadd.f32 %v132, %v157
    %159 = vmatmul.f32.gmra.mxu0 %v59
    %v160 = vpop.f32.mrf.mxu0
    %v161 = vadd.f32 %v132, %v160
    %162 = vmatmul.f32.gmra.mxu0 %v60
    %v163 = vpop.f32.mrf.mxu0
    %v164 = vadd.f32 %v132, %v163
    %165 = vmatmul.f32.gmra.mxu0 %v61
    %v166 = vpop.f32.mrf.mxu0
    %v167 = vadd.f32 %v132, %v166
    %168 = vmatmul.f32.gmra.mxu0 %v62
    %v169 = vpop.f32.mrf.mxu0
    %v170 = vadd.f32 %v132, %v169
    %171 = vmatmul.f32.gmra.mxu0 %v63
    %v172 = vpop.f32.mrf.mxu0
    %v173 = vadd.f32 %v132, %v172
    %174 = vmatmul.f32.gmra.mxu0 %v64
    %v175 = vpop.f32.mrf.mxu0
    %v176 = vadd.f32 %v132, %v175
    %177 = vmatmul.f32.gmra.mxu0 %v65
    %v178 = vpop.f32.mrf.mxu0
    %v179 = vadd.f32 %v132, %v178
    %180 = vdwg.mxu0
    %181 = vmatpush.msra.mxu0 %v127
    %182 = vmatpush.msra.mxu0 %v123
    %183 = vmatpush.msra.mxu0 %v119
    %184 = vmatpush.msra.mxu0 %v115
    %185 = vmatpush.msra.mxu0 %v111
    %186 = vmatpush.msra.mxu0 %v107
    %187 = vmatpush.msra.mxu0 %v103
    %188 = vmatpush.msra.mxu0 %v99
    %189 = vmatpush.msra.mxu0 %v95
    %190 = vmatpush.msra.mxu0 %v91
    %191 = vmatpush.msra.mxu0 %v87
    %192 = vmatpush.msra.mxu0 %v83
    %193 = vmatpush.msra.mxu0 %v79
    %194 = vmatpush.msra.mxu0 %v75
    %195 = vmatpush.msra.mxu0 %v71
    %196 = vmatpush.msra.mxu0 %v67
    %197 = vmatmul.f32.gmra.mxu0 %v58
    %v198 = vpop.f32.mrf.mxu0
    %v199 = vadd.f32 %v133, %v198
    %200 = vmatmul.f32.gmra.mxu0 %v59
    %v201 = vpop.f32.mrf.mxu0
    %v202 = vadd.f32 %v133, %v201
    %203 = vmatmul.f32.gmra.mxu0 %v60
    %v204 = vpop.f32.mrf.mxu0
    %v205 = vadd.f32 %v133, %v204
    %206 = vmatmul.f32.gmra.mxu0 %v61
    %v207 = vpop.f32.mrf.mxu0
    %v208 = vadd.f32 %v133, %v207
    %209 = vmatmul.f32.gmra.mxu0 %v62
    %v210 = vpop.f32.mrf.mxu0
    %v211 = vadd.f32 %v133, %v210
    %212 = vmatmul.f32.gmra.mxu0 %v63
    %v213 = vpop.f32.mrf.mxu0
    %v214 = vadd.f32 %v133, %v213
    %215 = vmatmul.f32.gmra.mxu0 %v64
    %v216 = vpop.f32.mrf.mxu0
    %v217 = vadd.f32 %v133, %v216
    %218 = vmatmul.f32.gmra.mxu0 %v65
    %v219 = vpop.f32.mrf.mxu0
    %v220 = vadd.f32 %v133, %v219
    %221 = vdwg.mxu0
    %222 = vmatpush.msra.mxu0 %v128
    %223 = vmatpush.msra.mxu0 %v124
    %224 = vmatpush.msra.mxu0 %v120
    %225 = vmatpush.msra.mxu0 %v116
    %226 = vmatpush.msra.mxu0 %v112
    %227 = vmatpush.msra.mxu0 %v108
    %228 = vmatpush.msra.mxu0 %v104
    %229 = vmatpush.msra.mxu0 %v100
    %230 = vmatpush.msra.mxu0 %v96
    %231 = vmatpush.msra.mxu0 %v92
    %232 = vmatpush.msra.mxu0 %v88
    %233 = vmatpush.msra.mxu0 %v84
    %234 = vmatpush.msra.mxu0 %v80
    %235 = vmatpush.msra.mxu0 %v76
    %236 = vmatpush.msra.mxu0 %v72
    %237 = vmatpush.msra.mxu0 %v68
    %238 = vmatmul.f32.gmra.mxu0 %v58
    %v239 = vpop.f32.mrf.mxu0
    %v240 = vadd.f32 %v134, %v239
    %241 = vmatmul.f32.gmra.mxu0 %v59
    %v242 = vpop.f32.mrf.mxu0
    %v243 = vadd.f32 %v134, %v242
    %244 = vmatmul.f32.gmra.mxu0 %v60
    %v245 = vpop.f32.mrf.mxu0
    %v246 = vadd.f32 %v134, %v245
    %247 = vmatmul.f32.gmra.mxu0 %v61
    %v248 = vpop.f32.mrf.mxu0
    %v249 = vadd.f32 %v134, %v248
    %250 = vmatmul.f32.gmra.mxu0 %v62
    %v251 = vpop.f32.mrf.mxu0
    %v252 = vadd.f32 %v134, %v251
    %253 = vmatmul.f32.gmra.mxu0 %v63
    %v254 = vpop.f32.mrf.mxu0
    %v255 = vadd.f32 %v134, %v254
    %256 = vmatmul.f32.gmra.mxu0 %v64
    %v257 = vpop.f32.mrf.mxu0
    %v258 = vadd.f32 %v134, %v257
    %259 = vmatmul.f32.gmra.mxu0 %v65
    %v260 = vpop.f32.mrf.mxu0
    %v261 = vadd.f32 %v134, %v260
    %262 = vdwg.mxu0
    %263 = vmatpush.msra.mxu0 %v129
    %264 = vmatpush.msra.mxu0 %v125
    %265 = vmatpush.msra.mxu0 %v121
    %266 = vmatpush.msra.mxu0 %v117
    %267 = vmatpush.msra.mxu0 %v113
    %268 = vmatpush.msra.mxu0 %v109
    %269 = vmatpush.msra.mxu0 %v105
    %270 = vmatpush.msra.mxu0 %v101
    %271 = vmatpush.msra.mxu0 %v97
    %272 = vmatpush.msra.mxu0 %v93
    %273 = vmatpush.msra.mxu0 %v89
    %274 = vmatpush.msra.mxu0 %v85
    %275 = vmatpush.msra.mxu0 %v81
    %276 = vmatpush.msra.mxu0 %v77
    %277 = vmatpush.msra.mxu0 %v73
    %278 = vmatpush.msra.mxu0 %v69
    %279 = vmatmul.f32.gmra.mxu0 %v58
    %v280 = vpop.f32.mrf.mxu0
    %v281 = vadd.f32 %v135, %v280
    %282 = vmatmul.f32.gmra.mxu0 %v59
    %v283 = vpop.f32.mrf.mxu0
    %v284 = vadd.f32 %v135, %v283
    %285 = vmatmul.f32.gmra.mxu0 %v60
    %v286 = vpop.f32.mrf.mxu0
    %v287 = vadd.f32 %v135, %v286
    %288 = vmatmul.f32.gmra.mxu0 %v61
    %v289 = vpop.f32.mrf.mxu0
    %v290 = vadd.f32 %v135, %v289
    %291 = vmatmul.f32.gmra.mxu0 %v62
    %v292 = vpop.f32.mrf.mxu0
    %v293 = vadd.f32 %v135, %v292
    %294 = vmatmul.f32.gmra.mxu0 %v63
    %v295 = vpop.f32.mrf.mxu0
    %v296 = vadd.f32 %v135, %v295
    %297 = vmatmul.f32.gmra.mxu0 %v64
    %v298 = vpop.f32.mrf.mxu0
    %v299 = vadd.f32 %v135, %v298
    %300 = vmatmul.f32.gmra.mxu0 %v65
    %v301 = vpop.f32.mrf.mxu0
    %v302 = vadd.f32 %v135, %v301
    %303 = vdwg.mxu0
    %304 = vst [vmem:[#allocation4] sm:$0xff] %v158
    %305 = vst [vmem:[#allocation4 + $0x8] sm:$0xff] %v199
    %306 = vst [vmem:[#allocation4 + $0x10] sm:$0xff] %v240
    %307 = vst [vmem:[#allocation4 + $0x18] sm:$0xff] %v281
    %308 = vst [vmem:[#allocation4 + $0x20] sm:$0xff] %v161
    %309 = vst [vmem:[#allocation4 + $0x28] sm:$0xff] %v202
    %310 = vst [vmem:[#allocation4 + $0x30] sm:$0xff] %v243
    %311 = vst [vmem:[#allocation4 + $0x38] sm:$0xff] %v284
    %312 = vst [vmem:[#allocation4 + $0x40] sm:$0xff] %v164
    %313 = vst [vmem:[#allocation4 + $0x48] sm:$0xff] %v205
    %314 = vst [vmem:[#allocation4 + $0x50] sm:$0xff] %v246
    %315 = vst [vmem:[#allocation4 + $0x58] sm:$0xff] %v287
    %316 = vst [vmem:[#allocation4 + $0x60] sm:$0xff] %v167
    %317 = vst [vmem:[#allocation4 + $0x68] sm:$0xff] %v208
    %318 = vst [vmem:[#allocation4 + $0x70] sm:$0xff] %v249
    %319 = vst [vmem:[#allocation4 + $0x78] sm:$0xff] %v290
    %320 = vst [vmem:[#allocation4 + $0x80] sm:$0xff] %v170
    %321 = vst [vmem:[#allocation4 + $0x88] sm:$0xff] %v211
    %322 = vst [vmem:[#allocation4 + $0x90] sm:$0xff] %v252
    %323 = vst [vmem:[#allocation4 + $0x98] sm:$0xff] %v293
    %324 = vst [vmem:[#allocation4 + $0xa0] sm:$0xff] %v173
    %325 = vst [vmem:[#allocation4 + $0xa8] sm:$0xff] %v214
    %326 = vst [vmem:[#allocation4 + $0xb0] sm:$0xff] %v255
    %327 = vst [vmem:[#allocation4 + $0xb8] sm:$0xff] %v296
    %328 = vst [vmem:[#allocation4 + $0xc0] sm:$0xff] %v176
    %329 = vst [vmem:[#allocation4 + $0xc8] sm:$0xff] %v217
    %330 = vst [vmem:[#allocation4 + $0xd0] sm:$0xff] %v258
    %331 = vst [vmem:[#allocation4 + $0xd8] sm:$0xff] %v299
    %332 = vst [vmem:[#allocation4 + $0xe0] sm:$0xff] %v179
    %333 = vst [vmem:[#allocation4 + $0xe8] sm:$0xff] %v220
    %334 = vst [vmem:[#allocation4 + $0xf0] sm:$0xff] %v261
    %335 = vst [vmem:[#allocation4 + $0xf8] sm:$0xff] %v302
    %v336 = vld [vmem:[#allocation2] sm:$0xff]
    %v337 = vld [vmem:[#allocation3] sm:$0xff]
    %v338 = vld [vmem:[#allocation4] sm:$0xff]
    %v339 = vld [vmem:[#allocation4 + $0x8] sm:$0xff]
    %v340 = vld [vmem:[#allocation4 + $0x10] sm:$0xff]
    %v341 = vld [vmem:[#allocation4 + $0x18] sm:$0xff]
    %v342 = vld [vmem:[#allocation7] sm:$0xff]
    %v343 = vld [vmem:[#allocation7 + $0x8] sm:$0xff]
    %v344 = vld [vmem:[#allocation7 + $0x10] sm:$0xff]
    %v345 = vld [vmem:[#allocation7 + $0x18] sm:$0xff]
    %v346 = vld [vmem:[#allocation7 + $0x20] sm:$0xff]
    %v347 = vld [vmem:[#allocation7 + $0x28] sm:$0xff]
    %v348 = vld [vmem:[#allocation7 + $0x30] sm:$0xff]
    %v349 = vld [vmem:[#allocation7 + $0x38] sm:$0xff]
    %v350 = vld [vmem:[#allocation7 + $0x40] sm:$0xff]
    %v351 = vld [vmem:[#allocation7 + $0x48] sm:$0xff]
    %v352 = vld [vmem:[#allocation7 + $0x50] sm:$0xff]
    %v353 = vld [vmem:[#allocation7 + $0x58] sm:$0xff]
    %v354 = vld [vmem:[#allocation7 + $0x60] sm:$0xff]
    %v355 = vld [vmem:[#allocation7 + $0x68] sm:$0xff]
    %v356 = vld [vmem:[#allocation7 + $0x70] sm:$0xff]
    %v357 = vld [vmem:[#allocation7 + $0x78] sm:$0xff]
    %v358 = vld [vmem:[#allocation7 + $0x80] sm:$0xff]
    %v359 = vld [vmem:[#allocation7 + $0x88] sm:$0xff]
    %v360 = vld [vmem:[#allocation7 + $0x90] sm:$0xff]
    %v361 = vld [vmem:[#allocation7 + $0x98] sm:$0xff]
    %v362 = vld [vmem:[#allocation7 + $0xa0] sm:$0xff]
    %v363 = vld [vmem:[#allocation7 + $0xa8] sm:$0xff]
    %v364 = vld [vmem:[#allocation7 + $0xb0] sm:$0xff]
    %v365 = vld [vmem:[#allocation7 + $0xb8] sm:$0xff]
    %v366 = vld [vmem:[#allocation7 + $0xc0] sm:$0xff]
    %v367 = vld [vmem:[#allocation7 + $0xc8] sm:$0xff]
    %v368 = vld [vmem:[#allocation7 + $0xd0] sm:$0xff]
    %v369 = vld [vmem:[#allocation7 + $0xd8] sm:$0xff]
    %v370 = vld [vmem:[#allocation7 + $0xe0] sm:$0xff]
    %v371 = vld [vmem:[#allocation7 + $0xe8] sm:$0xff]
    %v372 = vld [vmem:[#allocation7 + $0xf0] sm:$0xff]
    %v373 = vld [vmem:[#allocation7 + $0xf8] sm:$0xff]
    %v374 = vld [vmem:[#allocation7 + $0x100] sm:$0xff]
    %v375 = vld [vmem:[#allocation7 + $0x108] sm:$0xff]
    %v376 = vld [vmem:[#allocation7 + $0x110] sm:$0xff]
    %v377 = vld [vmem:[#allocation7 + $0x118] sm:$0xff]
    %v378 = vld [vmem:[#allocation7 + $0x120] sm:$0xff]
    %v379 = vld [vmem:[#allocation7 + $0x128] sm:$0xff]
    %v380 = vld [vmem:[#allocation7 + $0x130] sm:$0xff]
    %v381 = vld [vmem:[#allocation7 + $0x138] sm:$0xff]
    %v382 = vld [vmem:[#allocation7 + $0x140] sm:$0xff]
    %v383 = vld [vmem:[#allocation7 + $0x148] sm:$0xff]
    %v384 = vld [vmem:[#allocation7 + $0x150] sm:$0xff]
    %v385 = vld [vmem:[#allocation7 + $0x158] sm:$0xff]
    %v386 = vld [vmem:[#allocation7 + $0x160] sm:$0xff]
    %v387 = vld [vmem:[#allocation7 + $0x168] sm:$0xff]
    %v388 = vld [vmem:[#allocation7 + $0x170] sm:$0xff]
    %v389 = vld [vmem:[#allocation7 + $0x178] sm:$0xff]
    %v390 = vld [vmem:[#allocation7 + $0x180] sm:$0xff]
    %v391 = vld [vmem:[#allocation7 + $0x188] sm:$0xff]
    %v392 = vld [vmem:[#allocation7 + $0x190] sm:$0xff]
    %v393 = vld [vmem:[#allocation7 + $0x198] sm:$0xff]
    %v394 = vld [vmem:[#allocation7 + $0x1a0] sm:$0xff]
    %v395 = vld [vmem:[#allocation7 + $0x1a8] sm:$0xff]
    %v396 = vld [vmem:[#allocation7 + $0x1b0] sm:$0xff]
    %v397 = vld [vmem:[#allocation7 + $0x1b8] sm:$0xff]
    %v398 = vld [vmem:[#allocation7 + $0x1c0] sm:$0xff]
    %v399 = vld [vmem:[#allocation7 + $0x1c8] sm:$0xff]
    %v400 = vld [vmem:[#allocation7 + $0x1d0] sm:$0xff]
    %v401 = vld [vmem:[#allocation7 + $0x1d8] sm:$0xff]
    %v402 = vld [vmem:[#allocation7 + $0x1e0] sm:$0xff]
    %v403 = vld [vmem:[#allocation7 + $0x1e8] sm:$0xff]
    %v404 = vld [vmem:[#allocation7 + $0x1f0] sm:$0xff]
    %v405 = vld [vmem:[#allocation7 + $0x1f8] sm:$0xff]
    %406 = vmatpush.msra.mxu0 %v402
    %407 = vmatpush.msra.mxu0 %v398
    %408 = vmatpush.msra.mxu0 %v394
    %409 = vmatpush.msra.mxu0 %v390
    %410 = vmatpush.msra.mxu0 %v386
    %411 = vmatpush.msra.mxu0 %v382
    %412 = vmatpush.msra.mxu0 %v378
    %413 = vmatpush.msra.mxu0 %v374
    %414 = vmatpush.msra.mxu0 %v370
    %415 = vmatpush.msra.mxu0 %v366
    %416 = vmatpush.msra.mxu0 %v362
    %417 = vmatpush.msra.mxu0 %v358
    %418 = vmatpush.msra.mxu0 %v354
    %419 = vmatpush.msra.mxu0 %v350
    %420 = vmatpush.msra.mxu0 %v346
    %421 = vmatpush.msra.mxu0 %v342
    %422 = vmatmul.f32.gmra.mxu0 %v336
    %v423 = vpop.f32.mrf.mxu0
    %v424 = vadd.f32 0.0, %v423
    %425 = vdwg.mxu0
    %426 = vmatpush.msra.mxu0 %v403
    %427 = vmatpush.msra.mxu0 %v399
    %428 = vmatpush.msra.mxu0 %v395
    %429 = vmatpush.msra.mxu0 %v391
    %430 = vmatpush.msra.mxu0 %v387
    %431 = vmatpush.msra.mxu0 %v383
    %432 = vmatpush.msra.mxu0 %v379
    %433 = vmatpush.msra.mxu0 %v375
    %434 = vmatpush.msra.mxu0 %v371
    %435 = vmatpush.msra.mxu0 %v367
    %436 = vmatpush.msra.mxu0 %v363
    %437 = vmatpush.msra.mxu0 %v359
    %438 = vmatpush.msra.mxu0 %v355
    %439 = vmatpush.msra.mxu0 %v351
    %440 = vmatpush.msra.mxu0 %v347
    %441 = vmatpush.msra.mxu0 %v343
    %442 = vmatmul.f32.gmra.mxu0 %v336
    %v443 = vpop.f32.mrf.mxu0
    %v444 = vadd.f32 0.0, %v443
    %445 = vdwg.mxu0
    %446 = vmatpush.msra.mxu0 %v404
    %447 = vmatpush.msra.mxu0 %v400
    %448 = vmatpush.msra.mxu0 %v396
    %449 = vmatpush.msra.mxu0 %v392
    %450 = vmatpush.msra.mxu0 %v388
    %451 = vmatpush.msra.mxu0 %v384
    %452 = vmatpush.msra.mxu0 %v380
    %453 = vmatpush.msra.mxu0 %v376
    %454 = vmatpush.msra.mxu0 %v372
    %455 = vmatpush.msra.mxu0 %v368
    %456 = vmatpush.msra.mxu0 %v364
    %457 = vmatpush.msra.mxu0 %v360
    %458 = vmatpush.msra.mxu0 %v356
    %459 = vmatpush.msra.mxu0 %v352
    %460 = vmatpush.msra.mxu0 %v348
    %461 = vmatpush.msra.mxu0 %v344
    %462 = vmatmul.f32.gmra.mxu0 %v336
    %v463 = vpop.f32.mrf.mxu0
    %v464 = vadd.f32 0.0, %v463
    %465 = vdwg.mxu0
    %466 = vmatpush.msra.mxu0 %v405
    %467 = vmatpush.msra.mxu0 %v401
    %468 = vmatpush.msra.mxu0 %v397
    %469 = vmatpush.msra.mxu0 %v393
    %470 = vmatpush.msra.mxu0 %v389
    %471 = vmatpush.msra.mxu0 %v385
    %472 = vmatpush.msra.mxu0 %v381
    %473 = vmatpush.msra.mxu0 %v377
    %474 = vmatpush.msra.mxu0 %v373
    %475 = vmatpush.msra.mxu0 %v369
    %476 = vmatpush.msra.mxu0 %v365
    %477 = vmatpush.msra.mxu0 %v361
    %478 = vmatpush.msra.mxu0 %v357
    %479 = vmatpush.msra.mxu0 %v353
    %480 = vmatpush.msra.mxu0 %v349
    %481 = vmatpush.msra.mxu0 %v345
    %482 = vmatmul.f32.gmra.mxu0 %v336
    %v483 = vpop.f32.mrf.mxu0
    %v484 = vadd.f32 0.0, %v483
    %485 = vdwg.mxu0
    %v486 = vadd.f32 %v338, %v424
    %v487 = vadd.f32 %v339, %v444
    %v488 = vadd.f32 %v340, %v464
    %v489 = vadd.f32 %v341, %v484
    %v490 = vxor.u32 %v486, 2147483648
    %v491 = vmul.f32 %v490, 1.442695
    %v492 = vpow.pop %v491
    %v493 = vadd.f32 %v492, 1.0
    %v494 = vrcp.pop %v493
    %v495 = vmul.f32 %v493, %v494
    %v496 = vsub.f32 1.0, %v495
    %v497 = vmul.f32 %v494, %v496
    %v498 = vadd.f32 %v494, %v497
    %vm499 = vweird.f32 %v493
    %vm500 = vweird.f32 %v494
    %vm501 = vmor %vm499, %vm500
    %v502 = vsel %vm501, %v494, %v498
    %v503 = vand.u32 2147483647, %v493
    %vm504 = vcmp.eq.f32.partialorder %v503, 8.507059e+37
    %v505 = vand.u32 %v493, 2147483648
    %v506 = vor.u32 1.1754944e-38, %v505
    %v507 = vsel %vm504, %v506, %v502
    %v508 = vmul.f32 1.0, %v507
    %v509 = vxor.u32 %v487, 2147483648
    %v510 = vmul.f32 %v509, 1.442695
    %v511 = vpow.pop %v510
    %v512 = vadd.f32 %v511, 1.0
    %v513 = vrcp.pop %v512
    %v514 = vmul.f32 %v512, %v513
    %v515 = vsub.f32 1.0, %v514
    %v516 = vmul.f32 %v513, %v515
    %v517 = vadd.f32 %v513, %v516
    %vm518 = vweird.f32 %v512
    %vm519 = vweird.f32 %v513
    %vm520 = vmor %vm518, %vm519
    %v521 = vsel %vm520, %v513, %v517
    %v522 = vand.u32 2147483647, %v512
    %vm523 = vcmp.eq.f32.partialorder %v522, 8.507059e+37
    %v524 = vand.u32 %v512, 2147483648
    %v525 = vor.u32 1.1754944e-38, %v524
    %v526 = vsel %vm523, %v525, %v521
    %v527 = vmul.f32 1.0, %v526
    %v528 = vtanh.pop %v488
    %v529 = vxor.u32 %v489, 2147483648
    %v530 = vmul.f32 %v529, 1.442695
    %v531 = vpow.pop %v530
    %v532 = vadd.f32 %v531, 1.0
    %v533 = vrcp.pop %v532
    %v534 = vmul.f32 %v532, %v533
    %v535 = vsub.f32 1.0, %v534
    %v536 = vmul.f32 %v533, %v535
    %v537 = vadd.f32 %v533, %v536
    %vm538 = vweird.f32 %v532
    %vm539 = vweird.f32 %v533
    %vm540 = vmor %vm538, %vm539
    %v541 = vsel %vm540, %v533, %v537
    %v542 = vand.u32 2147483647, %v532
    %vm543 = vcmp.eq.f32.partialorder %v542, 8.507059e+37
    %v544 = vand.u32 %v532, 2147483648
    %v545 = vor.u32 1.1754944e-38, %v544
    %v546 = vsel %vm543, %v545, %v541
    %v547 = vmul.f32 1.0, %v546
    %v548 = vmul.f32 %v527, %v337
    %v549 = vmul.f32 %v508, %v528
    %v550 = vadd.f32 %v548, %v549
    %v551 = vtanh.pop %v550
    %v552 = vmul.f32 %v547, %v551
    %553 = vst [vmem:[%s4] sm:$0xff] %v552
    %v554 = vld [vmem:[#allocation4 + $0x20] sm:$0xff]
    %v555 = vld [vmem:[#allocation4 + $0x28] sm:$0xff]
    %v556 = vld [vmem:[#allocation4 + $0x30] sm:$0xff]
    %v557 = vld [vmem:[#allocation4 + $0x38] sm:$0xff]
    %v558 = vld [vmem:[#allocation7] sm:$0xff]
    %v559 = vld [vmem:[#allocation7 + $0x8] sm:$0xff]
    %v560 = vld [vmem:[#allocation7 + $0x10] sm:$0xff]
    %v561 = vld [vmem:[#allocation7 + $0x18] sm:$0xff]
    %v562 = vld [vmem:[#allocation7 + $0x20] sm:$0xff]
    %v563 = vld [vmem:[#allocation7 + $0x28] sm:$0xff]
    %v564 = vld [vmem:[#allocation7 + $0x30] sm:$0xff]
    %v565 = vld [vmem:[#allocation7 + $0x38] sm:$0xff]
    %v566 = vld [vmem:[#allocation7 + $0x40] sm:$0xff]
    %v567 = vld [vmem:[#allocation7 + $0x48] sm:$0xff]
    %v568 = vld [vmem:[#allocation7 + $0x50] sm:$0xff]
    %v569 = vld [vmem:[#allocation7 + $0x58] sm:$0xff]
    %v570 = vld [vmem:[#allocation7 + $0x60] sm:$0xff]
    %v571 = vld [vmem:[#allocation7 + $0x68] sm:$0xff]
    %v572 = vld [vmem:[#allocation7 + $0x70] sm:$0xff]
    %v573 = vld [vmem:[#allocation7 + $0x78] sm:$0xff]
    %v574 = vld [vmem:[#allocation7 + $0x80] sm:$0xff]
    %v575 = vld [vmem:[#allocation7 + $0x88] sm:$0xff]
    %v576 = vld [vmem:[#allocation7 + $0x90] sm:$0xff]
    %v577 = vld [vmem:[#allocation7 + $0x98] sm:$0xff]
    %v578 = vld [vmem:[#allocation7 + $0xa0] sm:$0xff]
    %v579 = vld [vmem:[#allocation7 + $0xa8] sm:$0xff]
    %v580 = vld [vmem:[#allocation7 + $0xb0] sm:$0xff]
    %v581 = vld [vmem:[#allocation7 + $0xb8] sm:$0xff]
    %v582 = vld [vmem:[#allocation7 + $0xc0] sm:$0xff]
    %v583 = vld [vmem:[#allocation7 + $0xc8] sm:$0xff]
    %v584 = vld [vmem:[#allocation7 + $0xd0] sm:$0xff]
    %v585 = vld [vmem:[#allocation7 + $0xd8] sm:$0xff]
    %v586 = vld [vmem:[#allocation7 + $0xe0] sm:$0xff]
    %v587 = vld [vmem:[#allocation7 + $0xe8] sm:$0xff]
    %v588 = vld [vmem:[#allocation7 + $0xf0] sm:$0xff]
    %v589 = vld [vmem:[#allocation7 + $0xf8] sm:$0xff]
    %v590 = vld [vmem:[#allocation7 + $0x100] sm:$0xff]
    %v591 = vld [vmem:[#allocation7 + $0x108] sm:$0xff]
    %v592 = vld [vmem:[#allocation7 + $0x110] sm:$0xff]
    %v593 = vld [vmem:[#allocation7 + $0x118] sm:$0xff]
    %v594 = vld [vmem:[#allocation7 + $0x120] sm:$0xff]
    %v595 = vld [vmem:[#allocation7 + $0x128] sm:$0xff]
    %v596 = vld [vmem:[#allocation7 + $0x130] sm:$0xff]
    %v597 = vld [vmem:[#allocation7 + $0x138] sm:$0xff]
    %v598 = vld [vmem:[#allocation7 + $0x140] sm:$0xff]
    %v599 = vld [vmem:[#allocation7 + $0x148] sm:$0xff]
    %v600 = vld [vmem:[#allocation7 + $0x150] sm:$0xff]
    %v601 = vld [vmem:[#allocation7 + $0x158] sm:$0xff]
    %v602 = vld [vmem:[#allocation7 + $0x160] sm:$0xff]
    %v603 = vld [vmem:[#allocation7 + $0x168] sm:$0xff]
    %v604 = vld [vmem:[#allocation7 + $0x170] sm:$0xff]
    %v605 = vld [vmem:[#allocation7 + $0x178] sm:$0xff]
    %v606 = vld [vmem:[#allocation7 + $0x180] sm:$0xff]
    %v607 = vld [vmem:[#allocation7 + $0x188] sm:$0xff]
    %v608 = vld [vmem:[#allocation7 + $0x190] sm:$0xff]
    %v609 = vld [vmem:[#allocation7 + $0x198] sm:$0xff]
    %v610 = vld [vmem:[#allocation7 + $0x1a0] sm:$0xff]
    %v611 = vld [vmem:[#allocation7 + $0x1a8] sm:$0xff]
    %v612 = vld [vmem:[#allocation7 + $0x1b0] sm:$0xff]
    %v613 = vld [vmem:[#allocation7 + $0x1b8] sm:$0xff]
    %v614 = vld [vmem:[#allocation7 + $0x1c0] sm:$0xff]
    %v615 = vld [vmem:[#allocation7 + $0x1c8] sm:$0xff]
    %v616 = vld [vmem:[#allocation7 + $0x1d0] sm:$0xff]
    %v617 = vld [vmem:[#allocation7 + $0x1d8] sm:$0xff]
    %v618 = vld [vmem:[#allocation7 + $0x1e0] sm:$0xff]
    %v619 = vld [vmem:[#allocation7 + $0x1e8] sm:$0xff]
    %v620 = vld [vmem:[#allocation7 + $0x1f0] sm:$0xff]
    %v621 = vld [vmem:[#allocation7 + $0x1f8] sm:$0xff]
    %622 = vmatpush.msra.mxu0 %v618
    %623 = vmatpush.msra.mxu0 %v614
    %624 = vmatpush.msra.mxu0 %v610
    %625 = vmatpush.msra.mxu0 %v606
    %626 = vmatpush.msra.mxu0 %v602
    %627 = vmatpush.msra.mxu0 %v598
    %628 = vmatpush.msra.mxu0 %v594
    %629 = vmatpush.msra.mxu0 %v590
    %630 = vmatpush.msra.mxu0 %v586
    %631 = vmatpush.msra.mxu0 %v582
    %632 = vmatpush.msra.mxu0 %v578
    %633 = vmatpush.msra.mxu0 %v574
    %634 = vmatpush.msra.mxu0 %v570
    %635 = vmatpush.msra.mxu0 %v566
    %636 = vmatpush.msra.mxu0 %v562
    %637 = vmatpush.msra.mxu0 %v558
    %638 = vmatmul.f32.gmra.mxu0 %v552
    %v639 = vpop.f32.mrf.mxu0
    %v640 = vadd.f32 0.0, %v639
    %641 = vdwg.mxu0
    %642 = vmatpush.msra.mxu0 %v619
    %643 = vmatpush.msra.mxu0 %v615
    %644 = vmatpush.msra.mxu0 %v611
    %645 = vmatpush.msra.mxu0 %v607
    %646 = vmatpush.msra.mxu0 %v603
    %647 = vmatpush.msra.mxu0 %v599
    %648 = vmatpush.msra.mxu0 %v595
    %649 = vmatpush.msra.mxu0 %v591
    %650 = vmatpush.msra.mxu0 %v587
    %651 = vmatpush.msra.mxu0 %v583
    %652 = vmatpush.msra.mxu0 %v579
    %653 = vmatpush.msra.mxu0 %v575
    %654 = vmatpush.msra.mxu0 %v571
    %655 = vmatpush.msra.mxu0 %v567
    %656 = vmatpush.msra.mxu0 %v563
    %657 = vmatpush.msra.mxu0 %v559
    %658 = vmatmul.f32.gmra.mxu0 %v552
    %v659 = vpop.f32.mrf.mxu0
    %v660 = vadd.f32 0.0, %v659
    %661 = vdwg.mxu0
    %662 = vmatpush.msra.mxu0 %v620
    %663 = vmatpush.msra.mxu0 %v616
    %664 = vmatpush.msra.mxu0 %v612
    %665 = vmatpush.msra.mxu0 %v608
    %666 = vmatpush.msra.mxu0 %v604
    %667 = vmatpush.msra.mxu0 %v600
    %668 = vmatpush.msra.mxu0 %v596
    %669 = vmatpush.msra.mxu0 %v592
    %670 = vmatpush.msra.mxu0 %v588
    %671 = vmatpush.msra.mxu0 %v584
    %672 = vmatpush.msra.mxu0 %v580
    %673 = vmatpush.msra.mxu0 %v576
    %674 = vmatpush.msra.mxu0 %v572
    %675 = vmatpush.msra.mxu0 %v568
    %676 = vmatpush.msra.mxu0 %v564
    %677 = vmatpush.msra.mxu0 %v560
    %678 = vmatmul.f32.gmra.mxu0 %v552
    %v679 = vpop.f32.mrf.mxu0
    %v680 = vadd.f32 0.0, %v679
    %681 = vdwg.mxu0
    %682 = vmatpush.msra.mxu0 %v621
    %683 = vmatpush.msra.mxu0 %v617
    %684 = vmatpush.msra.mxu0 %v613
    %685 = vmatpush.msra.mxu0 %v609
    %686 = vmatpush.msra.mxu0 %v605
    %687 = vmatpush.msra.mxu0 %v601
    %688 = vmatpush.msra.mxu0 %v597
    %689 = vmatpush.msra.mxu0 %v593
    %690 = vmatpush.msra.mxu0 %v589
    %691 = vmatpush.msra.mxu0 %v585
    %692 = vmatpush.msra.mxu0 %v581
    %693 = vmatpush.msra.mxu0 %v577
    %694 = vmatpush.msra.mxu0 %v573
    %695 = vmatpush.msra.mxu0 %v569
    %696 = vmatpush.msra.mxu0 %v565
    %697 = vmatpush.msra.mxu0 %v561
    %698 = vmatmul.f32.gmra.mxu0 %v552
    %v699 = vpop.f32.mrf.mxu0
    %v700 = vadd.f32 0.0, %v699
    %701 = vdwg.mxu0
    %v702 = vadd.f32 %v554, %v640
    %v703 = vadd.f32 %v555, %v660
    %v704 = vadd.f32 %v556, %v680
    %v705 = vadd.f32 %v557, %v700
    %v706 = vxor.u32 %v702, 2147483648
    %v707 = vmul.f32 %v706, 1.442695
    %v708 = vpow.pop %v707
    %v709 = vadd.f32 %v708, 1.0
    %v710 = vrcp.pop %v709
    %v711 = vmul.f32 %v709, %v710
    %v712 = vsub.f32 1.0, %v711
    %v713 = vmul.f32 %v710, %v712
    %v714 = vadd.f32 %v710, %v713
    %vm715 = vweird.f32 %v709
    %vm716 = vweird.f32 %v710
    %vm717 = vmor %vm715, %vm716
    %v718 = vsel %vm717, %v710, %v714
    %v719 = vand.u32 2147483647, %v709
    %vm720 = vcmp.eq.f32.partialorder %v719, 8.507059e+37
    %v721 = vand.u32 %v709, 2147483648
    %v722 = vor.u32 1.1754944e-38, %v721
    %v723 = vsel %vm720, %v722, %v718
    %v724 = vmul.f32 1.0, %v723
    %v725 = vxor.u32 %v703, 2147483648
    %v726 = vmul.f32 %v725, 1.442695
    %v727 = vpow.pop %v726
    %v728 = vadd.f32 %v727, 1.0
    %v729 = vrcp.pop %v728
    %v730 = vmul.f32 %v728, %v729
    %v731 = vsub.f32 1.0, %v730
    %v732 = vmul.f32 %v729, %v731
    %v733 = vadd.f32 %v729, %v732
    %vm734 = vweird.f32 %v728
    %vm735 = vweird.f32 %v729
    %vm736 = vmor %vm734, %vm735
    %v737 = vsel %vm736, %v729, %v733
    %v738 = vand.u32 2147483647, %v728
    %vm739 = vcmp.eq.f32.partialorder %v738, 8.507059e+37
    %v740 = vand.u32 %v728, 2147483648
    %v741 = vor.u32 1.1754944e-38, %v740
    %v742 = vsel %vm739, %v741, %v737
    %v743 = vmul.f32 1.0, %v742
    %v744 = vtanh.pop %v704
    %v745 = vxor.u32 %v705, 2147483648
    %v746 = vmul.f32 %v745, 1.442695
    %v747 = vpow.pop %v746
    %v748 = vadd.f32 %v747, 1.0
    %v749 = vrcp.pop %v748
    %v750 = vmul.f32 %v748, %v749
    %v751 = vsub.f32 1.0, %v750
    %v752 = vmul.f32 %v749, %v751
    %v753 = vadd.f32 %v749, %v752
    %vm754 = vweird.f32 %v748
    %vm755 = vweird.f32 %v749
    %vm756 = vmor %vm754, %vm755
    %v757 = vsel %vm756, %v749, %v753
    %v758 = vand.u32 2147483647, %v748
    %vm759 = vcmp.eq.f32.partialorder %v758, 8.507059e+37
    %v760 = vand.u32 %v748, 2147483648
    %v761 = vor.u32 1.1754944e-38, %v760
    %v762 = vsel %vm759, %v761, %v757
    %v763 = vmul.f32 1.0, %v762
    %v764 = vmul.f32 %v743, %v550
    %v765 = vmul.f32 %v724, %v744
    %v766 = vadd.f32 %v764, %v765
    %v767 = vtanh.pop %v766
    %v768 = vmul.f32 %v763, %v767
    %s769 = scalar_lea.vmem %s4, 8
    %770 = vst [vmem:[%s769] sm:$0xff] %v768
    %v771 = vld [vmem:[#allocation4 + $0x40] sm:$0xff]
    %v772 = vld [vmem:[#allocation4 + $0x48] sm:$0xff]
    %v773 = vld [vmem:[#allocation4 + $0x50] sm:$0xff]
    %v774 = vld [vmem:[#allocation4 + $0x58] sm:$0xff]
    %v775 = vld [vmem:[#allocation7] sm:$0xff]
    %v776 = vld [vmem:[#allocation7 + $0x8] sm:$0xff]
    %v777 = vld [vmem:[#allocation7 + $0x10] sm:$0xff]
    %v778 = vld [vmem:[#allocation7 + $0x18] sm:$0xff]
    %v779 = vld [vmem:[#allocation7 + $0x20] sm:$0xff]
    %v780 = vld [vmem:[#allocation7 + $0x28] sm:$0xff]
    %v781 = vld [vmem:[#allocation7 + $0x30] sm:$0xff]
    %v782 = vld [vmem:[#allocation7 + $0x38] sm:$0xff]
    %v783 = vld [vmem:[#allocation7 + $0x40] sm:$0xff]
    %v784 = vld [vmem:[#allocation7 + $0x48] sm:$0xff]
    %v785 = vld [vmem:[#allocation7 + $0x50] sm:$0xff]
    %v786 = vld [vmem:[#allocation7 + $0x58] sm:$0xff]
    %v787 = vld [vmem:[#allocation7 + $0x60] sm:$0xff]
    %v788 = vld [vmem:[#allocation7 + $0x68] sm:$0xff]
    %v789 = vld [vmem:[#allocation7 + $0x70] sm:$0xff]
    %v790 = vld [vmem:[#allocation7 + $0x78] sm:$0xff]
    %v791 = vld [vmem:[#allocation7 + $0x80] sm:$0xff]
    %v792 = vld [vmem:[#allocation7 + $0x88] sm:$0xff]
    %v793 = vld [vmem:[#allocation7 + $0x90] sm:$0xff]
    %v794 = vld [vmem:[#allocation7 + $0x98] sm:$0xff]
    %v795 = vld [vmem:[#allocation7 + $0xa0] sm:$0xff]
    %v796 = vld [vmem:[#allocation7 + $0xa8] sm:$0xff]
    %v797 = vld [vmem:[#allocation7 + $0xb0] sm:$0xff]
    %v798 = vld [vmem:[#allocation7 + $0xb8] sm:$0xff]
    %v799 = vld [vmem:[#allocation7 + $0xc0] sm:$0xff]
    %v800 = vld [vmem:[#allocation7 + $0xc8] sm:$0xff]
    %v801 = vld [vmem:[#allocation7 + $0xd0] sm:$0xff]
    %v802 = vld [vmem:[#allocation7 + $0xd8] sm:$0xff]
    %v803 = vld [vmem:[#allocation7 + $0xe0] sm:$0xff]
    %v804 = vld [vmem:[#allocation7 + $0xe8] sm:$0xff]
    %v805 = vld [vmem:[#allocation7 + $0xf0] sm:$0xff]
    %v806 = vld [vmem:[#allocation7 + $0xf8] sm:$0xff]
    %v807 = vld [vmem:[#allocation7 + $0x100] sm:$0xff]
    %v808 = vld [vmem:[#allocation7 + $0x108] sm:$0xff]
    %v809 = vld [vmem:[#allocation7 + $0x110] sm:$0xff]
    %v810 = vld [vmem:[#allocation7 + $0x118] sm:$0xff]
    %v811 = vld [vmem:[#allocation7 + $0x120] sm:$0xff]
    %v812 = vld [vmem:[#allocation7 + $0x128] sm:$0xff]
    %v813 = vld [vmem:[#allocation7 + $0x130] sm:$0xff]
    %v814 = vld [vmem:[#allocation7 + $0x138] sm:$0xff]
    %v815 = vld [vmem:[#allocation7 + $0x140] sm:$0xff]
    %v816 = vld [vmem:[#allocation7 + $0x148] sm:$0xff]
    %v817 = vld [vmem:[#allocation7 + $0x150] sm:$0xff]
    %v818 = vld [vmem:[#allocation7 + $0x158] sm:$0xff]
    %v819 = vld [vmem:[#allocation7 + $0x160] sm:$0xff]
    %v820 = vld [vmem:[#allocation7 + $0x168] sm:$0xff]
    %v821 = vld [vmem:[#allocation7 + $0x170] sm:$0xff]
    %v822 = vld [vmem:[#allocation7 + $0x178] sm:$0xff]
    %v823 = vld [vmem:[#allocation7 + $0x180] sm:$0xff]
    %v824 = vld [vmem:[#allocation7 + $0x188] sm:$0xff]
    %v825 = vld [vmem:[#allocation7 + $0x190] sm:$0xff]
    %v826 = vld [vmem:[#allocation7 + $0x198] sm:$0xff]
    %v827 = vld [vmem:[#allocation7 + $0x1a0] sm:$0xff]
    %v828 = vld [vmem:[#allocation7 + $0x1a8] sm:$0xff]
    %v829 = vld [vmem:[#allocation7 + $0x1b0] sm:$0xff]
    %v830 = vld [vmem:[#allocation7 + $0x1b8] sm:$0xff]
    %v831 = vld [vmem:[#allocation7 + $0x1c0] sm:$0xff]
    %v832 = vld [vmem:[#allocation7 + $0x1c8] sm:$0xff]
    %v833 = vld [vmem:[#allocation7 + $0x1d0] sm:$0xff]
    %v834 = vld [vmem:[#allocation7 + $0x1d8] sm:$0xff]
    %v835 = vld [vmem:[#allocation7 + $0x1e0] sm:$0xff]
    %v836 = vld [vmem:[#allocation7 + $0x1e8] sm:$0xff]
    %v837 = vld [vmem:[#allocation7 + $0x1f0] sm:$0xff]
    %v838 = vld [vmem:[#allocation7 + $0x1f8] sm:$0xff]
    %839 = vmatpush.msra.mxu0 %v835
    %840 = vmatpush.msra.mxu0 %v831
    %841 = vmatpush.msra.mxu0 %v827
    %842 = vmatpush.msra.mxu0 %v823
    %843 = vmatpush.msra.mxu0 %v819
    %844 = vmatpush.msra.mxu0 %v815
    %845 = vmatpush.msra.mxu0 %v811
    %846 = vmatpush.msra.mxu0 %v807
    %847 = vmatpush.msra.mxu0 %v803
    %848 = vmatpush.msra.mxu0 %v799
    %849 = vmatpush.msra.mxu0 %v795
    %850 = vmatpush.msra.mxu0 %v791
    %851 = vmatpush.msra.mxu0 %v787
    %852 = vmatpush.msra.mxu0 %v783
    %853 = vmatpush.msra.mxu0 %v779
    %854 = vmatpush.msra.mxu0 %v775
    %855 = vmatmul.f32.gmra.mxu0 %v768
    %v856 = vpop.f32.mrf.mxu0
    %v857 = vadd.f32 0.0, %v856
    %858 = vdwg.mxu0
    %859 = vmatpush.msra.mxu0 %v836
    %860 = vmatpush.msra.mxu0 %v832
    %861 = vmatpush.msra.mxu0 %v828
    %862 = vmatpush.msra.mxu0 %v824
    %863 = vmatpush.msra.mxu0 %v820
    %864 = vmatpush.msra.mxu0 %v816
    %865 = vmatpush.msra.mxu0 %v812
    %866 = vmatpush.msra.mxu0 %v808
    %867 = vmatpush.msra.mxu0 %v804
    %868 = vmatpush.msra.mxu0 %v800
    %869 = vmatpush.msra.mxu0 %v796
    %870 = vmatpush.msra.mxu0 %v792
    %871 = vmatpush.msra.mxu0 %v788
    %872 = vmatpush.msra.mxu0 %v784
    %873 = vmatpush.msra.mxu0 %v780
    %874 = vmatpush.msra.mxu0 %v776
    %875 = vmatmul.f32.gmra.mxu0 %v768
    %v876 = vpop.f32.mrf.mxu0
    %v877 = vadd.f32 0.0, %v876
    %878 = vdwg.mxu0
    %879 = vmatpush.msra.mxu0 %v837
    %880 = vmatpush.msra.mxu0 %v833
    %881 = vmatpush.msra.mxu0 %v829
    %882 = vmatpush.msra.mxu0 %v825
    %883 = vmatpush.msra.mxu0 %v821
    %884 = vmatpush.msra.mxu0 %v817
    %885 = vmatpush.msra.mxu0 %v813
    %886 = vmatpush.msra.mxu0 %v809
    %887 = vmatpush.msra.mxu0 %v805
    %888 = vmatpush.msra.mxu0 %v801
    %889 = vmatpush.msra.mxu0 %v797
    %890 = vmatpush.msra.mxu0 %v793
    %891 = vmatpush.msra.mxu0 %v789
    %892 = vmatpush.msra.mxu0 %v785
    %893 = vmatpush.msra.mxu0 %v781
    %894 = vmatpush.msra.mxu0 %v777
    %895 = vmatmul.f32.gmra.mxu0 %v768
    %v896 = vpop.f32.mrf.mxu0
    %v897 = vadd.f32 0.0, %v896
    %898 = vdwg.mxu0
    %899 = vmatpush.msra.mxu0 %v838
    %900 = vmatpush.msra.mxu0 %v834
    %901 = vmatpush.msra.mxu0 %v830
    %902 = vmatpush.msra.mxu0 %v826
    %903 = vmatpush.msra.mxu0 %v822
    %904 = vmatpush.msra.mxu0 %v818
    %905 = vmatpush.msra.mxu0 %v814
    %906 = vmatpush.msra.mxu0 %v810
    %907 = vmatpush.msra.mxu0 %v806
    %908 = vmatpush.msra.mxu0 %v802
    %909 = vmatpush.msra.mxu0 %v798
    %910 = vmatpush.msra.mxu0 %v794
    %911 = vmatpush.msra.mxu0 %v790
    %912 = vmatpush.msra.mxu0 %v786
    %913 = vmatpush.msra.mxu0 %v782
    %914 = vmatpush.msra.mxu0 %v778
    %915 = vmatmul.f32.gmra.mxu0 %v768
    %v916 = vpop.f32.mrf.mxu0
    %v917 = vadd.f32 0.0, %v916
    %918 = vdwg.mxu0
    %v919 = vadd.f32 %v771, %v857
    %v920 = vadd.f32 %v772, %v877
    %v921 = vadd.f32 %v773, %v897
    %v922 = vadd.f32 %v774, %v917
    %v923 = vxor.u32 %v919, 2147483648
    %v924 = vmul.f32 %v923, 1.442695
    %v925 = vpow.pop %v924
    %v926 = vadd.f32 %v925, 1.0
    %v927 = vrcp.pop %v926
    %v928 = vmul.f32 %v926, %v927
    %v929 = vsub.f32 1.0, %v928
    %v930 = vmul.f32 %v927, %v929
    %v931 = vadd.f32 %v927, %v930
    %vm932 = vweird.f32 %v926
    %vm933 = vweird.f32 %v927
    %vm934 = vmor %vm932, %vm933
    %v935 = vsel %vm934, %v927, %v931
    %v936 = vand.u32 2147483647, %v926
    %vm937 = vcmp.eq.f32.partialorder %v936, 8.507059e+37
    %v938 = vand.u32 %v926, 2147483648
    %v939 = vor.u32 1.1754944e-38, %v938
    %v940 = vsel %vm937, %v939, %v935
    %v941 = vmul.f32 1.0, %v940
    %v942 = vxor.u32 %v920, 2147483648
    %v943 = vmul.f32 %v942, 1.442695
    %v944 = vpow.pop %v943
    %v945 = vadd.f32 %v944, 1.0
    %v946 = vrcp.pop %v945
    %v947 = vmul.f32 %v945, %v946
    %v948 = vsub.f32 1.0, %v947
    %v949 = vmul.f32 %v946, %v948
    %v950 = vadd.f32 %v946, %v949
    %vm951 = vweird.f32 %v945
    %vm952 = vweird.f32 %v946
    %vm953 = vmor %vm951, %vm952
    %v954 = vsel %vm953, %v946, %v950
    %v955 = vand.u32 2147483647, %v945
    %vm956 = vcmp.eq.f32.partialorder %v955, 8.507059e+37
    %v957 = vand.u32 %v945, 2147483648
    %v958 = vor.u32 1.1754944e-38, %v957
    %v959 = vsel %vm956, %v958, %v954
    %v960 = vmul.f32 1.0, %v959
    %v961 = vtanh.pop %v921
    %v962 = vxor.u32 %v922, 2147483648
    %v963 = vmul.f32 %v962, 1.442695
    %v964 = vpow.pop %v963
    %v965 = vadd.f32 %v964, 1.0
    %v966 = vrcp.pop %v965
    %v967 = vmul.f32 %v965, %v966
    %v968 = vsub.f32 1.0, %v967
    %v969 = vmul.f32 %v966, %v968
    %v970 = vadd.f32 %v966, %v969
    %vm971 = vweird.f32 %v965
    %vm972 = vweird.f32 %v966
    %vm973 = vmor %vm971, %vm972
    %v974 = vsel %vm973, %v966, %v970
    %v975 = vand.u32 2147483647, %v965
    %vm976 = vcmp.eq.f32.partialorder %v975, 8.507059e+37
    %v977 = vand.u32 %v965, 2147483648
    %v978 = vor.u32 1.1754944e-38, %v977
    %v979 = vsel %vm976, %v978, %v974
    %v980 = vmul.f32 1.0, %v979
    %v981 = vmul.f32 %v960, %v766
    %v982 = vmul.f32 %v941, %v961
    %v983 = vadd.f32 %v981, %v982
    %v984 = vtanh.pop %v983
    %v985 = vmul.f32 %v980, %v984
    %s986 = scalar_lea.vmem %s4, 16
    %987 = vst [vmem:[%s986] sm:$0xff] %v985
    %v988 = vld [vmem:[#allocation4 + $0x60] sm:$0xff]
    %v989 = vld [vmem:[#allocation4 + $0x68] sm:$0xff]
    %v990 = vld [vmem:[#allocation4 + $0x70] sm:$0xff]
    %v991 = vld [vmem:[#allocation4 + $0x78] sm:$0xff]
    %v992 = vld [vmem:[#allocation7] sm:$0xff]
    %v993 = vld [vmem:[#allocation7 + $0x8] sm:$0xff]
    %v994 = vld [vmem:[#allocation7 + $0x10] sm:$0xff]
    %v995 = vld [vmem:[#allocation7 + $0x18] sm:$0xff]
    %v996 = vld [vmem:[#allocation7 + $0x20] sm:$0xff]
    %v997 = vld [vmem:[#allocation7 + $0x28] sm:$0xff]
    %v998 = vld [vmem:[#allocation7 + $0x30] sm:$0xff]
    %v999 = vld [vmem:[#allocation7 + $0x38] sm:$0xff]
    %v1000 = vld [vmem:[#allocation7 + $0x40] sm:$0xff]
    %v1001 = vld [vmem:[#allocation7 + $0x48] sm:$0xff]
    %v1002 = vld [vmem:[#allocation7 + $0x50] sm:$0xff]
    %v1003 = vld [vmem:[#allocation7 + $0x58] sm:$0xff]
    %v1004 = vld [vmem:[#allocation7 + $0x60] sm:$0xff]
    %v1005 = vld [vmem:[#allocation7 + $0x68] sm:$0xff]
    %v1006 = vld [vmem:[#allocation7 + $0x70] sm:$0xff]
    %v1007 = vld [vmem:[#allocation7 + $0x78] sm:$0xff]
    %v1008 = vld [vmem:[#allocation7 + $0x80] sm:$0xff]
    %v1009 = vld [vmem:[#allocation7 + $0x88] sm:$0xff]
    %v1010 = vld [vmem:[#allocation7 + $0x90] sm:$0xff]
    %v1011 = vld [vmem:[#allocation7 + $0x98] sm:$0xff]
    %v1012 = vld [vmem:[#allocation7 + $0xa0] sm:$0xff]
    %v1013 = vld [vmem:[#allocation7 + $0xa8] sm:$0xff]
    %v1014 = vld [vmem:[#allocation7 + $0xb0] sm:$0xff]
    %v1015 = vld [vmem:[#allocation7 + $0xb8] sm:$0xff]
    %v1016 = vld [vmem:[#allocation7 + $0xc0] sm:$0xff]
    %v1017 = vld [vmem:[#allocation7 + $0xc8] sm:$0xff]
    %v1018 = vld [vmem:[#allocation7 + $0xd0] sm:$0xff]
    %v1019 = vld [vmem:[#allocation7 + $0xd8] sm:$0xff]
    %v1020 = vld [vmem:[#allocation7 + $0xe0] sm:$0xff]
    %v1021 = vld [vmem:[#allocation7 + $0xe8] sm:$0xff]
    %v1022 = vld [vmem:[#allocation7 + $0xf0] sm:$0xff]
    %v1023 = vld [vmem:[#allocation7 + $0xf8] sm:$0xff]
    %v1024 = vld [vmem:[#allocation7 + $0x100] sm:$0xff]
    %v1025 = vld [vmem:[#allocation7 + $0x108] sm:$0xff]
    %v1026 = vld [vmem:[#allocation7 + $0x110] sm:$0xff]
    %v1027 = vld [vmem:[#allocation7 + $0x118] sm:$0xff]
    %v1028 = vld [vmem:[#allocation7 + $0x120] sm:$0xff]
    %v1029 = vld [vmem:[#allocation7 + $0x128] sm:$0xff]
    %v1030 = vld [vmem:[#allocation7 + $0x130] sm:$0xff]
    %v1031 = vld [vmem:[#allocation7 + $0x138] sm:$0xff]
    %v1032 = vld [vmem:[#allocation7 + $0x140] sm:$0xff]
    %v1033 = vld [vmem:[#allocation7 + $0x148] sm:$0xff]
    %v1034 = vld [vmem:[#allocation7 + $0x150] sm:$0xff]
    %v1035 = vld [vmem:[#allocation7 + $0x158] sm:$0xff]
    %v1036 = vld [vmem:[#allocation7 + $0x160] sm:$0xff]
    %v1037 = vld [vmem:[#allocation7 + $0x168] sm:$0xff]
    %v1038 = vld [vmem:[#allocation7 + $0x170] sm:$0xff]
    %v1039 = vld [vmem:[#allocation7 + $0x178] sm:$0xff]
    %v1040 = vld [vmem:[#allocation7 + $0x180] sm:$0xff]
    %v1041 = vld [vmem:[#allocation7 + $0x188] sm:$0xff]
    %v1042 = vld [vmem:[#allocation7 + $0x190] sm:$0xff]
    %v1043 = vld [vmem:[#allocation7 + $0x198] sm:$0xff]
    %v1044 = vld [vmem:[#allocation7 + $0x1a0] sm:$0xff]
    %v1045 = vld [vmem:[#allocation7 + $0x1a8] sm:$0xff]
    %v1046 = vld [vmem:[#allocation7 + $0x1b0] sm:$0xff]
    %v1047 = vld [vmem:[#allocation7 + $0x1b8] sm:$0xff]
    %v1048 = vld [vmem:[#allocation7 + $0x1c0] sm:$0xff]
    %v1049 = vld [vmem:[#allocation7 + $0x1c8] sm:$0xff]
    %v1050 = vld [vmem:[#allocation7 + $0x1d0] sm:$0xff]
    %v1051 = vld [vmem:[#allocation7 + $0x1d8] sm:$0xff]
    %v1052 = vld [vmem:[#allocation7 + $0x1e0] sm:$0xff]
    %v1053 = vld [vmem:[#allocation7 + $0x1e8] sm:$0xff]
    %v1054 = vld [vmem:[#allocation7 + $0x1f0] sm:$0xff]
    %v1055 = vld [vmem:[#allocation7 + $0x1f8] sm:$0xff]
    %1056 = vmatpush.msra.mxu0 %v1052
    %1057 = vmatpush.msra.mxu0 %v1048
    %1058 = vmatpush.msra.mxu0 %v1044
    %1059 = vmatpush.msra.mxu0 %v1040
    %1060 = vmatpush.msra.mxu0 %v1036
    %1061 = vmatpush.msra.mxu0 %v1032
    %1062 = vmatpush.msra.mxu0 %v1028
    %1063 = vmatpush.msra.mxu0 %v1024
    %1064 = vmatpush.msra.mxu0 %v1020
    %1065 = vmatpush.msra.mxu0 %v1016
    %1066 = vmatpush.msra.mxu0 %v1012
    %1067 = vmatpush.msra.mxu0 %v1008
    %1068 = vmatpush.msra.mxu0 %v1004
    %1069 = vmatpush.msra.mxu0 %v1000
    %1070 = vmatpush.msra.mxu0 %v996
    %1071 = vmatpush.msra.mxu0 %v992
    %1072 = vmatmul.f32.gmra.mxu0 %v985
    %v1073 = vpop.f32.mrf.mxu0
    %v1074 = vadd.f32 0.0, %v1073
    %1075 = vdwg.mxu0
    %1076 = vmatpush.msra.mxu0 %v1053
    %1077 = vmatpush.msra.mxu0 %v1049
    %1078 = vmatpush.msra.mxu0 %v1045
    %1079 = vmatpush.msra.mxu0 %v1041
    %1080 = vmatpush.msra.mxu0 %v1037
    %1081 = vmatpush.msra.mxu0 %v1033
    %1082 = vmatpush.msra.mxu0 %v1029
    %1083 = vmatpush.msra.mxu0 %v1025
    %1084 = vmatpush.msra.mxu0 %v1021
    %1085 = vmatpush.msra.mxu0 %v1017
    %1086 = vmatpush.msra.mxu0 %v1013
    %1087 = vmatpush.msra.mxu0 %v1009
    %1088 = vmatpush.msra.mxu0 %v1005
    %1089 = vmatpush.msra.mxu0 %v1001
    %1090 = vmatpush.msra.mxu0 %v997
    %1091 = vmatpush.msra.mxu0 %v993
    %1092 = vmatmul.f32.gmra.mxu0 %v985
    %v1093 = vpop.f32.mrf.mxu0
    %v1094 = vadd.f32 0.0, %v1093
    %1095 = vdwg.mxu0
    %1096 = vmatpush.msra.mxu0 %v1054
    %1097 = vmatpush.msra.mxu0 %v1050
    %1098 = vmatpush.msra.mxu0 %v1046
    %1099 = vmatpush.msra.mxu0 %v1042
    %1100 = vmatpush.msra.mxu0 %v1038
    %1101 = vmatpush.msra.mxu0 %v1034
    %1102 = vmatpush.msra.mxu0 %v1030
    %1103 = vmatpush.msra.mxu0 %v1026
    %1104 = vmatpush.msra.mxu0 %v1022
    %1105 = vmatpush.msra.mxu0 %v1018
    %1106 = vmatpush.msra.mxu0 %v1014
    %1107 = vmatpush.msra.mxu0 %v1010
    %1108 = vmatpush.msra.mxu0 %v1006
    %1109 = vmatpush.msra.mxu0 %v1002
    %1110 = vmatpush.msra.mxu0 %v998
    %1111 = vmatpush.msra.mxu0 %v994
    %1112 = vmatmul.f32.gmra.mxu0 %v985
    %v1113 = vpop.f32.mrf.mxu0
    %v1114 = vadd.f32 0.0, %v1113
    %1115 = vdwg.mxu0
    %1116 = vmatpush.msra.mxu0 %v1055
    %1117 = vmatpush.msra.mxu0 %v1051
    %1118 = vmatpush.msra.mxu0 %v1047
    %1119 = vmatpush.msra.mxu0 %v1043
    %1120 = vmatpush.msra.mxu0 %v1039
    %1121 = vmatpush.msra.mxu0 %v1035
    %1122 = vmatpush.msra.mxu0 %v1031
    %1123 = vmatpush.msra.mxu0 %v1027
    %1124 = vmatpush.msra.mxu0 %v1023
    %1125 = vmatpush.msra.mxu0 %v1019
    %1126 = vmatpush.msra.mxu0 %v1015
    %1127 = vmatpush.msra.mxu0 %v1011
    %1128 = vmatpush.msra.mxu0 %v1007
    %1129 = vmatpush.msra.mxu0 %v1003
    %1130 = vmatpush.msra.mxu0 %v999
    %1131 = vmatpush.msra.mxu0 %v995
    %1132 = vmatmul.f32.gmra.mxu0 %v985
    %v1133 = vpop.f32.mrf.mxu0
    %v1134 = vadd.f32 0.0, %v1133
    %1135 = vdwg.mxu0
    %v1136 = vadd.f32 %v988, %v1074
    %v1137 = vadd.f32 %v989, %v1094
    %v1138 = vadd.f32 %v990, %v1114
    %v1139 = vadd.f32 %v991, %v1134
    %v1140 = vxor.u32 %v1136, 2147483648
    %v1141 = vmul.f32 %v1140, 1.442695
    %v1142 = vpow.pop %v1141
    %v1143 = vadd.f32 %v1142, 1.0
    %v1144 = vrcp.pop %v1143
    %v1145 = vmul.f32 %v1143, %v1144
    %v1146 = vsub.f32 1.0, %v1145
    %v1147 = vmul.f32 %v1144, %v1146
    %v1148 = vadd.f32 %v1144, %v1147
    %vm1149 = vweird.f32 %v1143
    %vm1150 = vweird.f32 %v1144
    %vm1151 = vmor %vm1149, %vm1150
    %v1152 = vsel %vm1151, %v1144, %v1148
    %v1153 = vand.u32 2147483647, %v1143
    %vm1154 = vcmp.eq.f32.partialorder %v1153, 8.507059e+37
    %v1155 = vand.u32 %v1143, 2147483648
    %v1156 = vor.u32 1.1754944e-38, %v1155
    %v1157 = vsel %vm1154, %v1156, %v1152
    %v1158 = vmul.f32 1.0, %v1157
    %v1159 = vxor.u32 %v1137, 2147483648
    %v1160 = vmul.f32 %v1159, 1.442695
    %v1161 = vpow.pop %v1160
    %v1162 = vadd.f32 %v1161, 1.0
    %v1163 = vrcp.pop %v1162
    %v1164 = vmul.f32 %v1162, %v1163
    %v1165 = vsub.f32 1.0, %v1164
    %v1166 = vmul.f32 %v1163, %v1165
    %v1167 = vadd.f32 %v1163, %v1166
    %vm1168 = vweird.f32 %v1162
    %vm1169 = vweird.f32 %v1163
    %vm1170 = vmor %vm1168, %vm1169
    %v1171 = vsel %vm1170, %v1163, %v1167
    %v1172 = vand.u32 2147483647, %v1162
    %vm1173 = vcmp.eq.f32.partialorder %v1172, 8.507059e+37
    %v1174 = vand.u32 %v1162, 2147483648
    %v1175 = vor.u32 1.1754944e-38, %v1174
    %v1176 = vsel %vm1173, %v1175, %v1171
    %v1177 = vmul.f32 1.0, %v1176
    %v1178 = vtanh.pop %v1138
    %v1179 = vxor.u32 %v1139, 2147483648
    %v1180 = vmul.f32 %v1179, 1.442695
    %v1181 = vpow.pop %v1180
    %v1182 = vadd.f32 %v1181, 1.0
    %v1183 = vrcp.pop %v1182
    %v1184 = vmul.f32 %v1182, %v1183
    %v1185 = vsub.f32 1.0, %v1184
    %v1186 = vmul.f32 %v1183, %v1185
    %v1187 = vadd.f32 %v1183, %v1186
    %vm1188 = vweird.f32 %v1182
    %vm1189 = vweird.f32 %v1183
    %vm1190 = vmor %vm1188, %vm1189
    %v1191 = vsel %vm1190, %v1183, %v1187
    %v1192 = vand.u32 2147483647, %v1182
    %vm1193 = vcmp.eq.f32.partialorder %v1192, 8.507059e+37
    %v1194 = vand.u32 %v1182, 2147483648
    %v1195 = vor.u32 1.1754944e-38, %v1194
    %v1196 = vsel %vm1193, %v1195, %v1191
    %v1197 = vmul.f32 1.0, %v1196
    %v1198 = vmul.f32 %v1177, %v983
    %v1199 = vmul.f32 %v1158, %v1178
    %v1200 = vadd.f32 %v1198, %v1199
    %v1201 = vtanh.pop %v1200
    %v1202 = vmul.f32 %v1197, %v1201
    %s1203 = scalar_lea.vmem %s4, 24
    %1204 = vst [vmem:[%s1203] sm:$0xff] %v1202
    %v1205 = vld [vmem:[#allocation4 + $0x80] sm:$0xff]
    %v1206 = vld [vmem:[#allocation4 + $0x88] sm:$0xff]
    %v1207 = vld [vmem:[#allocation4 + $0x90] sm:$0xff]
    %v1208 = vld [vmem:[#allocation4 + $0x98] sm:$0xff]
    %v1209 = vld [vmem:[#allocation7] sm:$0xff]
    %v1210 = vld [vmem:[#allocation7 + $0x8] sm:$0xff]
    %v1211 = vld [vmem:[#allocation7 + $0x10] sm:$0xff]
    %v1212 = vld [vmem:[#allocation7 + $0x18] sm:$0xff]
    %v1213 = vld [vmem:[#allocation7 + $0x20] sm:$0xff]
    %v1214 = vld [vmem:[#allocation7 + $0x28] sm:$0xff]
    %v1215 = vld [vmem:[#allocation7 + $0x30] sm:$0xff]
    %v1216 = vld [vmem:[#allocation7 + $0x38] sm:$0xff]
    %v1217 = vld [vmem:[#allocation7 + $0x40] sm:$0xff]
    %v1218 = vld [vmem:[#allocation7 + $0x48] sm:$0xff]
    %v1219 = vld [vmem:[#allocation7 + $0x50] sm:$0xff]
    %v1220 = vld [vmem:[#allocation7 + $0x58] sm:$0xff]
    %v1221 = vld [vmem:[#allocation7 + $0x60] sm:$0xff]
    %v1222 = vld [vmem:[#allocation7 + $0x68] sm:$0xff]
    %v1223 = vld [vmem:[#allocation7 + $0x70] sm:$0xff]
    %v1224 = vld [vmem:[#allocation7 + $0x78] sm:$0xff]
    %v1225 = vld [vmem:[#allocation7 + $0x80] sm:$0xff]
    %v1226 = vld [vmem:[#allocation7 + $0x88] sm:$0xff]
    %v1227 = vld [vmem:[#allocation7 + $0x90] sm:$0xff]
    %v1228 = vld [vmem:[#allocation7 + $0x98] sm:$0xff]
    %v1229 = vld [vmem:[#allocation7 + $0xa0] sm:$0xff]
    %v1230 = vld [vmem:[#allocation7 + $0xa8] sm:$0xff]
    %v1231 = vld [vmem:[#allocation7 + $0xb0] sm:$0xff]
    %v1232 = vld [vmem:[#allocation7 + $0xb8] sm:$0xff]
    %v1233 = vld [vmem:[#allocation7 + $0xc0] sm:$0xff]
    %v1234 = vld [vmem:[#allocation7 + $0xc8] sm:$0xff]
    %v1235 = vld [vmem:[#allocation7 + $0xd0] sm:$0xff]
    %v1236 = vld [vmem:[#allocation7 + $0xd8] sm:$0xff]
    %v1237 = vld [vmem:[#allocation7 + $0xe0] sm:$0xff]
    %v1238 = vld [vmem:[#allocation7 + $0xe8] sm:$0xff]
    %v1239 = vld [vmem:[#allocation7 + $0xf0] sm:$0xff]
    %v1240 = vld [vmem:[#allocation7 + $0xf8] sm:$0xff]
    %v1241 = vld [vmem:[#allocation7 + $0x100] sm:$0xff]
    %v1242 = vld [vmem:[#allocation7 + $0x108] sm:$0xff]
    %v1243 = vld [vmem:[#allocation7 + $0x110] sm:$0xff]
    %v1244 = vld [vmem:[#allocation7 + $0x118] sm:$0xff]
    %v1245 = vld [vmem:[#allocation7 + $0x120] sm:$0xff]
    %v1246 = vld [vmem:[#allocation7 + $0x128] sm:$0xff]
    %v1247 = vld [vmem:[#allocation7 + $0x130] sm:$0xff]
    %v1248 = vld [vmem:[#allocation7 + $0x138] sm:$0xff]
    %v1249 = vld [vmem:[#allocation7 + $0x140] sm:$0xff]
    %v1250 = vld [vmem:[#allocation7 + $0x148] sm:$0xff]
    %v1251 = vld [vmem:[#allocation7 + $0x150] sm:$0xff]
    %v1252 = vld [vmem:[#allocation7 + $0x158] sm:$0xff]
    %v1253 = vld [vmem:[#allocation7 + $0x160] sm:$0xff]
    %v1254 = vld [vmem:[#allocation7 + $0x168] sm:$0xff]
    %v1255 = vld [vmem:[#allocation7 + $0x170] sm:$0xff]
    %v1256 = vld [vmem:[#allocation7 + $0x178] sm:$0xff]
    %v1257 = vld [vmem:[#allocation7 + $0x180] sm:$0xff]
    %v1258 = vld [vmem:[#allocation7 + $0x188] sm:$0xff]
    %v1259 = vld [vmem:[#allocation7 + $0x190] sm:$0xff]
    %v1260 = vld [vmem:[#allocation7 + $0x198] sm:$0xff]
    %v1261 = vld [vmem:[#allocation7 + $0x1a0] sm:$0xff]
    %v1262 = vld [vmem:[#allocation7 + $0x1a8] sm:$0xff]
    %v1263 = vld [vmem:[#allocation7 + $0x1b0] sm:$0xff]
    %v1264 = vld [vmem:[#allocation7 + $0x1b8] sm:$0xff]
    %v1265 = vld [vmem:[#allocation7 + $0x1c0] sm:$0xff]
    %v1266 = vld [vmem:[#allocation7 + $0x1c8] sm:$0xff]
    %v1267 = vld [vmem:[#allocation7 + $0x1d0] sm:$0xff]
    %v1268 = vld [vmem:[#allocation7 + $0x1d8] sm:$0xff]
    %v1269 = vld [vmem:[#allocation7 + $0x1e0] sm:$0xff]
    %v1270 = vld [vmem:[#allocation7 + $0x1e8] sm:$0xff]
    %v1271 = vld [vmem:[#allocation7 + $0x1f0] sm:$0xff]
    %v1272 = vld [vmem:[#allocation7 + $0x1f8] sm:$0xff]
    %1273 = vmatpush.msra.mxu0 %v1269
    %1274 = vmatpush.msra.mxu0 %v1265
    %1275 = vmatpush.msra.mxu0 %v1261
    %1276 = vmatpush.msra.mxu0 %v1257
    %1277 = vmatpush.msra.mxu0 %v1253
    %1278 = vmatpush.msra.mxu0 %v1249
    %1279 = vmatpush.msra.mxu0 %v1245
    %1280 = vmatpush.msra.mxu0 %v1241
    %1281 = vmatpush.msra.mxu0 %v1237
    %1282 = vmatpush.msra.mxu0 %v1233
    %1283 = vmatpush.msra.mxu0 %v1229
    %1284 = vmatpush.msra.mxu0 %v1225
    %1285 = vmatpush.msra.mxu0 %v1221
    %1286 = vmatpush.msra.mxu0 %v1217
    %1287 = vmatpush.msra.mxu0 %v1213
    %1288 = vmatpush.msra.mxu0 %v1209
    %1289 = vmatmul.f32.gmra.mxu0 %v1202
    %v1290 = vpop.f32.mrf.mxu0
    %v1291 = vadd.f32 0.0, %v1290
    %1292 = vdwg.mxu0
    %1293 = vmatpush.msra.mxu0 %v1270
    %1294 = vmatpush.msra.mxu0 %v1266
    %1295 = vmatpush.msra.mxu0 %v1262
    %1296 = vmatpush.msra.mxu0 %v1258
    %1297 = vmatpush.msra.mxu0 %v1254
    %1298 = vmatpush.msra.mxu0 %v1250
    %1299 = vmatpush.msra.mxu0 %v1246
    %1300 = vmatpush.msra.mxu0 %v1242
    %1301 = vmatpush.msra.mxu0 %v1238
    %1302 = vmatpush.msra.mxu0 %v1234
    %1303 = vmatpush.msra.mxu0 %v1230
    %1304 = vmatpush.msra.mxu0 %v1226
    %1305 = vmatpush.msra.mxu0 %v1222
    %1306 = vmatpush.msra.mxu0 %v1218
    %1307 = vmatpush.msra.mxu0 %v1214
    %1308 = vmatpush.msra.mxu0 %v1210
    %1309 = vmatmul.f32.gmra.mxu0 %v1202
    %v1310 = vpop.f32.mrf.mxu0
    %v1311 = vadd.f32 0.0, %v1310
    %1312 = vdwg.mxu0
    %1313 = vmatpush.msra.mxu0 %v1271
    %1314 = vmatpush.msra.mxu0 %v1267
    %1315 = vmatpush.msra.mxu0 %v1263
    %1316 = vmatpush.msra.mxu0 %v1259
    %1317 = vmatpush.msra.mxu0 %v1255
    %1318 = vmatpush.msra.mxu0 %v1251
    %1319 = vmatpush.msra.mxu0 %v1247
    %1320 = vmatpush.msra.mxu0 %v1243
    %1321 = vmatpush.msra.mxu0 %v1239
    %1322 = vmatpush.msra.mxu0 %v1235
    %1323 = vmatpush.msra.mxu0 %v1231
    %1324 = vmatpush.msra.mxu0 %v1227
    %1325 = vmatpush.msra.mxu0 %v1223
    %1326 = vmatpush.msra.mxu0 %v1219
    %1327 = vmatpush.msra.mxu0 %v1215
    %1328 = vmatpush.msra.mxu0 %v1211
    %1329 = vmatmul.f32.gmra.mxu0 %v1202
    %v1330 = vpop.f32.mrf.mxu0
    %v1331 = vadd.f32 0.0, %v1330
    %1332 = vdwg.mxu0
    %1333 = vmatpush.msra.mxu0 %v1272
    %1334 = vmatpush.msra.mxu0 %v1268
    %1335 = vmatpush.msra.mxu0 %v1264
    %1336 = vmatpush.msra.mxu0 %v1260
    %1337 = vmatpush.msra.mxu0 %v1256
    %1338 = vmatpush.msra.mxu0 %v1252
    %1339 = vmatpush.msra.mxu0 %v1248
    %1340 = vmatpush.msra.mxu0 %v1244
    %1341 = vmatpush.msra.mxu0 %v1240
    %1342 = vmatpush.msra.mxu0 %v1236
    %1343 = vmatpush.msra.mxu0 %v1232
    %1344 = vmatpush.msra.mxu0 %v1228
    %1345 = vmatpush.msra.mxu0 %v1224
    %1346 = vmatpush.msra.mxu0 %v1220
    %1347 = vmatpush.msra.mxu0 %v1216
    %1348 = vmatpush.msra.mxu0 %v1212
    %1349 = vmatmul.f32.gmra.mxu0 %v1202
    %v1350 = vpop.f32.mrf.mxu0
    %v1351 = vadd.f32 0.0, %v1350
    %1352 = vdwg.mxu0
    %v1353 = vadd.f32 %v1205, %v1291
    %v1354 = vadd.f32 %v1206, %v1311
    %v1355 = vadd.f32 %v1207, %v1331
    %v1356 = vadd.f32 %v1208, %v1351
    %v1357 = vxor.u32 %v1353, 2147483648
    %v1358 = vmul.f32 %v1357, 1.442695
    %v1359 = vpow.pop %v1358
    %v1360 = vadd.f32 %v1359, 1.0
    %v1361 = vrcp.pop %v1360
    %v1362 = vmul.f32 %v1360, %v1361
    %v1363 = vsub.f32 1.0, %v1362
    %v1364 = vmul.f32 %v1361, %v1363
    %v1365 = vadd.f32 %v1361, %v1364
    %vm1366 = vweird.f32 %v1360
    %vm1367 = vweird.f32 %v1361
    %vm1368 = vmor %vm1366, %vm1367
    %v1369 = vsel %vm1368, %v1361, %v1365
    %v1370 = vand.u32 2147483647, %v1360
    %vm1371 = vcmp.eq.f32.partialorder %v1370, 8.507059e+37
    %v1372 = vand.u32 %v1360, 2147483648
    %v1373 = vor.u32 1.1754944e-38, %v1372
    %v1374 = vsel %vm1371, %v1373, %v1369
    %v1375 = vmul.f32 1.0, %v1374
    %v1376 = vxor.u32 %v1354, 2147483648
    %v1377 = vmul.f32 %v1376, 1.442695
    %v1378 = vpow.pop %v1377
    %v1379 = vadd.f32 %v1378, 1.0
    %v1380 = vrcp.pop %v1379
    %v1381 = vmul.f32 %v1379, %v1380
    %v1382 = vsub.f32 1.0, %v1381
    %v1383 = vmul.f32 %v1380, %v1382
    %v1384 = vadd.f32 %v1380, %v1383
    %vm1385 = vweird.f32 %v1379
    %vm1386 = vweird.f32 %v1380
    %vm1387 = vmor %vm1385, %vm1386
    %v1388 = vsel %vm1387, %v1380, %v1384
    %v1389 = vand.u32 2147483647, %v1379
    %vm1390 = vcmp.eq.f32.partialorder %v1389, 8.507059e+37
    %v1391 = vand.u32 %v1379, 2147483648
    %v1392 = vor.u32 1.1754944e-38, %v1391
    %v1393 = vsel %vm1390, %v1392, %v1388
    %v1394 = vmul.f32 1.0, %v1393
    %v1395 = vtanh.pop %v1355
    %v1396 = vxor.u32 %v1356, 2147483648
    %v1397 = vmul.f32 %v1396, 1.442695
    %v1398 = vpow.pop %v1397
    %v1399 = vadd.f32 %v1398, 1.0
    %v1400 = vrcp.pop %v1399
    %v1401 = vmul.f32 %v1399, %v1400
    %v1402 = vsub.f32 1.0, %v1401
    %v1403 = vmul.f32 %v1400, %v1402
    %v1404 = vadd.f32 %v1400, %v1403
    %vm1405 = vweird.f32 %v1399
    %vm1406 = vweird.f32 %v1400
    %vm1407 = vmor %vm1405, %vm1406
    %v1408 = vsel %vm1407, %v1400, %v1404
    %v1409 = vand.u32 2147483647, %v1399
    %vm1410 = vcmp.eq.f32.partialorder %v1409, 8.507059e+37
    %v1411 = vand.u32 %v1399, 2147483648
    %v1412 = vor.u32 1.1754944e-38, %v1411
    %v1413 = vsel %vm1410, %v1412, %v1408
    %v1414 = vmul.f32 1.0, %v1413
    %v1415 = vmul.f32 %v1394, %v1200
    %v1416 = vmul.f32 %v1375, %v1395
    %v1417 = vadd.f32 %v1415, %v1416
    %v1418 = vtanh.pop %v1417
    %v1419 = vmul.f32 %v1414, %v1418
    %s1420 = scalar_lea.vmem %s4, 32
    %1421 = vst [vmem:[%s1420] sm:$0xff] %v1419
    %v1422 = vld [vmem:[#allocation4 + $0xa0] sm:$0xff]
    %v1423 = vld [vmem:[#allocation4 + $0xa8] sm:$0xff]
    %v1424 = vld [vmem:[#allocation4 + $0xb0] sm:$0xff]
    %v1425 = vld [vmem:[#allocation4 + $0xb8] sm:$0xff]
    %v1426 = vld [vmem:[#allocation7] sm:$0xff]
    %v1427 = vld [vmem:[#allocation7 + $0x8] sm:$0xff]
    %v1428 = vld [vmem:[#allocation7 + $0x10] sm:$0xff]
    %v1429 = vld [vmem:[#allocation7 + $0x18] sm:$0xff]
    %v1430 = vld [vmem:[#allocation7 + $0x20] sm:$0xff]
    %v1431 = vld [vmem:[#allocation7 + $0x28] sm:$0xff]
    %v1432 = vld [vmem:[#allocation7 + $0x30] sm:$0xff]
    %v1433 = vld [vmem:[#allocation7 + $0x38] sm:$0xff]
    %v1434 = vld [vmem:[#allocation7 + $0x40] sm:$0xff]
    %v1435 = vld [vmem:[#allocation7 + $0x48] sm:$0xff]
    %v1436 = vld [vmem:[#allocation7 + $0x50] sm:$0xff]
    %v1437 = vld [vmem:[#allocation7 + $0x58] sm:$0xff]
    %v1438 = vld [vmem:[#allocation7 + $0x60] sm:$0xff]
    %v1439 = vld [vmem:[#allocation7 + $0x68] sm:$0xff]
    %v1440 = vld [vmem:[#allocation7 + $0x70] sm:$0xff]
    %v1441 = vld [vmem:[#allocation7 + $0x78] sm:$0xff]
    %v1442 = vld [vmem:[#allocation7 + $0x80] sm:$0xff]
    %v1443 = vld [vmem:[#allocation7 + $0x88] sm:$0xff]
    %v1444 = vld [vmem:[#allocation7 + $0x90] sm:$0xff]
    %v1445 = vld [vmem:[#allocation7 + $0x98] sm:$0xff]
    %v1446 = vld [vmem:[#allocation7 + $0xa0] sm:$0xff]
    %v1447 = vld [vmem:[#allocation7 + $0xa8] sm:$0xff]
    %v1448 = vld [vmem:[#allocation7 + $0xb0] sm:$0xff]
    %v1449 = vld [vmem:[#allocation7 + $0xb8] sm:$0xff]
    %v1450 = vld [vmem:[#allocation7 + $0xc0] sm:$0xff]
    %v1451 = vld [vmem:[#allocation7 + $0xc8] sm:$0xff]
    %v1452 = vld [vmem:[#allocation7 + $0xd0] sm:$0xff]
    %v1453 = vld [vmem:[#allocation7 + $0xd8] sm:$0xff]
    %v1454 = vld [vmem:[#allocation7 + $0xe0] sm:$0xff]
    %v1455 = vld [vmem:[#allocation7 + $0xe8] sm:$0xff]
    %v1456 = vld [vmem:[#allocation7 + $0xf0] sm:$0xff]
    %v1457 = vld [vmem:[#allocation7 + $0xf8] sm:$0xff]
    %v1458 = vld [vmem:[#allocation7 + $0x100] sm:$0xff]
    %v1459 = vld [vmem:[#allocation7 + $0x108] sm:$0xff]
    %v1460 = vld [vmem:[#allocation7 + $0x110] sm:$0xff]
    %v1461 = vld [vmem:[#allocation7 + $0x118] sm:$0xff]
    %v1462 = vld [vmem:[#allocation7 + $0x120] sm:$0xff]
    %v1463 = vld [vmem:[#allocation7 + $0x128] sm:$0xff]
    %v1464 = vld [vmem:[#allocation7 + $0x130] sm:$0xff]
    %v1465 = vld [vmem:[#allocation7 + $0x138] sm:$0xff]
    %v1466 = vld [vmem:[#allocation7 + $0x140] sm:$0xff]
    %v1467 = vld [vmem:[#allocation7 + $0x148] sm:$0xff]
    %v1468 = vld [vmem:[#allocation7 + $0x150] sm:$0xff]
    %v1469 = vld [vmem:[#allocation7 + $0x158] sm:$0xff]
    %v1470 = vld [vmem:[#allocation7 + $0x160] sm:$0xff]
    %v1471 = vld [vmem:[#allocation7 + $0x168] sm:$0xff]
    %v1472 = vld [vmem:[#allocation7 + $0x170] sm:$0xff]
    %v1473 = vld [vmem:[#allocation7 + $0x178] sm:$0xff]
    %v1474 = vld [vmem:[#allocation7 + $0x180] sm:$0xff]
    %v1475 = vld [vmem:[#allocation7 + $0x188] sm:$0xff]
    %v1476 = vld [vmem:[#allocation7 + $0x190] sm:$0xff]
    %v1477 = vld [vmem:[#allocation7 + $0x198] sm:$0xff]
    %v1478 = vld [vmem:[#allocation7 + $0x1a0] sm:$0xff]
    %v1479 = vld [vmem:[#allocation7 + $0x1a8] sm:$0xff]
    %v1480 = vld [vmem:[#allocation7 + $0x1b0] sm:$0xff]
    %v1481 = vld [vmem:[#allocation7 + $0x1b8] sm:$0xff]
    %v1482 = vld [vmem:[#allocation7 + $0x1c0] sm:$0xff]
    %v1483 = vld [vmem:[#allocation7 + $0x1c8] sm:$0xff]
    %v1484 = vld [vmem:[#allocation7 + $0x1d0] sm:$0xff]
    %v1485 = vld [vmem:[#allocation7 + $0x1d8] sm:$0xff]
    %v1486 = vld [vmem:[#allocation7 + $0x1e0] sm:$0xff]
    %v1487 = vld [vmem:[#allocation7 + $0x1e8] sm:$0xff]
    %v1488 = vld [vmem:[#allocation7 + $0x1f0] sm:$0xff]
    %v1489 = vld [vmem:[#allocation7 + $0x1f8] sm:$0xff]
    %1490 = vmatpush.msra.mxu0 %v1486
    %1491 = vmatpush.msra.mxu0 %v1482
    %1492 = vmatpush.msra.mxu0 %v1478
    %1493 = vmatpush.msra.mxu0 %v1474
    %1494 = vmatpush.msra.mxu0 %v1470
    %1495 = vmatpush.msra.mxu0 %v1466
    %1496 = vmatpush.msra.mxu0 %v1462
    %1497 = vmatpush.msra.mxu0 %v1458
    %1498 = vmatpush.msra.mxu0 %v1454
    %1499 = vmatpush.msra.mxu0 %v1450
    %1500 = vmatpush.msra.mxu0 %v1446
    %1501 = vmatpush.msra.mxu0 %v1442
    %1502 = vmatpush.msra.mxu0 %v1438
    %1503 = vmatpush.msra.mxu0 %v1434
    %1504 = vmatpush.msra.mxu0 %v1430
    %1505 = vmatpush.msra.mxu0 %v1426
    %1506 = vmatmul.f32.gmra.mxu0 %v1419
    %v1507 = vpop.f32.mrf.mxu0
    %v1508 = vadd.f32 0.0, %v1507
    %1509 = vdwg.mxu0
    %1510 = vmatpush.msra.mxu0 %v1487
    %1511 = vmatpush.msra.mxu0 %v1483
    %1512 = vmatpush.msra.mxu0 %v1479
    %1513 = vmatpush.msra.mxu0 %v1475
    %1514 = vmatpush.msra.mxu0 %v1471
    %1515 = vmatpush.msra.mxu0 %v1467
    %1516 = vmatpush.msra.mxu0 %v1463
    %1517 = vmatpush.msra.mxu0 %v1459
    %1518 = vmatpush.msra.mxu0 %v1455
    %1519 = vmatpush.msra.mxu0 %v1451
    %1520 = vmatpush.msra.mxu0 %v1447
    %1521 = vmatpush.msra.mxu0 %v1443
    %1522 = vmatpush.msra.mxu0 %v1439
    %1523 = vmatpush.msra.mxu0 %v1435
    %1524 = vmatpush.msra.mxu0 %v1431
    %1525 = vmatpush.msra.mxu0 %v1427
    %1526 = vmatmul.f32.gmra.mxu0 %v1419
    %v1527 = vpop.f32.mrf.mxu0
    %v1528 = vadd.f32 0.0, %v1527
    %1529 = vdwg.mxu0
    %1530 = vmatpush.msra.mxu0 %v1488
    %1531 = vmatpush.msra.mxu0 %v1484
    %1532 = vmatpush.msra.mxu0 %v1480
    %1533 = vmatpush.msra.mxu0 %v1476
    %1534 = vmatpush.msra.mxu0 %v1472
    %1535 = vmatpush.msra.mxu0 %v1468
    %1536 = vmatpush.msra.mxu0 %v1464
    %1537 = vmatpush.msra.mxu0 %v1460
    %1538 = vmatpush.msra.mxu0 %v1456
    %1539 = vmatpush.msra.mxu0 %v1452
    %1540 = vmatpush.msra.mxu0 %v1448
    %1541 = vmatpush.msra.mxu0 %v1444
    %1542 = vmatpush.msra.mxu0 %v1440
    %1543 = vmatpush.msra.mxu0 %v1436
    %1544 = vmatpush.msra.mxu0 %v1432
    %1545 = vmatpush.msra.mxu0 %v1428
    %1546 = vmatmul.f32.gmra.mxu0 %v1419
    %v1547 = vpop.f32.mrf.mxu0
    %v1548 = vadd.f32 0.0, %v1547
    %1549 = vdwg.mxu0
    %1550 = vmatpush.msra.mxu0 %v1489
    %1551 = vmatpush.msra.mxu0 %v1485
    %1552 = vmatpush.msra.mxu0 %v1481
    %1553 = vmatpush.msra.mxu0 %v1477
    %1554 = vmatpush.msra.mxu0 %v1473
    %1555 = vmatpush.msra.mxu0 %v1469
    %1556 = vmatpush.msra.mxu0 %v1465
    %1557 = vmatpush.msra.mxu0 %v1461
    %1558 = vmatpush.msra.mxu0 %v1457
    %1559 = vmatpush.msra.mxu0 %v1453
    %1560 = vmatpush.msra.mxu0 %v1449
    %1561 = vmatpush.msra.mxu0 %v1445
    %1562 = vmatpush.msra.mxu0 %v1441
    %1563 = vmatpush.msra.mxu0 %v1437
    %1564 = vmatpush.msra.mxu0 %v1433
    %1565 = vmatpush.msra.mxu0 %v1429
    %1566 = vmatmul.f32.gmra.mxu0 %v1419
    %v1567 = vpop.f32.mrf.mxu0
    %v1568 = vadd.f32 0.0, %v1567
    %1569 = vdwg.mxu0
    %v1570 = vadd.f32 %v1422, %v1508
    %v1571 = vadd.f32 %v1423, %v1528
    %v1572 = vadd.f32 %v1424, %v1548
    %v1573 = vadd.f32 %v1425, %v1568
    %v1574 = vxor.u32 %v1570, 2147483648
    %v1575 = vmul.f32 %v1574, 1.442695
    %v1576 = vpow.pop %v1575
    %v1577 = vadd.f32 %v1576, 1.0
    %v1578 = vrcp.pop %v1577
    %v1579 = vmul.f32 %v1577, %v1578
    %v1580 = vsub.f32 1.0, %v1579
    %v1581 = vmul.f32 %v1578, %v1580
    %v1582 = vadd.f32 %v1578, %v1581
    %vm1583 = vweird.f32 %v1577
    %vm1584 = vweird.f32 %v1578
    %vm1585 = vmor %vm1583, %vm1584
    %v1586 = vsel %vm1585, %v1578, %v1582
    %v1587 = vand.u32 2147483647, %v1577
    %vm1588 = vcmp.eq.f32.partialorder %v1587, 8.507059e+37
    %v1589 = vand.u32 %v1577, 2147483648
    %v1590 = vor.u32 1.1754944e-38, %v1589
    %v1591 = vsel %vm1588, %v1590, %v1586
    %v1592 = vmul.f32 1.0, %v1591
    %v1593 = vxor.u32 %v1571, 2147483648
    %v1594 = vmul.f32 %v1593, 1.442695
    %v1595 = vpow.pop %v1594
    %v1596 = vadd.f32 %v1595, 1.0
    %v1597 = vrcp.pop %v1596
    %v1598 = vmul.f32 %v1596, %v1597
    %v1599 = vsub.f32 1.0, %v1598
    %v1600 = vmul.f32 %v1597, %v1599
    %v1601 = vadd.f32 %v1597, %v1600
    %vm1602 = vweird.f32 %v1596
    %vm1603 = vweird.f32 %v1597
    %vm1604 = vmor %vm1602, %vm1603
    %v1605 = vsel %vm1604, %v1597, %v1601
    %v1606 = vand.u32 2147483647, %v1596
    %vm1607 = vcmp.eq.f32.partialorder %v1606, 8.507059e+37
    %v1608 = vand.u32 %v1596, 2147483648
    %v1609 = vor.u32 1.1754944e-38, %v1608
    %v1610 = vsel %vm1607, %v1609, %v1605
    %v1611 = vmul.f32 1.0, %v1610
    %v1612 = vtanh.pop %v1572
    %v1613 = vxor.u32 %v1573, 2147483648
    %v1614 = vmul.f32 %v1613, 1.442695
    %v1615 = vpow.pop %v1614
    %v1616 = vadd.f32 %v1615, 1.0
    %v1617 = vrcp.pop %v1616
    %v1618 = vmul.f32 %v1616, %v1617
    %v1619 = vsub.f32 1.0, %v1618
    %v1620 = vmul.f32 %v1617, %v1619
    %v1621 = vadd.f32 %v1617, %v1620
    %vm1622 = vweird.f32 %v1616
    %vm1623 = vweird.f32 %v1617
    %vm1624 = vmor %vm1622, %vm1623
    %v1625 = vsel %vm1624, %v1617, %v1621
    %v1626 = vand.u32 2147483647, %v1616
    %vm1627 = vcmp.eq.f32.partialorder %v1626, 8.507059e+37
    %v1628 = vand.u32 %v1616, 2147483648
    %v1629 = vor.u32 1.1754944e-38, %v1628
    %v1630 = vsel %vm1627, %v1629, %v1625
    %v1631 = vmul.f32 1.0, %v1630
    %v1632 = vmul.f32 %v1611, %v1417
    %v1633 = vmul.f32 %v1592, %v1612
    %v1634 = vadd.f32 %v1632, %v1633
    %v1635 = vtanh.pop %v1634
    %v1636 = vmul.f32 %v1631, %v1635
    %s1637 = scalar_lea.vmem %s4, 40
    %1638 = vst [vmem:[%s1637] sm:$0xff] %v1636
    %v1639 = vld [vmem:[#allocation4 + $0xc0] sm:$0xff]
    %v1640 = vld [vmem:[#allocation4 + $0xc8] sm:$0xff]
    %v1641 = vld [vmem:[#allocation4 + $0xd0] sm:$0xff]
    %v1642 = vld [vmem:[#allocation4 + $0xd8] sm:$0xff]
    %v1643 = vld [vmem:[#allocation7] sm:$0xff]
    %v1644 = vld [vmem:[#allocation7 + $0x8] sm:$0xff]
    %v1645 = vld [vmem:[#allocation7 + $0x10] sm:$0xff]
    %v1646 = vld [vmem:[#allocation7 + $0x18] sm:$0xff]
    %v1647 = vld [vmem:[#allocation7 + $0x20] sm:$0xff]
    %v1648 = vld [vmem:[#allocation7 + $0x28] sm:$0xff]
    %v1649 = vld [vmem:[#allocation7 + $0x30] sm:$0xff]
    %v1650 = vld [vmem:[#allocation7 + $0x38] sm:$0xff]
    %v1651 = vld [vmem:[#allocation7 + $0x40] sm:$0xff]
    %v1652 = vld [vmem:[#allocation7 + $0x48] sm:$0xff]
    %v1653 = vld [vmem:[#allocation7 + $0x50] sm:$0xff]
    %v1654 = vld [vmem:[#allocation7 + $0x58] sm:$0xff]
    %v1655 = vld [vmem:[#allocation7 + $0x60] sm:$0xff]
    %v1656 = vld [vmem:[#allocation7 + $0x68] sm:$0xff]
    %v1657 = vld [vmem:[#allocation7 + $0x70] sm:$0xff]
    %v1658 = vld [vmem:[#allocation7 + $0x78] sm:$0xff]
    %v1659 = vld [vmem:[#allocation7 + $0x80] sm:$0xff]
    %v1660 = vld [vmem:[#allocation7 + $0x88] sm:$0xff]
    %v1661 = vld [vmem:[#allocation7 + $0x90] sm:$0xff]
    %v1662 = vld [vmem:[#allocation7 + $0x98] sm:$0xff]
    %v1663 = vld [vmem:[#allocation7 + $0xa0] sm:$0xff]
    %v1664 = vld [vmem:[#allocation7 + $0xa8] sm:$0xff]
    %v1665 = vld [vmem:[#allocation7 + $0xb0] sm:$0xff]
    %v1666 = vld [vmem:[#allocation7 + $0xb8] sm:$0xff]
    %v1667 = vld [vmem:[#allocation7 + $0xc0] sm:$0xff]
    %v1668 = vld [vmem:[#allocation7 + $0xc8] sm:$0xff]
    %v1669 = vld [vmem:[#allocation7 + $0xd0] sm:$0xff]
    %v1670 = vld [vmem:[#allocation7 + $0xd8] sm:$0xff]
    %v1671 = vld [vmem:[#allocation7 + $0xe0] sm:$0xff]
    %v1672 = vld [vmem:[#allocation7 + $0xe8] sm:$0xff]
    %v1673 = vld [vmem:[#allocation7 + $0xf0] sm:$0xff]
    %v1674 = vld [vmem:[#allocation7 + $0xf8] sm:$0xff]
    %v1675 = vld [vmem:[#allocation7 + $0x100] sm:$0xff]
    %v1676 = vld [vmem:[#allocation7 + $0x108] sm:$0xff]
    %v1677 = vld [vmem:[#allocation7 + $0x110] sm:$0xff]
    %v1678 = vld [vmem:[#allocation7 + $0x118] sm:$0xff]
    %v1679 = vld [vmem:[#allocation7 + $0x120] sm:$0xff]
    %v1680 = vld [vmem:[#allocation7 + $0x128] sm:$0xff]
    %v1681 = vld [vmem:[#allocation7 + $0x130] sm:$0xff]
    %v1682 = vld [vmem:[#allocation7 + $0x138] sm:$0xff]
    %v1683 = vld [vmem:[#allocation7 + $0x140] sm:$0xff]
    %v1684 = vld [vmem:[#allocation7 + $0x148] sm:$0xff]
    %v1685 = vld [vmem:[#allocation7 + $0x150] sm:$0xff]
    %v1686 = vld [vmem:[#allocation7 + $0x158] sm:$0xff]
    %v1687 = vld [vmem:[#allocation7 + $0x160] sm:$0xff]
    %v1688 = vld [vmem:[#allocation7 + $0x168] sm:$0xff]
    %v1689 = vld [vmem:[#allocation7 + $0x170] sm:$0xff]
    %v1690 = vld [vmem:[#allocation7 + $0x178] sm:$0xff]
    %v1691 = vld [vmem:[#allocation7 + $0x180] sm:$0xff]
    %v1692 = vld [vmem:[#allocation7 + $0x188] sm:$0xff]
    %v1693 = vld [vmem:[#allocation7 + $0x190] sm:$0xff]
    %v1694 = vld [vmem:[#allocation7 + $0x198] sm:$0xff]
    %v1695 = vld [vmem:[#allocation7 + $0x1a0] sm:$0xff]
    %v1696 = vld [vmem:[#allocation7 + $0x1a8] sm:$0xff]
    %v1697 = vld [vmem:[#allocation7 + $0x1b0] sm:$0xff]
    %v1698 = vld [vmem:[#allocation7 + $0x1b8] sm:$0xff]
    %v1699 = vld [vmem:[#allocation7 + $0x1c0] sm:$0xff]
    %v1700 = vld [vmem:[#allocation7 + $0x1c8] sm:$0xff]
    %v1701 = vld [vmem:[#allocation7 + $0x1d0] sm:$0xff]
    %v1702 = vld [vmem:[#allocation7 + $0x1d8] sm:$0xff]
    %v1703 = vld [vmem:[#allocation7 + $0x1e0] sm:$0xff]
    %v1704 = vld [vmem:[#allocation7 + $0x1e8] sm:$0xff]
    %v1705 = vld [vmem:[#allocation7 + $0x1f0] sm:$0xff]
    %v1706 = vld [vmem:[#allocation7 + $0x1f8] sm:$0xff]
    %1707 = vmatpush.msra.mxu0 %v1703
    %1708 = vmatpush.msra.mxu0 %v1699
    %1709 = vmatpush.msra.mxu0 %v1695
    %1710 = vmatpush.msra.mxu0 %v1691
    %1711 = vmatpush.msra.mxu0 %v1687
    %1712 = vmatpush.msra.mxu0 %v1683
    %1713 = vmatpush.msra.mxu0 %v1679
    %1714 = vmatpush.msra.mxu0 %v1675
    %1715 = vmatpush.msra.mxu0 %v1671
    %1716 = vmatpush.msra.mxu0 %v1667
    %1717 = vmatpush.msra.mxu0 %v1663
    %1718 = vmatpush.msra.mxu0 %v1659
    %1719 = vmatpush.msra.mxu0 %v1655
    %1720 = vmatpush.msra.mxu0 %v1651
    %1721 = vmatpush.msra.mxu0 %v1647
    %1722 = vmatpush.msra.mxu0 %v1643
    %1723 = vmatmul.f32.gmra.mxu0 %v1636
    %v1724 = vpop.f32.mrf.mxu0
    %v1725 = vadd.f32 0.0, %v1724
    %1726 = vdwg.mxu0
    %1727 = vmatpush.msra.mxu0 %v1704
    %1728 = vmatpush.msra.mxu0 %v1700
    %1729 = vmatpush.msra.mxu0 %v1696
    %1730 = vmatpush.msra.mxu0 %v1692
    %1731 = vmatpush.msra.mxu0 %v1688
    %1732 = vmatpush.msra.mxu0 %v1684
    %1733 = vmatpush.msra.mxu0 %v1680
    %1734 = vmatpush.msra.mxu0 %v1676
    %1735 = vmatpush.msra.mxu0 %v1672
    %1736 = vmatpush.msra.mxu0 %v1668
    %1737 = vmatpush.msra.mxu0 %v1664
    %1738 = vmatpush.msra.mxu0 %v1660
    %1739 = vmatpush.msra.mxu0 %v1656
    %1740 = vmatpush.msra.mxu0 %v1652
    %1741 = vmatpush.msra.mxu0 %v1648
    %1742 = vmatpush.msra.mxu0 %v1644
    %1743 = vmatmul.f32.gmra.mxu0 %v1636
    %v1744 = vpop.f32.mrf.mxu0
    %v1745 = vadd.f32 0.0, %v1744
    %1746 = vdwg.mxu0
    %1747 = vmatpush.msra.mxu0 %v1705
    %1748 = vmatpush.msra.mxu0 %v1701
    %1749 = vmatpush.msra.mxu0 %v1697
    %1750 = vmatpush.msra.mxu0 %v1693
    %1751 = vmatpush.msra.mxu0 %v1689
    %1752 = vmatpush.msra.mxu0 %v1685
    %1753 = vmatpush.msra.mxu0 %v1681
    %1754 = vmatpush.msra.mxu0 %v1677
    %1755 = vmatpush.msra.mxu0 %v1673
    %1756 = vmatpush.msra.mxu0 %v1669
    %1757 = vmatpush.msra.mxu0 %v1665
    %1758 = vmatpush.msra.mxu0 %v1661
    %1759 = vmatpush.msra.mxu0 %v1657
    %1760 = vmatpush.msra.mxu0 %v1653
    %1761 = vmatpush.msra.mxu0 %v1649
    %1762 = vmatpush.msra.mxu0 %v1645
    %1763 = vmatmul.f32.gmra.mxu0 %v1636
    %v1764 = vpop.f32.mrf.mxu0
    %v1765 = vadd.f32 0.0, %v1764
    %1766 = vdwg.mxu0
    %1767 = vmatpush.msra.mxu0 %v1706
    %1768 = vmatpush.msra.mxu0 %v1702
    %1769 = vmatpush.msra.mxu0 %v1698
    %1770 = vmatpush.msra.mxu0 %v1694
    %1771 = vmatpush.msra.mxu0 %v1690
    %1772 = vmatpush.msra.mxu0 %v1686
    %1773 = vmatpush.msra.mxu0 %v1682
    %1774 = vmatpush.msra.mxu0 %v1678
    %1775 = vmatpush.msra.mxu0 %v1674
    %1776 = vmatpush.msra.mxu0 %v1670
    %1777 = vmatpush.msra.mxu0 %v1666
    %1778 = vmatpush.msra.mxu0 %v1662
    %1779 = vmatpush.msra.mxu0 %v1658
    %1780 = vmatpush.msra.mxu0 %v1654
    %1781 = vmatpush.msra.mxu0 %v1650
    %1782 = vmatpush.msra.mxu0 %v1646
    %1783 = vmatmul.f32.gmra.mxu0 %v1636
    %v1784 = vpop.f32.mrf.mxu0
    %v1785 = vadd.f32 0.0, %v1784
    %1786 = vdwg.mxu0
    %v1787 = vadd.f32 %v1639, %v1725
    %v1788 = vadd.f32 %v1640, %v1745
    %v1789 = vadd.f32 %v1641, %v1765
    %v1790 = vadd.f32 %v1642, %v1785
    %v1791 = vxor.u32 %v1787, 2147483648
    %v1792 = vmul.f32 %v1791, 1.442695
    %v1793 = vpow.pop %v1792
    %v1794 = vadd.f32 %v1793, 1.0
    %v1795 = vrcp.pop %v1794
    %v1796 = vmul.f32 %v1794, %v1795
    %v1797 = vsub.f32 1.0, %v1796
    %v1798 = vmul.f32 %v1795, %v1797
    %v1799 = vadd.f32 %v1795, %v1798
    %vm1800 = vweird.f32 %v1794
    %vm1801 = vweird.f32 %v1795
    %vm1802 = vmor %vm1800, %vm1801
    %v1803 = vsel %vm1802, %v1795, %v1799
    %v1804 = vand.u32 2147483647, %v1794
    %vm1805 = vcmp.eq.f32.partialorder %v1804, 8.507059e+37
    %v1806 = vand.u32 %v1794, 2147483648
    %v1807 = vor.u32 1.1754944e-38, %v1806
    %v1808 = vsel %vm1805, %v1807, %v1803
    %v1809 = vmul.f32 1.0, %v1808
    %v1810 = vxor.u32 %v1788, 2147483648
    %v1811 = vmul.f32 %v1810, 1.442695
    %v1812 = vpow.pop %v1811
    %v1813 = vadd.f32 %v1812, 1.0
    %v1814 = vrcp.pop %v1813
    %v1815 = vmul.f32 %v1813, %v1814
    %v1816 = vsub.f32 1.0, %v1815
    %v1817 = vmul.f32 %v1814, %v1816
    %v1818 = vadd.f32 %v1814, %v1817
    %vm1819 = vweird.f32 %v1813
    %vm1820 = vweird.f32 %v1814
    %vm1821 = vmor %vm1819, %vm1820
    %v1822 = vsel %vm1821, %v1814, %v1818
    %v1823 = vand.u32 2147483647, %v1813
    %vm1824 = vcmp.eq.f32.partialorder %v1823, 8.507059e+37
    %v1825 = vand.u32 %v1813, 2147483648
    %v1826 = vor.u32 1.1754944e-38, %v1825
    %v1827 = vsel %vm1824, %v1826, %v1822
    %v1828 = vmul.f32 1.0, %v1827
    %v1829 = vtanh.pop %v1789
    %v1830 = vxor.u32 %v1790, 2147483648
    %v1831 = vmul.f32 %v1830, 1.442695
    %v1832 = vpow.pop %v1831
    %v1833 = vadd.f32 %v1832, 1.0
    %v1834 = vrcp.pop %v1833
    %v1835 = vmul.f32 %v1833, %v1834
    %v1836 = vsub.f32 1.0, %v1835
    %v1837 = vmul.f32 %v1834, %v1836
    %v1838 = vadd.f32 %v1834, %v1837
    %vm1839 = vweird.f32 %v1833
    %vm1840 = vweird.f32 %v1834
    %vm1841 = vmor %vm1839, %vm1840
    %v1842 = vsel %vm1841, %v1834, %v1838
    %v1843 = vand.u32 2147483647, %v1833
    %vm1844 = vcmp.eq.f32.partialorder %v1843, 8.507059e+37
    %v1845 = vand.u32 %v1833, 2147483648
    %v1846 = vor.u32 1.1754944e-38, %v1845
    %v1847 = vsel %vm1844, %v1846, %v1842
    %v1848 = vmul.f32 1.0, %v1847
    %v1849 = vmul.f32 %v1828, %v1634
    %v1850 = vmul.f32 %v1809, %v1829
    %v1851 = vadd.f32 %v1849, %v1850
    %v1852 = vtanh.pop %v1851
    %v1853 = vmul.f32 %v1848, %v1852
    %s1854 = scalar_lea.vmem %s4, 48
    %1855 = vst [vmem:[%s1854] sm:$0xff] %v1853
    %v1856 = vld [vmem:[#allocation4 + $0xe0] sm:$0xff]
    %v1857 = vld [vmem:[#allocation4 + $0xe8] sm:$0xff]
    %v1858 = vld [vmem:[#allocation4 + $0xf0] sm:$0xff]
    %v1859 = vld [vmem:[#allocation4 + $0xf8] sm:$0xff]
    %v1860 = vld [vmem:[#allocation7] sm:$0xff]
    %v1861 = vld [vmem:[#allocation7 + $0x8] sm:$0xff]
    %v1862 = vld [vmem:[#allocation7 + $0x10] sm:$0xff]
    %v1863 = vld [vmem:[#allocation7 + $0x18] sm:$0xff]
    %v1864 = vld [vmem:[#allocation7 + $0x20] sm:$0xff]
    %v1865 = vld [vmem:[#allocation7 + $0x28] sm:$0xff]
    %v1866 = vld [vmem:[#allocation7 + $0x30] sm:$0xff]
    %v1867 = vld [vmem:[#allocation7 + $0x38] sm:$0xff]
    %v1868 = vld [vmem:[#allocation7 + $0x40] sm:$0xff]
    %v1869 = vld [vmem:[#allocation7 + $0x48] sm:$0xff]
    %v1870 = vld [vmem:[#allocation7 + $0x50] sm:$0xff]
    %v1871 = vld [vmem:[#allocation7 + $0x58] sm:$0xff]
    %v1872 = vld [vmem:[#allocation7 + $0x60] sm:$0xff]
    %v1873 = vld [vmem:[#allocation7 + $0x68] sm:$0xff]
    %v1874 = vld [vmem:[#allocation7 + $0x70] sm:$0xff]
    %v1875 = vld [vmem:[#allocation7 + $0x78] sm:$0xff]
    %v1876 = vld [vmem:[#allocation7 + $0x80] sm:$0xff]
    %v1877 = vld [vmem:[#allocation7 + $0x88] sm:$0xff]
    %v1878 = vld [vmem:[#allocation7 + $0x90] sm:$0xff]
    %v1879 = vld [vmem:[#allocation7 + $0x98] sm:$0xff]
    %v1880 = vld [vmem:[#allocation7 + $0xa0] sm:$0xff]
    %v1881 = vld [vmem:[#allocation7 + $0xa8] sm:$0xff]
    %v1882 = vld [vmem:[#allocation7 + $0xb0] sm:$0xff]
    %v1883 = vld [vmem:[#allocation7 + $0xb8] sm:$0xff]
    %v1884 = vld [vmem:[#allocation7 + $0xc0] sm:$0xff]
    %v1885 = vld [vmem:[#allocation7 + $0xc8] sm:$0xff]
    %v1886 = vld [vmem:[#allocation7 + $0xd0] sm:$0xff]
    %v1887 = vld [vmem:[#allocation7 + $0xd8] sm:$0xff]
    %v1888 = vld [vmem:[#allocation7 + $0xe0] sm:$0xff]
    %v1889 = vld [vmem:[#allocation7 + $0xe8] sm:$0xff]
    %v1890 = vld [vmem:[#allocation7 + $0xf0] sm:$0xff]
    %v1891 = vld [vmem:[#allocation7 + $0xf8] sm:$0xff]
    %v1892 = vld [vmem:[#allocation7 + $0x100] sm:$0xff]
    %v1893 = vld [vmem:[#allocation7 + $0x108] sm:$0xff]
    %v1894 = vld [vmem:[#allocation7 + $0x110] sm:$0xff]
    %v1895 = vld [vmem:[#allocation7 + $0x118] sm:$0xff]
    %v1896 = vld [vmem:[#allocation7 + $0x120] sm:$0xff]
    %v1897 = vld [vmem:[#allocation7 + $0x128] sm:$0xff]
    %v1898 = vld [vmem:[#allocation7 + $0x130] sm:$0xff]
    %v1899 = vld [vmem:[#allocation7 + $0x138] sm:$0xff]
    %v1900 = vld [vmem:[#allocation7 + $0x140] sm:$0xff]
    %v1901 = vld [vmem:[#allocation7 + $0x148] sm:$0xff]
    %v1902 = vld [vmem:[#allocation7 + $0x150] sm:$0xff]
    %v1903 = vld [vmem:[#allocation7 + $0x158] sm:$0xff]
    %v1904 = vld [vmem:[#allocation7 + $0x160] sm:$0xff]
    %v1905 = vld [vmem:[#allocation7 + $0x168] sm:$0xff]
    %v1906 = vld [vmem:[#allocation7 + $0x170] sm:$0xff]
    %v1907 = vld [vmem:[#allocation7 + $0x178] sm:$0xff]
    %v1908 = vld [vmem:[#allocation7 + $0x180] sm:$0xff]
    %v1909 = vld [vmem:[#allocation7 + $0x188] sm:$0xff]
    %v1910 = vld [vmem:[#allocation7 + $0x190] sm:$0xff]
    %v1911 = vld [vmem:[#allocation7 + $0x198] sm:$0xff]
    %v1912 = vld [vmem:[#allocation7 + $0x1a0] sm:$0xff]
    %v1913 = vld [vmem:[#allocation7 + $0x1a8] sm:$0xff]
    %v1914 = vld [vmem:[#allocation7 + $0x1b0] sm:$0xff]
    %v1915 = vld [vmem:[#allocation7 + $0x1b8] sm:$0xff]
    %v1916 = vld [vmem:[#allocation7 + $0x1c0] sm:$0xff]
    %v1917 = vld [vmem:[#allocation7 + $0x1c8] sm:$0xff]
    %v1918 = vld [vmem:[#allocation7 + $0x1d0] sm:$0xff]
    %v1919 = vld [vmem:[#allocation7 + $0x1d8] sm:$0xff]
    %v1920 = vld [vmem:[#allocation7 + $0x1e0] sm:$0xff]
    %v1921 = vld [vmem:[#allocation7 + $0x1e8] sm:$0xff]
    %v1922 = vld [vmem:[#allocation7 + $0x1f0] sm:$0xff]
    %v1923 = vld [vmem:[#allocation7 + $0x1f8] sm:$0xff]
    %1924 = vmatpush.msra.mxu0 %v1920
    %1925 = vmatpush.msra.mxu0 %v1916
    %1926 = vmatpush.msra.mxu0 %v1912
    %1927 = vmatpush.msra.mxu0 %v1908
    %1928 = vmatpush.msra.mxu0 %v1904
    %1929 = vmatpush.msra.mxu0 %v1900
    %1930 = vmatpush.msra.mxu0 %v1896
    %1931 = vmatpush.msra.mxu0 %v1892
    %1932 = vmatpush.msra.mxu0 %v1888
    %1933 = vmatpush.msra.mxu0 %v1884
    %1934 = vmatpush.msra.mxu0 %v1880
    %1935 = vmatpush.msra.mxu0 %v1876
    %1936 = vmatpush.msra.mxu0 %v1872
    %1937 = vmatpush.msra.mxu0 %v1868
    %1938 = vmatpush.msra.mxu0 %v1864
    %1939 = vmatpush.msra.mxu0 %v1860
    %1940 = vmatmul.f32.gmra.mxu0 %v1853
    %v1941 = vpop.f32.mrf.mxu0
    %v1942 = vadd.f32 0.0, %v1941
    %1943 = vdwg.mxu0
    %1944 = vmatpush.msra.mxu0 %v1921
    %1945 = vmatpush.msra.mxu0 %v1917
    %1946 = vmatpush.msra.mxu0 %v1913
    %1947 = vmatpush.msra.mxu0 %v1909
    %1948 = vmatpush.msra.mxu0 %v1905
    %1949 = vmatpush.msra.mxu0 %v1901
    %1950 = vmatpush.msra.mxu0 %v1897
    %1951 = vmatpush.msra.mxu0 %v1893
    %1952 = vmatpush.msra.mxu0 %v1889
    %1953 = vmatpush.msra.mxu0 %v1885
    %1954 = vmatpush.msra.mxu0 %v1881
    %1955 = vmatpush.msra.mxu0 %v1877
    %1956 = vmatpush.msra.mxu0 %v1873
    %1957 = vmatpush.msra.mxu0 %v1869
    %1958 = vmatpush.msra.mxu0 %v1865
    %1959 = vmatpush.msra.mxu0 %v1861
    %1960 = vmatmul.f32.gmra.mxu0 %v1853
    %v1961 = vpop.f32.mrf.mxu0
    %v1962 = vadd.f32 0.0, %v1961
    %1963 = vdwg.mxu0
    %1964 = vmatpush.msra.mxu0 %v1922
    %1965 = vmatpush.msra.mxu0 %v1918
    %1966 = vmatpush.msra.mxu0 %v1914
    %1967 = vmatpush.msra.mxu0 %v1910
    %1968 = vmatpush.msra.mxu0 %v1906
    %1969 = vmatpush.msra.mxu0 %v1902
    %1970 = vmatpush.msra.mxu0 %v1898
    %1971 = vmatpush.msra.mxu0 %v1894
    %1972 = vmatpush.msra.mxu0 %v1890
    %1973 = vmatpush.msra.mxu0 %v1886
    %1974 = vmatpush.msra.mxu0 %v1882
    %1975 = vmatpush.msra.mxu0 %v1878
    %1976 = vmatpush.msra.mxu0 %v1874
    %1977 = vmatpush.msra.mxu0 %v1870
    %1978 = vmatpush.msra.mxu0 %v1866
    %1979 = vmatpush.msra.mxu0 %v1862
    %1980 = vmatmul.f32.gmra.mxu0 %v1853
    %v1981 = vpop.f32.mrf.mxu0
    %v1982 = vadd.f32 0.0, %v1981
    %1983 = vdwg.mxu0
    %1984 = vmatpush.msra.mxu0 %v1923
    %1985 = vmatpush.msra.mxu0 %v1919
    %1986 = vmatpush.msra.mxu0 %v1915
    %1987 = vmatpush.msra.mxu0 %v1911
    %1988 = vmatpush.msra.mxu0 %v1907
    %1989 = vmatpush.msra.mxu0 %v1903
    %1990 = vmatpush.msra.mxu0 %v1899
    %1991 = vmatpush.msra.mxu0 %v1895
    %1992 = vmatpush.msra.mxu0 %v1891
    %1993 = vmatpush.msra.mxu0 %v1887
    %1994 = vmatpush.msra.mxu0 %v1883
    %1995 = vmatpush.msra.mxu0 %v1879
    %1996 = vmatpush.msra.mxu0 %v1875
    %1997 = vmatpush.msra.mxu0 %v1871
    %1998 = vmatpush.msra.mxu0 %v1867
    %1999 = vmatpush.msra.mxu0 %v1863
    %2000 = vmatmul.f32.gmra.mxu0 %v1853
    %v2001 = vpop.f32.mrf.mxu0
    %v2002 = vadd.f32 0.0, %v2001
    %2003 = vdwg.mxu0
    %v2004 = vadd.f32 %v1856, %v1942
    %v2005 = vadd.f32 %v1857, %v1962
    %v2006 = vadd.f32 %v1858, %v1982
    %v2007 = vadd.f32 %v1859, %v2002
    %v2008 = vxor.u32 %v2004, 2147483648
    %v2009 = vmul.f32 %v2008, 1.442695
    %v2010 = vpow.pop %v2009
    %v2011 = vadd.f32 %v2010, 1.0
    %v2012 = vrcp.pop %v2011
    %v2013 = vmul.f32 %v2011, %v2012
    %v2014 = vsub.f32 1.0, %v2013
    %v2015 = vmul.f32 %v2012, %v2014
    %v2016 = vadd.f32 %v2012, %v2015
    %vm2017 = vweird.f32 %v2011
    %vm2018 = vweird.f32 %v2012
    %vm2019 = vmor %vm2017, %vm2018
    %v2020 = vsel %vm2019, %v2012, %v2016
    %v2021 = vand.u32 2147483647, %v2011
    %vm2022 = vcmp.eq.f32.partialorder %v2021, 8.507059e+37
    %v2023 = vand.u32 %v2011, 2147483648
    %v2024 = vor.u32 1.1754944e-38, %v2023
    %v2025 = vsel %vm2022, %v2024, %v2020
    %v2026 = vmul.f32 1.0, %v2025
    %v2027 = vxor.u32 %v2005, 2147483648
    %v2028 = vmul.f32 %v2027, 1.442695
    %v2029 = vpow.pop %v2028
    %v2030 = vadd.f32 %v2029, 1.0
    %v2031 = vrcp.pop %v2030
    %v2032 = vmul.f32 %v2030, %v2031
    %v2033 = vsub.f32 1.0, %v2032
    %v2034 = vmul.f32 %v2031, %v2033
    %v2035 = vadd.f32 %v2031, %v2034
    %vm2036 = vweird.f32 %v2030
    %vm2037 = vweird.f32 %v2031
    %vm2038 = vmor %vm2036, %vm2037
    %v2039 = vsel %vm2038, %v2031, %v2035
    %v2040 = vand.u32 2147483647, %v2030
    %vm2041 = vcmp.eq.f32.partialorder %v2040, 8.507059e+37
    %v2042 = vand.u32 %v2030, 2147483648
    %v2043 = vor.u32 1.1754944e-38, %v2042
    %v2044 = vsel %vm2041, %v2043, %v2039
    %v2045 = vmul.f32 1.0, %v2044
    %v2046 = vtanh.pop %v2006
    %v2047 = vxor.u32 %v2007, 2147483648
    %v2048 = vmul.f32 %v2047, 1.442695
    %v2049 = vpow.pop %v2048
    %v2050 = vadd.f32 %v2049, 1.0
    %v2051 = vrcp.pop %v2050
    %v2052 = vmul.f32 %v2050, %v2051
    %v2053 = vsub.f32 1.0, %v2052
    %v2054 = vmul.f32 %v2051, %v2053
    %v2055 = vadd.f32 %v2051, %v2054
    %vm2056 = vweird.f32 %v2050
    %vm2057 = vweird.f32 %v2051
    %vm2058 = vmor %vm2056, %vm2057
    %v2059 = vsel %vm2058, %v2051, %v2055
    %v2060 = vand.u32 2147483647, %v2050
    %vm2061 = vcmp.eq.f32.partialorder %v2060, 8.507059e+37
    %v2062 = vand.u32 %v2050, 2147483648
    %v2063 = vor.u32 1.1754944e-38, %v2062
    %v2064 = vsel %vm2061, %v2063, %v2059
    %v2065 = vmul.f32 1.0, %v2064
    %v2066 = vmul.f32 %v2045, %v1851
    %v2067 = vmul.f32 %v2026, %v2046
    %v2068 = vadd.f32 %v2066, %v2067
    %v2069 = vtanh.pop %v2068
    %v2070 = vmul.f32 %v2065, %v2069
    %s2071 = scalar_lea.vmem %s4, 56
    %2072 = vst [vmem:[%s2071] sm:$0xff] %v2070
    %2073 = vst [vmem:[#allocation2] sm:$0xff] %v2070
    %2074 = vst [vmem:[#allocation3] sm:$0xff] %v2068
    // Predicated region
    $region30: #{model_forward.4} parent=1 // pred_check
      %p2075 = pneg %p52
    $region31: #{model_forward.4} parent=1 // pred_check_branch
      %2077 = sbr.rel (%p2075) target = $region33
    $region32: #{model_forward.4} parent=1 // pred_region
      %2078 = vst [vmem:[%s5] sm:$0xff] %v2070
      %2079 = vst [vmem:[%s6] sm:$0xff] %v2068
    $region33: #{model_forward.4} parent=1 // pred_fallthru
      _
    // Predicated region
    $region34: #{model_forward.4} parent=1 // pred_check
      _
    $region35: #{model_forward.4} parent=1 // pred_check_branch
      %2081 = sbr.rel (0) target = $region37
    $region36: #{model_forward.4} parent=1 // pred_region
      _
    $region37: #{model_forward.4} parent=1 // pred_fallthru
      _
    // Predicated region
    $region38: #{model_forward.4} parent=1 // pred_check
      _
    $region39: #{model_forward.4} parent=1 // pred_check_branch
      %2083 = sbr.rel (0) target = $region41
    $region40: #{model_forward.4} parent=1 // pred_region
      _
    $region41: #{model_forward.4} parent=1 // pred_fallthru
      _
    // Predicated region
    $region42: #{model_forward.4} parent=1 // pred_check
      _
    $region43: #{model_forward.4} parent=1 // pred_check_branch
      %2085 = sbr.rel (0) target = $region45
    $region44: #{model_forward.4} parent=1 // pred_region
      _
    $region45: #{model_forward.4} parent=1 // pred_fallthru
      _
    // Predicated region
    $region46: #{model_forward.4} parent=1 // pred_check
      _
    $region47: #{model_forward.4} parent=1 // pred_check_branch
      %2087 = sbr.rel (0) target = $region49
    $region48: #{model_forward.4} parent=1 // pred_region
      _
    $region49: #{model_forward.4} parent=1 // pred_fallthru
      _
    // Predicated region
    $region50: #{model_forward.4} parent=1 // pred_check
      _
    $region51: #{model_forward.4} parent=1 // pred_check_branch
      %2089 = sbr.rel (0) target = $region53
    $region52: #{model_forward.4} parent=1 // pred_region
      _
    $region53: #{model_forward.4} parent=1 // pred_fallthru
      _
    // Predicated region
    $region54: #{model_forward.4} parent=1 // pred_check
      _
    $region55: #{model_forward.4} parent=1 // pred_check_branch
      %2091 = sbr.rel (0) target = $region57
    $region56: #{model_forward.4} parent=1 // pred_region
      _
    $region57: #{model_forward.4} parent=1 // pred_fallthru
      _
    %2092 = vsyncpa [#allocation6], 1
    %2093 = vsyncpa [#allocation8], 1

</llo_original>
